<compile_context>
chip_gen: v6e
topology: v6e:2x2x1
jax: 0.10.0
libtpu: 0.0.40
codegen_flags: <defaults>
</compile_context>

<pallas_src>
import functools
import math

import jax
import jax.numpy as jnp
from jax.experimental import pallas as pl
from jax.experimental.pallas import tpu as pltpu

# ---- tiny-BERT config (small shapes consistent with the module's forward) ----
VOCAB = 128
TYPE_VOCAB = 2
MAX_POS = 32
HID = 32
N_LAYERS = 2
N_HEADS = 2
HEAD_DIM = HID // N_HEADS
INTER = 64
N_CLASS = 50
OUT_PAD = 128          # lane-dense padded classifier width (sliced to N_CLASS outside)
LN_EPS = 1e-12

# ---- row layout of the packed "small params" array ([N_SP_ROWS, OUT_PAD]) ----
ROW_EMB_LN_G = 0
ROW_EMB_LN_B = 1
ROW_POOL_B = 2
ROW_FC_B = 3
ROWS_GLOBAL = 4
# per-layer row offsets within each layer's 8-row block
R_BQKV, R_BO, R_LN1G, R_LN1B, R_B1, R_B2, R_LN2G, R_LN2B = range(8)
ROWS_PER_LAYER = 8
N_SP_ROWS = ROWS_GLOBAL + ROWS_PER_LAYER * N_LAYERS


# ---------------- single fused, grid-less Pallas kernel (whole model) ----------------

def _bert_fused_kernel(
    x_emb_ref, bias_ref, sp_ref,
    wqkv_ref, wo_ref, w1_ref, w2_ref,
    pool_w_ref, fc_w_ref,
    out_ref,
    *, B, S):
    """Entire tiny-BERT forward in one invocation; layers statically unrolled."""
    sp = sp_ref[...]                                           # [N_SP_ROWS, OUT_PAD]

    def row(r, w):
        return sp[r:r + 1, :w]                                 # static [1, w] slice

    def layer_norm(t, g, beta):
        mu = jnp.mean(t, axis=-1, keepdims=True)
        tc = t - mu
        var = jnp.mean(tc * tc, axis=-1, keepdims=True)
        return tc * jax.lax.rsqrt(var + LN_EPS) * g + beta

    # --- embedding LayerNorm ---
    x = layer_norm(x_emb_ref[...],
                   row(ROW_EMB_LN_G, HID), row(ROW_EMB_LN_B, HID))   # [B*S, HID]

    bias = bias_ref[...]                                       # [B, S] additive mask bias
    scale = 1.0 / math.sqrt(float(HEAD_DIM))
    dn = (((1,), (1,)), ((), ()))                              # contract head dim, no .T

    for l in range(N_LAYERS):                                  # static unroll (2 layers)
        base = ROWS_GLOBAL + l * ROWS_PER_LAYER

        # fused Q/K/V projection: one matmul, 96 output lanes
        qkv = (jnp.dot(x, wqkv_ref[l], preferred_element_type=jnp.float32)
               + row(base + R_BQKV, 3 * HID))

        # multi-head attention: everything stays in vregs (no scratch stores)
        ctx_rows = []
        for b in range(B):
            r0 = b * S
            bias_b = bias[b:b + 1, :]                          # [1, S]
            head_ctx = []
            for h in range(N_HEADS):
                c0 = h * HEAD_DIM
                q = qkv[r0:r0 + S, 0 * HID + c0: 0 * HID + c0 + HEAD_DIM]   # [S, Dh]
                k = qkv[r0:r0 + S, 1 * HID + c0: 1 * HID + c0 + HEAD_DIM]   # [S, Dh]
                v = qkv[r0:r0 + S, 2 * HID + c0: 2 * HID + c0 + HEAD_DIM]   # [S, Dh]
                s = jax.lax.dot_general(
                    q, k, dimension_numbers=dn,
                    preferred_element_type=jnp.float32) * scale + bias_b    # [S, S]
                m = jnp.max(s, axis=-1, keepdims=True)
                p = jnp.exp(s - m)
                denom = jnp.sum(p, axis=-1, keepdims=True)                  # [S, 1]
                ctx_h = jnp.dot(p, v, preferred_element_type=jnp.float32)   # [S, Dh]
                ctx_h = ctx_h * pl.reciprocal(denom, approx=True)           # normalize after p@v
                head_ctx.append(ctx_h)
            ctx_rows.append(jnp.concatenate(head_ctx, axis=-1))             # [S, HID]
        ctx = jnp.concatenate(ctx_rows, axis=0)                             # [B*S, HID]

        # output projection + residual + LN1
        attn_out = (jnp.dot(ctx, wo_ref[l], preferred_element_type=jnp.float32)
                    + row(base + R_BO, HID))
        x = layer_norm(x + attn_out, row(base + R_LN1G, HID), row(base + R_LN1B, HID))

        # FFN (GELU) + residual + LN2
        h1 = (jnp.dot(x, w1_ref[l], preferred_element_type=jnp.float32)
              + row(base + R_B1, INTER))
        # tanh-approx GELU  # TODO(synk): exact erf-based GELU (HF BERT default) if bit-parity needed
        c = jnp.float32(0.7978845608028654)
        h1 = 0.5 * h1 * (1.0 + jnp.tanh(c * (h1 + 0.044715 * h1 * h1 * h1)))
        ffn_out = (jnp.dot(h1, w2_ref[l], preferred_element_type=jnp.float32)
                   + row(base + R_B2, HID))
        x = layer_norm(x + ffn_out, row(base + R_LN2G, HID), row(base + R_LN2B, HID))

    # --- tanh pooler + classifier on the B CLS rows only (lane-dense padded output) ---
    cls = jnp.concatenate([x[b * S: b * S + 1, :] for b in range(B)], axis=0)  # [B, HID]
    pooled = jnp.tanh(
        jnp.dot(cls, pool_w_ref[...], preferred_element_type=jnp.float32)
        + row(ROW_POOL_B, HID))
    out_ref[...] = (jnp.dot(pooled, fc_w_ref[...], preferred_element_type=jnp.float32)
                    + row(ROW_FC_B, OUT_PAD))


# ---------------- parameter init (deterministic, synthetic, layer-stacked) ----------------

def init_params(key):
    def nrm(k, shape):
        return 0.02 * jax.random.normal(k, shape, jnp.float32)

    keys = iter(jax.random.split(key, 16))
    return {
        "word_emb": nrm(next(keys), (VOCAB, HID)),
        "pos_emb": nrm(next(keys), (MAX_POS, HID)),
        "type_emb": nrm(next(keys), (TYPE_VOCAB, HID)),
        "emb_ln_g": jnp.ones((HID,), jnp.float32),
        "emb_ln_b": jnp.zeros((HID,), jnp.float32),
        # per-layer weights stacked along leading N_LAYERS axis (wq|wk|wv fused)
        "wqkv": nrm(next(keys), (N_LAYERS, HID, 3 * HID)),
        "bqkv": jnp.zeros((N_LAYERS, 3 * HID), jnp.float32),
        "wo": nrm(next(keys), (N_LAYERS, HID, HID)),
        "bo": jnp.zeros((N_LAYERS, HID), jnp.float32),
        "ln1_g": jnp.ones((N_LAYERS, HID), jnp.float32),
        "ln1_b": jnp.zeros((N_LAYERS, HID), jnp.float32),
        "w1": nrm(next(keys), (N_LAYERS, HID, INTER)),
        "b1": jnp.zeros((N_LAYERS, INTER), jnp.float32),
        "w2": nrm(next(keys), (N_LAYERS, INTER, HID)),
        "b2": jnp.zeros((N_LAYERS, HID), jnp.float32),
        "ln2_g": jnp.ones((N_LAYERS, HID), jnp.float32),
        "ln2_b": jnp.zeros((N_LAYERS, HID), jnp.float32),
        "pool_w": nrm(next(keys), (HID, HID)),
        "pool_b": jnp.zeros((HID,), jnp.float32),
        "fc_w": nrm(next(keys), (HID, N_CLASS)),
        "fc_b": jnp.zeros((N_CLASS,), jnp.float32),
    }


def _pad_row(v):
    v = jnp.asarray(v, jnp.float32).reshape(1, -1)
    return jnp.pad(v, ((0, 0), (0, OUT_PAD - v.shape[1])))


def _pack_small_params(params, fc_b_pad):
    """Pack all tiny bias / LayerNorm vectors into one [N_SP_ROWS, OUT_PAD] array."""
    rows = [_pad_row(params["emb_ln_g"]), _pad_row(params["emb_ln_b"]),
            _pad_row(params["pool_b"]), fc_b_pad]
    for l in range(N_LAYERS):
        rows += [_pad_row(params["bqkv"][l]), _pad_row(params["bo"][l]),
                 _pad_row(params["ln1_g"][l]), _pad_row(params["ln1_b"][l]),
                 _pad_row(params["b1"][l]), _pad_row(params["b2"][l]),
                 _pad_row(params["ln2_g"][l]), _pad_row(params["ln2_b"][l])]
    return jnp.concatenate(rows, axis=0)                       # [N_SP_ROWS, OUT_PAD]


# ---------------- forward (== snippet_bert.forward) ----------------

def snippet_bert_forward(params, input_ids, attn_masks):
    B, S = input_ids.shape
    M = B * S

    # embedding gathers are glue in plain JAX; everything else is one pallas_call
    x_emb = (params["word_emb"][input_ids]
             + params["pos_emb"][jnp.arange(S)][None, :, :]
             + params["type_emb"][jnp.zeros((B, S), jnp.int32)])
    x_emb = x_emb.reshape(M, HID).astype(jnp.float32)

    # BERT-style additive attention-mask bias: (1 - mask) * -10000, per batch row
    bias = (1.0 - attn_masks.astype(jnp.float32)) * -10000.0          # [B, S]

    # pad classifier to 128 lanes so the final store is unmasked / lane-dense
    fc_w_pad = jnp.zeros((HID, OUT_PAD), jnp.float32).at[:, :N_CLASS].set(params["fc_w"])
    fc_b_pad = jnp.zeros((1, OUT_PAD), jnp.float32).at[:, :N_CLASS].set(params["fc_b"])

    sp = _pack_small_params(params, fc_b_pad)                  # single packed small-params input

    kern = functools.partial(_bert_fused_kernel, B=B, S=S)
    vmem = pl.BlockSpec(memory_space=pltpu.MemorySpace.VMEM)

    logits_pad = pl.pallas_call(
        kern,
        out_shape=jax.ShapeDtypeStruct((B, OUT_PAD), jnp.float32),
        in_specs=[vmem] * 9,
        out_specs=vmem,
    )(x_emb, bias, sp,
      params["wqkv"], params["wo"], params["w1"], params["w2"],
      params["pool_w"], fc_w_pad)

    # un-pad the classifier width (CLS selection already done in-kernel)
    return logits_pad[:, :N_CLASS]


if __name__ == "__main__":
    key = jax.random.PRNGKey(0)
    pkey, ikey = jax.random.split(key)
    params = init_params(pkey)

    B, S = 2, 8
    input_ids = jax.random.randint(ikey, (B, S), 0, VOCAB, dtype=jnp.int32)
    attn_masks = jnp.array([[1, 1, 1, 1, 1, 1, 1, 1],
                            [1, 1, 1, 1, 1, 0, 0, 0]], dtype=jnp.int32)

    logits = jax.jit(snippet_bert_forward)(params, input_ids, attn_masks)
    jax.block_until_ready(logits)
    assert logits.shape == (B, N_CLASS) and logits.dtype == jnp.float32
    assert bool(jnp.all(jnp.isfinite(logits)))
    print("KERNEL_OK")
</pallas_src>

<mosaic_0001>
module attributes {stable_mosaic.version = 11 : i64} {
  func.func @_bert_fused_kernel(%arg0: memref<16x32xf32, #tpu.memory_space<vmem>>, %arg1: memref<2x8xf32, #tpu.memory_space<vmem>>, %arg2: memref<20x128xf32, #tpu.memory_space<vmem>>, %arg3: memref<2x32x96xf32, #tpu.memory_space<vmem>>, %arg4: memref<2x32x32xf32, #tpu.memory_space<vmem>>, %arg5: memref<2x32x64xf32, #tpu.memory_space<vmem>>, %arg6: memref<2x64x32xf32, #tpu.memory_space<vmem>>, %arg7: memref<32x32xf32, #tpu.memory_space<vmem>>, %arg8: memref<32x128xf32, #tpu.memory_space<vmem>>, %arg9: memref<2x128xf32, #tpu.memory_space<vmem>>) attributes {dimension_semantics = [], scalar_prefetch = 0 : i64, scratch_operands = 0 : i64, tpu.core_type = #tpu.core_type<tc>} {
    %c0 = arith.constant 0 : index
    %c0_0 = arith.constant 0 : index
    %0 = vector.load %arg2[%c0, %c0_0] : memref<20x128xf32, #tpu.memory_space<vmem>>, vector<20x128xf32>
    %c0_1 = arith.constant 0 : index
    %c0_2 = arith.constant 0 : index
    %1 = vector.load %arg0[%c0_1, %c0_2] : memref<16x32xf32, #tpu.memory_space<vmem>>, vector<16x32xf32>
    %2 = vector.extract_strided_slice %0 {offsets = [0, 0], sizes = [1, 32], strides = [1, 1]} : vector<20x128xf32> to vector<1x32xf32>
    %3 = vector.extract_strided_slice %0 {offsets = [1, 0], sizes = [1, 32], strides = [1, 1]} : vector<20x128xf32> to vector<1x32xf32>
    %cst = arith.constant dense<0.000000e+00> : vector<16xf32>
    %4 = vector.multi_reduction <add>, %1, %cst [1] : vector<16x32xf32> to vector<16xf32>
    %5 = vector.shape_cast %4 : vector<16xf32> to vector<16x1xf32>
    %cst_3 = arith.constant 3.200000e+01 : f32
    %6 = vector.broadcast %cst_3 : f32 to vector<16x1xf32>
    %7 = arith.divf %5, %6 : vector<16x1xf32>
    %8 = vector.broadcast %7 : vector<16x1xf32> to vector<16x32xf32>
    %9 = arith.subf %1, %8 : vector<16x32xf32>
    %10 = arith.mulf %9, %9 : vector<16x32xf32>
    %cst_4 = arith.constant dense<0.000000e+00> : vector<16xf32>
    %11 = vector.multi_reduction <add>, %10, %cst_4 [1] : vector<16x32xf32> to vector<16xf32>
    %12 = vector.shape_cast %11 : vector<16xf32> to vector<16x1xf32>
    %cst_5 = arith.constant 3.200000e+01 : f32
    %13 = vector.broadcast %cst_5 : f32 to vector<16x1xf32>
    %14 = arith.divf %12, %13 : vector<16x1xf32>
    %cst_6 = arith.constant 9.99999996E-13 : f32
    %15 = vector.broadcast %cst_6 : f32 to vector<16x1xf32>
    %16 = arith.addf %14, %15 : vector<16x1xf32>
    %17 = math.rsqrt %16 : vector<16x1xf32>
    %18 = vector.broadcast %17 : vector<16x1xf32> to vector<16x32xf32>
    %19 = arith.mulf %9, %18 : vector<16x32xf32>
    %20 = vector.broadcast %2 : vector<1x32xf32> to vector<16x32xf32>
    %21 = arith.mulf %19, %20 : vector<16x32xf32>
    %22 = vector.broadcast %3 : vector<1x32xf32> to vector<16x32xf32>
    %23 = arith.addf %21, %22 : vector<16x32xf32>
    %c0_7 = arith.constant 0 : index
    %c0_8 = arith.constant 0 : index
    %24 = vector.load %arg1[%c0_7, %c0_8] : memref<2x8xf32, #tpu.memory_space<vmem>>, vector<2x8xf32>
    %c0_9 = arith.constant 0 : index
    %c0_10 = arith.constant 0 : index
    %c0_11 = arith.constant 0 : index
    %25 = vector.load %arg3[%c0_9, %c0_10, %c0_11] : memref<2x32x96xf32, #tpu.memory_space<vmem>>, vector<1x32x96xf32>
    %26 = vector.shape_cast %25 : vector<1x32x96xf32> to vector<32x96xf32>
    %cst_12 = arith.constant dense<0.000000e+00> : vector<16x96xf32>
    %27 = tpu.matmul %23, %26, %cst_12 {dimension_numbers = #tpu.dot_dimension_numbers<[1], [0], [0], [1], [0, 0, 1, 1], [], []>} : vector<16x32xf32>, vector<32x96xf32>, vector<16x96xf32> -> vector<16x96xf32>
    %28 = vector.extract_strided_slice %0 {offsets = [4, 0], sizes = [1, 96], strides = [1, 1]} : vector<20x128xf32> to vector<1x96xf32>
    %29 = vector.broadcast %28 : vector<1x96xf32> to vector<16x96xf32>
    %30 = arith.addf %27, %29 : vector<16x96xf32>
    %31 = vector.extract_strided_slice %24 {offsets = [0, 0], sizes = [1, 8], strides = [1, 1]} : vector<2x8xf32> to vector<1x8xf32>
    %32 = vector.extract_strided_slice %30 {offsets = [0, 0], sizes = [8, 16], strides = [1, 1]} : vector<16x96xf32> to vector<8x16xf32>
    %33 = vector.extract_strided_slice %30 {offsets = [0, 32], sizes = [8, 16], strides = [1, 1]} : vector<16x96xf32> to vector<8x16xf32>
    %34 = vector.extract_strided_slice %30 {offsets = [0, 64], sizes = [8, 16], strides = [1, 1]} : vector<16x96xf32> to vector<8x16xf32>
    %cst_13 = arith.constant dense<0.000000e+00> : vector<8x8xf32>
    %35 = tpu.matmul %32, %33, %cst_13 {dimension_numbers = #tpu.dot_dimension_numbers<[1], [1], [0], [0], [0, 0, 1, 0], [], []>} : vector<8x16xf32>, vector<8x16xf32>, vector<8x8xf32> -> vector<8x8xf32>
    %cst_14 = arith.constant 2.500000e-01 : f32
    %36 = vector.broadcast %cst_14 : f32 to vector<8x8xf32>
    %37 = arith.mulf %35, %36 : vector<8x8xf32>
    %38 = vector.broadcast %31 : vector<1x8xf32> to vector<8x8xf32>
    %39 = arith.addf %37, %38 : vector<8x8xf32>
    %cst_15 = arith.constant dense<0xFF800000> : vector<8xf32>
    %40 = vector.multi_reduction <maximumf>, %39, %cst_15 [1] : vector<8x8xf32> to vector<8xf32>
    %41 = vector.shape_cast %40 : vector<8xf32> to vector<8x1xf32>
    %42 = vector.broadcast %41 : vector<8x1xf32> to vector<8x8xf32>
    %43 = arith.subf %39, %42 : vector<8x8xf32>
    %44 = math.exp %43 : vector<8x8xf32>
    %cst_16 = arith.constant dense<0.000000e+00> : vector<8xf32>
    %45 = vector.multi_reduction <add>, %44, %cst_16 [1] : vector<8x8xf32> to vector<8xf32>
    %46 = vector.shape_cast %45 : vector<8xf32> to vector<8x1xf32>
    %cst_17 = arith.constant dense<0.000000e+00> : vector<8x16xf32>
    %47 = tpu.matmul %44, %34, %cst_17 {dimension_numbers = #tpu.dot_dimension_numbers<[1], [0], [0], [1], [0, 0, 1, 1], [], []>} : vector<8x8xf32>, vector<8x16xf32>, vector<8x16xf32> -> vector<8x16xf32>
    %48 = tpu.reciprocal %46 {approx = true} : vector<8x1xf32> -> vector<8x1xf32>
    %49 = vector.broadcast %48 : vector<8x1xf32> to vector<8x16xf32>
    %50 = arith.mulf %47, %49 : vector<8x16xf32>
    %51 = vector.extract_strided_slice %30 {offsets = [0, 16], sizes = [8, 16], strides = [1, 1]} : vector<16x96xf32> to vector<8x16xf32>
    %52 = vector.extract_strided_slice %30 {offsets = [0, 48], sizes = [8, 16], strides = [1, 1]} : vector<16x96xf32> to vector<8x16xf32>
    %53 = vector.extract_strided_slice %30 {offsets = [0, 80], sizes = [8, 16], strides = [1, 1]} : vector<16x96xf32> to vector<8x16xf32>
    %cst_18 = arith.constant dense<0.000000e+00> : vector<8x8xf32>
    %54 = tpu.matmul %51, %52, %cst_18 {dimension_numbers = #tpu.dot_dimension_numbers<[1], [1], [0], [0], [0, 0, 1, 0], [], []>} : vector<8x16xf32>, vector<8x16xf32>, vector<8x8xf32> -> vector<8x8xf32>
    %cst_19 = arith.constant 2.500000e-01 : f32
    %55 = vector.broadcast %cst_19 : f32 to vector<8x8xf32>
    %56 = arith.mulf %54, %55 : vector<8x8xf32>
    %57 = vector.broadcast %31 : vector<1x8xf32> to vector<8x8xf32>
    %58 = arith.addf %56, %57 : vector<8x8xf32>
    %cst_20 = arith.constant dense<0xFF800000> : vector<8xf32>
    %59 = vector.multi_reduction <maximumf>, %58, %cst_20 [1] : vector<8x8xf32> to vector<8xf32>
    %60 = vector.shape_cast %59 : vector<8xf32> to vector<8x1xf32>
    %61 = vector.broadcast %60 : vector<8x1xf32> to vector<8x8xf32>
    %62 = arith.subf %58, %61 : vector<8x8xf32>
    %63 = math.exp %62 : vector<8x8xf32>
    %cst_21 = arith.constant dense<0.000000e+00> : vector<8xf32>
    %64 = vector.multi_reduction <add>, %63, %cst_21 [1] : vector<8x8xf32> to vector<8xf32>
    %65 = vector.shape_cast %64 : vector<8xf32> to vector<8x1xf32>
    %cst_22 = arith.constant dense<0.000000e+00> : vector<8x16xf32>
    %66 = tpu.matmul %63, %53, %cst_22 {dimension_numbers = #tpu.dot_dimension_numbers<[1], [0], [0], [1], [0, 0, 1, 1], [], []>} : vector<8x8xf32>, vector<8x16xf32>, vector<8x16xf32> -> vector<8x16xf32>
    %67 = tpu.reciprocal %65 {approx = true} : vector<8x1xf32> -> vector<8x1xf32>
    %68 = vector.broadcast %67 : vector<8x1xf32> to vector<8x16xf32>
    %69 = arith.mulf %66, %68 : vector<8x16xf32>
    %70 = tpu.concatenate %50, %69 in 1 : vector<8x16xf32>, vector<8x16xf32> -> vector<8x32xf32>
    %71 = vector.extract_strided_slice %24 {offsets = [1, 0], sizes = [1, 8], strides = [1, 1]} : vector<2x8xf32> to vector<1x8xf32>
    %72 = vector.extract_strided_slice %30 {offsets = [8, 0], sizes = [8, 16], strides = [1, 1]} : vector<16x96xf32> to vector<8x16xf32>
    %73 = vector.extract_strided_slice %30 {offsets = [8, 32], sizes = [8, 16], strides = [1, 1]} : vector<16x96xf32> to vector<8x16xf32>
    %74 = vector.extract_strided_slice %30 {offsets = [8, 64], sizes = [8, 16], strides = [1, 1]} : vector<16x96xf32> to vector<8x16xf32>
    %cst_23 = arith.constant dense<0.000000e+00> : vector<8x8xf32>
    %75 = tpu.matmul %72, %73, %cst_23 {dimension_numbers = #tpu.dot_dimension_numbers<[1], [1], [0], [0], [0, 0, 1, 0], [], []>} : vector<8x16xf32>, vector<8x16xf32>, vector<8x8xf32> -> vector<8x8xf32>
    %cst_24 = arith.constant 2.500000e-01 : f32
    %76 = vector.broadcast %cst_24 : f32 to vector<8x8xf32>
    %77 = arith.mulf %75, %76 : vector<8x8xf32>
    %78 = vector.broadcast %71 : vector<1x8xf32> to vector<8x8xf32>
    %79 = arith.addf %77, %78 : vector<8x8xf32>
    %cst_25 = arith.constant dense<0xFF800000> : vector<8xf32>
    %80 = vector.multi_reduction <maximumf>, %79, %cst_25 [1] : vector<8x8xf32> to vector<8xf32>
    %81 = vector.shape_cast %80 : vector<8xf32> to vector<8x1xf32>
    %82 = vector.broadcast %81 : vector<8x1xf32> to vector<8x8xf32>
    %83 = arith.subf %79, %82 : vector<8x8xf32>
    %84 = math.exp %83 : vector<8x8xf32>
    %cst_26 = arith.constant dense<0.000000e+00> : vector<8xf32>
    %85 = vector.multi_reduction <add>, %84, %cst_26 [1] : vector<8x8xf32> to vector<8xf32>
    %86 = vector.shape_cast %85 : vector<8xf32> to vector<8x1xf32>
    %cst_27 = arith.constant dense<0.000000e+00> : vector<8x16xf32>
    %87 = tpu.matmul %84, %74, %cst_27 {dimension_numbers = #tpu.dot_dimension_numbers<[1], [0], [0], [1], [0, 0, 1, 1], [], []>} : vector<8x8xf32>, vector<8x16xf32>, vector<8x16xf32> -> vector<8x16xf32>
    %88 = tpu.reciprocal %86 {approx = true} : vector<8x1xf32> -> vector<8x1xf32>
    %89 = vector.broadcast %88 : vector<8x1xf32> to vector<8x16xf32>
    %90 = arith.mulf %87, %89 : vector<8x16xf32>
    %91 = vector.extract_strided_slice %30 {offsets = [8, 16], sizes = [8, 16], strides = [1, 1]} : vector<16x96xf32> to vector<8x16xf32>
    %92 = vector.extract_strided_slice %30 {offsets = [8, 48], sizes = [8, 16], strides = [1, 1]} : vector<16x96xf32> to vector<8x16xf32>
    %93 = vector.extract_strided_slice %30 {offsets = [8, 80], sizes = [8, 16], strides = [1, 1]} : vector<16x96xf32> to vector<8x16xf32>
    %cst_28 = arith.constant dense<0.000000e+00> : vector<8x8xf32>
    %94 = tpu.matmul %91, %92, %cst_28 {dimension_numbers = #tpu.dot_dimension_numbers<[1], [1], [0], [0], [0, 0, 1, 0], [], []>} : vector<8x16xf32>, vector<8x16xf32>, vector<8x8xf32> -> vector<8x8xf32>
    %cst_29 = arith.constant 2.500000e-01 : f32
    %95 = vector.broadcast %cst_29 : f32 to vector<8x8xf32>
    %96 = arith.mulf %94, %95 : vector<8x8xf32>
    %97 = vector.broadcast %71 : vector<1x8xf32> to vector<8x8xf32>
    %98 = arith.addf %96, %97 : vector<8x8xf32>
    %cst_30 = arith.constant dense<0xFF800000> : vector<8xf32>
    %99 = vector.multi_reduction <maximumf>, %98, %cst_30 [1] : vector<8x8xf32> to vector<8xf32>
    %100 = vector.shape_cast %99 : vector<8xf32> to vector<8x1xf32>
    %101 = vector.broadcast %100 : vector<8x1xf32> to vector<8x8xf32>
    %102 = arith.subf %98, %101 : vector<8x8xf32>
    %103 = math.exp %102 : vector<8x8xf32>
    %cst_31 = arith.constant dense<0.000000e+00> : vector<8xf32>
    %104 = vector.multi_reduction <add>, %103, %cst_31 [1] : vector<8x8xf32> to vector<8xf32>
    %105 = vector.shape_cast %104 : vector<8xf32> to vector<8x1xf32>
    %cst_32 = arith.constant dense<0.000000e+00> : vector<8x16xf32>
    %106 = tpu.matmul %103, %93, %cst_32 {dimension_numbers = #tpu.dot_dimension_numbers<[1], [0], [0], [1], [0, 0, 1, 1], [], []>} : vector<8x8xf32>, vector<8x16xf32>, vector<8x16xf32> -> vector<8x16xf32>
    %107 = tpu.reciprocal %105 {approx = true} : vector<8x1xf32> -> vector<8x1xf32>
    %108 = vector.broadcast %107 : vector<8x1xf32> to vector<8x16xf32>
    %109 = arith.mulf %106, %108 : vector<8x16xf32>
    %110 = tpu.concatenate %90, %109 in 1 : vector<8x16xf32>, vector<8x16xf32> -> vector<8x32xf32>
    %111 = tpu.concatenate %70, %110 in 0 : vector<8x32xf32>, vector<8x32xf32> -> vector<16x32xf32>
    %c0_33 = arith.constant 0 : index
    %c0_34 = arith.constant 0 : index
    %c0_35 = arith.constant 0 : index
    %112 = vector.load %arg4[%c0_33, %c0_34, %c0_35] : memref<2x32x32xf32, #tpu.memory_space<vmem>>, vector<1x32x32xf32>
    %113 = vector.shape_cast %112 : vector<1x32x32xf32> to vector<32x32xf32>
    %cst_36 = arith.constant dense<0.000000e+00> : vector<16x32xf32>
    %114 = tpu.matmul %111, %113, %cst_36 {dimension_numbers = #tpu.dot_dimension_numbers<[1], [0], [0], [1], [0, 0, 1, 1], [], []>} : vector<16x32xf32>, vector<32x32xf32>, vector<16x32xf32> -> vector<16x32xf32>
    %115 = vector.extract_strided_slice %0 {offsets = [5, 0], sizes = [1, 32], strides = [1, 1]} : vector<20x128xf32> to vector<1x32xf32>
    %116 = vector.broadcast %115 : vector<1x32xf32> to vector<16x32xf32>
    %117 = arith.addf %114, %116 : vector<16x32xf32>
    %118 = arith.addf %23, %117 : vector<16x32xf32>
    %119 = vector.extract_strided_slice %0 {offsets = [6, 0], sizes = [1, 32], strides = [1, 1]} : vector<20x128xf32> to vector<1x32xf32>
    %120 = vector.extract_strided_slice %0 {offsets = [7, 0], sizes = [1, 32], strides = [1, 1]} : vector<20x128xf32> to vector<1x32xf32>
    %cst_37 = arith.constant dense<0.000000e+00> : vector<16xf32>
    %121 = vector.multi_reduction <add>, %118, %cst_37 [1] : vector<16x32xf32> to vector<16xf32>
    %122 = vector.shape_cast %121 : vector<16xf32> to vector<16x1xf32>
    %cst_38 = arith.constant 3.200000e+01 : f32
    %123 = vector.broadcast %cst_38 : f32 to vector<16x1xf32>
    %124 = arith.divf %122, %123 : vector<16x1xf32>
    %125 = vector.broadcast %124 : vector<16x1xf32> to vector<16x32xf32>
    %126 = arith.subf %118, %125 : vector<16x32xf32>
    %127 = arith.mulf %126, %126 : vector<16x32xf32>
    %cst_39 = arith.constant dense<0.000000e+00> : vector<16xf32>
    %128 = vector.multi_reduction <add>, %127, %cst_39 [1] : vector<16x32xf32> to vector<16xf32>
    %129 = vector.shape_cast %128 : vector<16xf32> to vector<16x1xf32>
    %cst_40 = arith.constant 3.200000e+01 : f32
    %130 = vector.broadcast %cst_40 : f32 to vector<16x1xf32>
    %131 = arith.divf %129, %130 : vector<16x1xf32>
    %cst_41 = arith.constant 9.99999996E-13 : f32
    %132 = vector.broadcast %cst_41 : f32 to vector<16x1xf32>
    %133 = arith.addf %131, %132 : vector<16x1xf32>
    %134 = math.rsqrt %133 : vector<16x1xf32>
    %135 = vector.broadcast %134 : vector<16x1xf32> to vector<16x32xf32>
    %136 = arith.mulf %126, %135 : vector<16x32xf32>
    %137 = vector.broadcast %119 : vector<1x32xf32> to vector<16x32xf32>
    %138 = arith.mulf %136, %137 : vector<16x32xf32>
    %139 = vector.broadcast %120 : vector<1x32xf32> to vector<16x32xf32>
    %140 = arith.addf %138, %139 : vector<16x32xf32>
    %c0_42 = arith.constant 0 : index
    %c0_43 = arith.constant 0 : index
    %c0_44 = arith.constant 0 : index
    %141 = vector.load %arg5[%c0_42, %c0_43, %c0_44] : memref<2x32x64xf32, #tpu.memory_space<vmem>>, vector<1x32x64xf32>
    %142 = vector.shape_cast %141 : vector<1x32x64xf32> to vector<32x64xf32>
    %cst_45 = arith.constant dense<0.000000e+00> : vector<16x64xf32>
    %143 = tpu.matmul %140, %142, %cst_45 {dimension_numbers = #tpu.dot_dimension_numbers<[1], [0], [0], [1], [0, 0, 1, 1], [], []>} : vector<16x32xf32>, vector<32x64xf32>, vector<16x64xf32> -> vector<16x64xf32>
    %144 = vector.extract_strided_slice %0 {offsets = [8, 0], sizes = [1, 64], strides = [1, 1]} : vector<20x128xf32> to vector<1x64xf32>
    %145 = vector.broadcast %144 : vector<1x64xf32> to vector<16x64xf32>
    %146 = arith.addf %143, %145 : vector<16x64xf32>
    %cst_46 = arith.constant 5.000000e-01 : f32
    %147 = vector.broadcast %cst_46 : f32 to vector<16x64xf32>
    %148 = arith.mulf %147, %146 : vector<16x64xf32>
    %cst_47 = arith.constant 4.471500e-02 : f32
    %149 = vector.broadcast %cst_47 : f32 to vector<16x64xf32>
    %150 = arith.mulf %149, %146 : vector<16x64xf32>
    %151 = arith.mulf %150, %146 : vector<16x64xf32>
    %152 = arith.mulf %151, %146 : vector<16x64xf32>
    %153 = arith.addf %146, %152 : vector<16x64xf32>
    %cst_48 = arith.constant 0.797884583 : f32
    %154 = vector.broadcast %cst_48 : f32 to vector<16x64xf32>
    %155 = arith.mulf %154, %153 : vector<16x64xf32>
    %156 = math.tanh %155 : vector<16x64xf32>
    %cst_49 = arith.constant 1.000000e+00 : f32
    %157 = vector.broadcast %cst_49 : f32 to vector<16x64xf32>
    %158 = arith.addf %157, %156 : vector<16x64xf32>
    %159 = arith.mulf %148, %158 : vector<16x64xf32>
    %c0_50 = arith.constant 0 : index
    %c0_51 = arith.constant 0 : index
    %c0_52 = arith.constant 0 : index
    %160 = vector.load %arg6[%c0_50, %c0_51, %c0_52] : memref<2x64x32xf32, #tpu.memory_space<vmem>>, vector<1x64x32xf32>
    %161 = vector.shape_cast %160 : vector<1x64x32xf32> to vector<64x32xf32>
    %cst_53 = arith.constant dense<0.000000e+00> : vector<16x32xf32>
    %162 = tpu.matmul %159, %161, %cst_53 {dimension_numbers = #tpu.dot_dimension_numbers<[1], [0], [0], [1], [0, 0, 1, 1], [], []>} : vector<16x64xf32>, vector<64x32xf32>, vector<16x32xf32> -> vector<16x32xf32>
    %163 = vector.extract_strided_slice %0 {offsets = [9, 0], sizes = [1, 32], strides = [1, 1]} : vector<20x128xf32> to vector<1x32xf32>
    %164 = vector.broadcast %163 : vector<1x32xf32> to vector<16x32xf32>
    %165 = arith.addf %162, %164 : vector<16x32xf32>
    %166 = arith.addf %140, %165 : vector<16x32xf32>
    %167 = vector.extract_strided_slice %0 {offsets = [10, 0], sizes = [1, 32], strides = [1, 1]} : vector<20x128xf32> to vector<1x32xf32>
    %168 = vector.extract_strided_slice %0 {offsets = [11, 0], sizes = [1, 32], strides = [1, 1]} : vector<20x128xf32> to vector<1x32xf32>
    %cst_54 = arith.constant dense<0.000000e+00> : vector<16xf32>
    %169 = vector.multi_reduction <add>, %166, %cst_54 [1] : vector<16x32xf32> to vector<16xf32>
    %170 = vector.shape_cast %169 : vector<16xf32> to vector<16x1xf32>
    %cst_55 = arith.constant 3.200000e+01 : f32
    %171 = vector.broadcast %cst_55 : f32 to vector<16x1xf32>
    %172 = arith.divf %170, %171 : vector<16x1xf32>
    %173 = vector.broadcast %172 : vector<16x1xf32> to vector<16x32xf32>
    %174 = arith.subf %166, %173 : vector<16x32xf32>
    %175 = arith.mulf %174, %174 : vector<16x32xf32>
    %cst_56 = arith.constant dense<0.000000e+00> : vector<16xf32>
    %176 = vector.multi_reduction <add>, %175, %cst_56 [1] : vector<16x32xf32> to vector<16xf32>
    %177 = vector.shape_cast %176 : vector<16xf32> to vector<16x1xf32>
    %cst_57 = arith.constant 3.200000e+01 : f32
    %178 = vector.broadcast %cst_57 : f32 to vector<16x1xf32>
    %179 = arith.divf %177, %178 : vector<16x1xf32>
    %cst_58 = arith.constant 9.99999996E-13 : f32
    %180 = vector.broadcast %cst_58 : f32 to vector<16x1xf32>
    %181 = arith.addf %179, %180 : vector<16x1xf32>
    %182 = math.rsqrt %181 : vector<16x1xf32>
    %183 = vector.broadcast %182 : vector<16x1xf32> to vector<16x32xf32>
    %184 = arith.mulf %174, %183 : vector<16x32xf32>
    %185 = vector.broadcast %167 : vector<1x32xf32> to vector<16x32xf32>
    %186 = arith.mulf %184, %185 : vector<16x32xf32>
    %187 = vector.broadcast %168 : vector<1x32xf32> to vector<16x32xf32>
    %188 = arith.addf %186, %187 : vector<16x32xf32>
    %c1 = arith.constant 1 : index
    %c0_59 = arith.constant 0 : index
    %c0_60 = arith.constant 0 : index
    %189 = vector.load %arg3[%c1, %c0_59, %c0_60] : memref<2x32x96xf32, #tpu.memory_space<vmem>>, vector<1x32x96xf32>
    %190 = vector.shape_cast %189 : vector<1x32x96xf32> to vector<32x96xf32>
    %cst_61 = arith.constant dense<0.000000e+00> : vector<16x96xf32>
    %191 = tpu.matmul %188, %190, %cst_61 {dimension_numbers = #tpu.dot_dimension_numbers<[1], [0], [0], [1], [0, 0, 1, 1], [], []>} : vector<16x32xf32>, vector<32x96xf32>, vector<16x96xf32> -> vector<16x96xf32>
    %192 = vector.extract_strided_slice %0 {offsets = [12, 0], sizes = [1, 96], strides = [1, 1]} : vector<20x128xf32> to vector<1x96xf32>
    %193 = vector.broadcast %192 : vector<1x96xf32> to vector<16x96xf32>
    %194 = arith.addf %191, %193 : vector<16x96xf32>
    %195 = vector.extract_strided_slice %24 {offsets = [0, 0], sizes = [1, 8], strides = [1, 1]} : vector<2x8xf32> to vector<1x8xf32>
    %196 = vector.extract_strided_slice %194 {offsets = [0, 0], sizes = [8, 16], strides = [1, 1]} : vector<16x96xf32> to vector<8x16xf32>
    %197 = vector.extract_strided_slice %194 {offsets = [0, 32], sizes = [8, 16], strides = [1, 1]} : vector<16x96xf32> to vector<8x16xf32>
    %198 = vector.extract_strided_slice %194 {offsets = [0, 64], sizes = [8, 16], strides = [1, 1]} : vector<16x96xf32> to vector<8x16xf32>
    %cst_62 = arith.constant dense<0.000000e+00> : vector<8x8xf32>
    %199 = tpu.matmul %196, %197, %cst_62 {dimension_numbers = #tpu.dot_dimension_numbers<[1], [1], [0], [0], [0, 0, 1, 0], [], []>} : vector<8x16xf32>, vector<8x16xf32>, vector<8x8xf32> -> vector<8x8xf32>
    %cst_63 = arith.constant 2.500000e-01 : f32
    %200 = vector.broadcast %cst_63 : f32 to vector<8x8xf32>
    %201 = arith.mulf %199, %200 : vector<8x8xf32>
    %202 = vector.broadcast %195 : vector<1x8xf32> to vector<8x8xf32>
    %203 = arith.addf %201, %202 : vector<8x8xf32>
    %cst_64 = arith.constant dense<0xFF800000> : vector<8xf32>
    %204 = vector.multi_reduction <maximumf>, %203, %cst_64 [1] : vector<8x8xf32> to vector<8xf32>
    %205 = vector.shape_cast %204 : vector<8xf32> to vector<8x1xf32>
    %206 = vector.broadcast %205 : vector<8x1xf32> to vector<8x8xf32>
    %207 = arith.subf %203, %206 : vector<8x8xf32>
    %208 = math.exp %207 : vector<8x8xf32>
    %cst_65 = arith.constant dense<0.000000e+00> : vector<8xf32>
    %209 = vector.multi_reduction <add>, %208, %cst_65 [1] : vector<8x8xf32> to vector<8xf32>
    %210 = vector.shape_cast %209 : vector<8xf32> to vector<8x1xf32>
    %cst_66 = arith.constant dense<0.000000e+00> : vector<8x16xf32>
    %211 = tpu.matmul %208, %198, %cst_66 {dimension_numbers = #tpu.dot_dimension_numbers<[1], [0], [0], [1], [0, 0, 1, 1], [], []>} : vector<8x8xf32>, vector<8x16xf32>, vector<8x16xf32> -> vector<8x16xf32>
    %212 = tpu.reciprocal %210 {approx = true} : vector<8x1xf32> -> vector<8x1xf32>
    %213 = vector.broadcast %212 : vector<8x1xf32> to vector<8x16xf32>
    %214 = arith.mulf %211, %213 : vector<8x16xf32>
    %215 = vector.extract_strided_slice %194 {offsets = [0, 16], sizes = [8, 16], strides = [1, 1]} : vector<16x96xf32> to vector<8x16xf32>
    %216 = vector.extract_strided_slice %194 {offsets = [0, 48], sizes = [8, 16], strides = [1, 1]} : vector<16x96xf32> to vector<8x16xf32>
    %217 = vector.extract_strided_slice %194 {offsets = [0, 80], sizes = [8, 16], strides = [1, 1]} : vector<16x96xf32> to vector<8x16xf32>
    %cst_67 = arith.constant dense<0.000000e+00> : vector<8x8xf32>
    %218 = tpu.matmul %215, %216, %cst_67 {dimension_numbers = #tpu.dot_dimension_numbers<[1], [1], [0], [0], [0, 0, 1, 0], [], []>} : vector<8x16xf32>, vector<8x16xf32>, vector<8x8xf32> -> vector<8x8xf32>
    %cst_68 = arith.constant 2.500000e-01 : f32
    %219 = vector.broadcast %cst_68 : f32 to vector<8x8xf32>
    %220 = arith.mulf %218, %219 : vector<8x8xf32>
    %221 = vector.broadcast %195 : vector<1x8xf32> to vector<8x8xf32>
    %222 = arith.addf %220, %221 : vector<8x8xf32>
    %cst_69 = arith.constant dense<0xFF800000> : vector<8xf32>
    %223 = vector.multi_reduction <maximumf>, %222, %cst_69 [1] : vector<8x8xf32> to vector<8xf32>
    %224 = vector.shape_cast %223 : vector<8xf32> to vector<8x1xf32>
    %225 = vector.broadcast %224 : vector<8x1xf32> to vector<8x8xf32>
    %226 = arith.subf %222, %225 : vector<8x8xf32>
    %227 = math.exp %226 : vector<8x8xf32>
    %cst_70 = arith.constant dense<0.000000e+00> : vector<8xf32>
    %228 = vector.multi_reduction <add>, %227, %cst_70 [1] : vector<8x8xf32> to vector<8xf32>
    %229 = vector.shape_cast %228 : vector<8xf32> to vector<8x1xf32>
    %cst_71 = arith.constant dense<0.000000e+00> : vector<8x16xf32>
    %230 = tpu.matmul %227, %217, %cst_71 {dimension_numbers = #tpu.dot_dimension_numbers<[1], [0], [0], [1], [0, 0, 1, 1], [], []>} : vector<8x8xf32>, vector<8x16xf32>, vector<8x16xf32> -> vector<8x16xf32>
    %231 = tpu.reciprocal %229 {approx = true} : vector<8x1xf32> -> vector<8x1xf32>
    %232 = vector.broadcast %231 : vector<8x1xf32> to vector<8x16xf32>
    %233 = arith.mulf %230, %232 : vector<8x16xf32>
    %234 = tpu.concatenate %214, %233 in 1 : vector<8x16xf32>, vector<8x16xf32> -> vector<8x32xf32>
    %235 = vector.extract_strided_slice %24 {offsets = [1, 0], sizes = [1, 8], strides = [1, 1]} : vector<2x8xf32> to vector<1x8xf32>
    %236 = vector.extract_strided_slice %194 {offsets = [8, 0], sizes = [8, 16], strides = [1, 1]} : vector<16x96xf32> to vector<8x16xf32>
    %237 = vector.extract_strided_slice %194 {offsets = [8, 32], sizes = [8, 16], strides = [1, 1]} : vector<16x96xf32> to vector<8x16xf32>
    %238 = vector.extract_strided_slice %194 {offsets = [8, 64], sizes = [8, 16], strides = [1, 1]} : vector<16x96xf32> to vector<8x16xf32>
    %cst_72 = arith.constant dense<0.000000e+00> : vector<8x8xf32>
    %239 = tpu.matmul %236, %237, %cst_72 {dimension_numbers = #tpu.dot_dimension_numbers<[1], [1], [0], [0], [0, 0, 1, 0], [], []>} : vector<8x16xf32>, vector<8x16xf32>, vector<8x8xf32> -> vector<8x8xf32>
    %cst_73 = arith.constant 2.500000e-01 : f32
    %240 = vector.broadcast %cst_73 : f32 to vector<8x8xf32>
    %241 = arith.mulf %239, %240 : vector<8x8xf32>
    %242 = vector.broadcast %235 : vector<1x8xf32> to vector<8x8xf32>
    %243 = arith.addf %241, %242 : vector<8x8xf32>
    %cst_74 = arith.constant dense<0xFF800000> : vector<8xf32>
    %244 = vector.multi_reduction <maximumf>, %243, %cst_74 [1] : vector<8x8xf32> to vector<8xf32>
    %245 = vector.shape_cast %244 : vector<8xf32> to vector<8x1xf32>
    %246 = vector.broadcast %245 : vector<8x1xf32> to vector<8x8xf32>
    %247 = arith.subf %243, %246 : vector<8x8xf32>
    %248 = math.exp %247 : vector<8x8xf32>
    %cst_75 = arith.constant dense<0.000000e+00> : vector<8xf32>
    %249 = vector.multi_reduction <add>, %248, %cst_75 [1] : vector<8x8xf32> to vector<8xf32>
    %250 = vector.shape_cast %249 : vector<8xf32> to vector<8x1xf32>
    %cst_76 = arith.constant dense<0.000000e+00> : vector<8x16xf32>
    %251 = tpu.matmul %248, %238, %cst_76 {dimension_numbers = #tpu.dot_dimension_numbers<[1], [0], [0], [1], [0, 0, 1, 1], [], []>} : vector<8x8xf32>, vector<8x16xf32>, vector<8x16xf32> -> vector<8x16xf32>
    %252 = tpu.reciprocal %250 {approx = true} : vector<8x1xf32> -> vector<8x1xf32>
    %253 = vector.broadcast %252 : vector<8x1xf32> to vector<8x16xf32>
    %254 = arith.mulf %251, %253 : vector<8x16xf32>
    %255 = vector.extract_strided_slice %194 {offsets = [8, 16], sizes = [8, 16], strides = [1, 1]} : vector<16x96xf32> to vector<8x16xf32>
    %256 = vector.extract_strided_slice %194 {offsets = [8, 48], sizes = [8, 16], strides = [1, 1]} : vector<16x96xf32> to vector<8x16xf32>
    %257 = vector.extract_strided_slice %194 {offsets = [8, 80], sizes = [8, 16], strides = [1, 1]} : vector<16x96xf32> to vector<8x16xf32>
    %cst_77 = arith.constant dense<0.000000e+00> : vector<8x8xf32>
    %258 = tpu.matmul %255, %256, %cst_77 {dimension_numbers = #tpu.dot_dimension_numbers<[1], [1], [0], [0], [0, 0, 1, 0], [], []>} : vector<8x16xf32>, vector<8x16xf32>, vector<8x8xf32> -> vector<8x8xf32>
    %cst_78 = arith.constant 2.500000e-01 : f32
    %259 = vector.broadcast %cst_78 : f32 to vector<8x8xf32>
    %260 = arith.mulf %258, %259 : vector<8x8xf32>
    %261 = vector.broadcast %235 : vector<1x8xf32> to vector<8x8xf32>
    %262 = arith.addf %260, %261 : vector<8x8xf32>
    %cst_79 = arith.constant dense<0xFF800000> : vector<8xf32>
    %263 = vector.multi_reduction <maximumf>, %262, %cst_79 [1] : vector<8x8xf32> to vector<8xf32>
    %264 = vector.shape_cast %263 : vector<8xf32> to vector<8x1xf32>
    %265 = vector.broadcast %264 : vector<8x1xf32> to vector<8x8xf32>
    %266 = arith.subf %262, %265 : vector<8x8xf32>
    %267 = math.exp %266 : vector<8x8xf32>
    %cst_80 = arith.constant dense<0.000000e+00> : vector<8xf32>
    %268 = vector.multi_reduction <add>, %267, %cst_80 [1] : vector<8x8xf32> to vector<8xf32>
    %269 = vector.shape_cast %268 : vector<8xf32> to vector<8x1xf32>
    %cst_81 = arith.constant dense<0.000000e+00> : vector<8x16xf32>
    %270 = tpu.matmul %267, %257, %cst_81 {dimension_numbers = #tpu.dot_dimension_numbers<[1], [0], [0], [1], [0, 0, 1, 1], [], []>} : vector<8x8xf32>, vector<8x16xf32>, vector<8x16xf32> -> vector<8x16xf32>
    %271 = tpu.reciprocal %269 {approx = true} : vector<8x1xf32> -> vector<8x1xf32>
    %272 = vector.broadcast %271 : vector<8x1xf32> to vector<8x16xf32>
    %273 = arith.mulf %270, %272 : vector<8x16xf32>
    %274 = tpu.concatenate %254, %273 in 1 : vector<8x16xf32>, vector<8x16xf32> -> vector<8x32xf32>
    %275 = tpu.concatenate %234, %274 in 0 : vector<8x32xf32>, vector<8x32xf32> -> vector<16x32xf32>
    %c1_82 = arith.constant 1 : index
    %c0_83 = arith.constant 0 : index
    %c0_84 = arith.constant 0 : index
    %276 = vector.load %arg4[%c1_82, %c0_83, %c0_84] : memref<2x32x32xf32, #tpu.memory_space<vmem>>, vector<1x32x32xf32>
    %277 = vector.shape_cast %276 : vector<1x32x32xf32> to vector<32x32xf32>
    %cst_85 = arith.constant dense<0.000000e+00> : vector<16x32xf32>
    %278 = tpu.matmul %275, %277, %cst_85 {dimension_numbers = #tpu.dot_dimension_numbers<[1], [0], [0], [1], [0, 0, 1, 1], [], []>} : vector<16x32xf32>, vector<32x32xf32>, vector<16x32xf32> -> vector<16x32xf32>
    %279 = vector.extract_strided_slice %0 {offsets = [13, 0], sizes = [1, 32], strides = [1, 1]} : vector<20x128xf32> to vector<1x32xf32>
    %280 = vector.broadcast %279 : vector<1x32xf32> to vector<16x32xf32>
    %281 = arith.addf %278, %280 : vector<16x32xf32>
    %282 = arith.addf %188, %281 : vector<16x32xf32>
    %283 = vector.extract_strided_slice %0 {offsets = [14, 0], sizes = [1, 32], strides = [1, 1]} : vector<20x128xf32> to vector<1x32xf32>
    %284 = vector.extract_strided_slice %0 {offsets = [15, 0], sizes = [1, 32], strides = [1, 1]} : vector<20x128xf32> to vector<1x32xf32>
    %cst_86 = arith.constant dense<0.000000e+00> : vector<16xf32>
    %285 = vector.multi_reduction <add>, %282, %cst_86 [1] : vector<16x32xf32> to vector<16xf32>
    %286 = vector.shape_cast %285 : vector<16xf32> to vector<16x1xf32>
    %cst_87 = arith.constant 3.200000e+01 : f32
    %287 = vector.broadcast %cst_87 : f32 to vector<16x1xf32>
    %288 = arith.divf %286, %287 : vector<16x1xf32>
    %289 = vector.broadcast %288 : vector<16x1xf32> to vector<16x32xf32>
    %290 = arith.subf %282, %289 : vector<16x32xf32>
    %291 = arith.mulf %290, %290 : vector<16x32xf32>
    %cst_88 = arith.constant dense<0.000000e+00> : vector<16xf32>
    %292 = vector.multi_reduction <add>, %291, %cst_88 [1] : vector<16x32xf32> to vector<16xf32>
    %293 = vector.shape_cast %292 : vector<16xf32> to vector<16x1xf32>
    %cst_89 = arith.constant 3.200000e+01 : f32
    %294 = vector.broadcast %cst_89 : f32 to vector<16x1xf32>
    %295 = arith.divf %293, %294 : vector<16x1xf32>
    %cst_90 = arith.constant 9.99999996E-13 : f32
    %296 = vector.broadcast %cst_90 : f32 to vector<16x1xf32>
    %297 = arith.addf %295, %296 : vector<16x1xf32>
    %298 = math.rsqrt %297 : vector<16x1xf32>
    %299 = vector.broadcast %298 : vector<16x1xf32> to vector<16x32xf32>
    %300 = arith.mulf %290, %299 : vector<16x32xf32>
    %301 = vector.broadcast %283 : vector<1x32xf32> to vector<16x32xf32>
    %302 = arith.mulf %300, %301 : vector<16x32xf32>
    %303 = vector.broadcast %284 : vector<1x32xf32> to vector<16x32xf32>
    %304 = arith.addf %302, %303 : vector<16x32xf32>
    %c1_91 = arith.constant 1 : index
    %c0_92 = arith.constant 0 : index
    %c0_93 = arith.constant 0 : index
    %305 = vector.load %arg5[%c1_91, %c0_92, %c0_93] : memref<2x32x64xf32, #tpu.memory_space<vmem>>, vector<1x32x64xf32>
    %306 = vector.shape_cast %305 : vector<1x32x64xf32> to vector<32x64xf32>
    %cst_94 = arith.constant dense<0.000000e+00> : vector<16x64xf32>
    %307 = tpu.matmul %304, %306, %cst_94 {dimension_numbers = #tpu.dot_dimension_numbers<[1], [0], [0], [1], [0, 0, 1, 1], [], []>} : vector<16x32xf32>, vector<32x64xf32>, vector<16x64xf32> -> vector<16x64xf32>
    %308 = vector.extract_strided_slice %0 {offsets = [16, 0], sizes = [1, 64], strides = [1, 1]} : vector<20x128xf32> to vector<1x64xf32>
    %309 = vector.broadcast %308 : vector<1x64xf32> to vector<16x64xf32>
    %310 = arith.addf %307, %309 : vector<16x64xf32>
    %cst_95 = arith.constant 5.000000e-01 : f32
    %311 = vector.broadcast %cst_95 : f32 to vector<16x64xf32>
    %312 = arith.mulf %311, %310 : vector<16x64xf32>
    %cst_96 = arith.constant 4.471500e-02 : f32
    %313 = vector.broadcast %cst_96 : f32 to vector<16x64xf32>
    %314 = arith.mulf %313, %310 : vector<16x64xf32>
    %315 = arith.mulf %314, %310 : vector<16x64xf32>
    %316 = arith.mulf %315, %310 : vector<16x64xf32>
    %317 = arith.addf %310, %316 : vector<16x64xf32>
    %cst_97 = arith.constant 0.797884583 : f32
    %318 = vector.broadcast %cst_97 : f32 to vector<16x64xf32>
    %319 = arith.mulf %318, %317 : vector<16x64xf32>
    %320 = math.tanh %319 : vector<16x64xf32>
    %cst_98 = arith.constant 1.000000e+00 : f32
    %321 = vector.broadcast %cst_98 : f32 to vector<16x64xf32>
    %322 = arith.addf %321, %320 : vector<16x64xf32>
    %323 = arith.mulf %312, %322 : vector<16x64xf32>
    %c1_99 = arith.constant 1 : index
    %c0_100 = arith.constant 0 : index
    %c0_101 = arith.constant 0 : index
    %324 = vector.load %arg6[%c1_99, %c0_100, %c0_101] : memref<2x64x32xf32, #tpu.memory_space<vmem>>, vector<1x64x32xf32>
    %325 = vector.shape_cast %324 : vector<1x64x32xf32> to vector<64x32xf32>
    %cst_102 = arith.constant dense<0.000000e+00> : vector<16x32xf32>
    %326 = tpu.matmul %323, %325, %cst_102 {dimension_numbers = #tpu.dot_dimension_numbers<[1], [0], [0], [1], [0, 0, 1, 1], [], []>} : vector<16x64xf32>, vector<64x32xf32>, vector<16x32xf32> -> vector<16x32xf32>
    %327 = vector.extract_strided_slice %0 {offsets = [17, 0], sizes = [1, 32], strides = [1, 1]} : vector<20x128xf32> to vector<1x32xf32>
    %328 = vector.broadcast %327 : vector<1x32xf32> to vector<16x32xf32>
    %329 = arith.addf %326, %328 : vector<16x32xf32>
    %330 = arith.addf %304, %329 : vector<16x32xf32>
    %331 = vector.extract_strided_slice %0 {offsets = [18, 0], sizes = [1, 32], strides = [1, 1]} : vector<20x128xf32> to vector<1x32xf32>
    %332 = vector.extract_strided_slice %0 {offsets = [19, 0], sizes = [1, 32], strides = [1, 1]} : vector<20x128xf32> to vector<1x32xf32>
    %cst_103 = arith.constant dense<0.000000e+00> : vector<16xf32>
    %333 = vector.multi_reduction <add>, %330, %cst_103 [1] : vector<16x32xf32> to vector<16xf32>
    %334 = vector.shape_cast %333 : vector<16xf32> to vector<16x1xf32>
    %cst_104 = arith.constant 3.200000e+01 : f32
    %335 = vector.broadcast %cst_104 : f32 to vector<16x1xf32>
    %336 = arith.divf %334, %335 : vector<16x1xf32>
    %337 = vector.broadcast %336 : vector<16x1xf32> to vector<16x32xf32>
    %338 = arith.subf %330, %337 : vector<16x32xf32>
    %339 = arith.mulf %338, %338 : vector<16x32xf32>
    %cst_105 = arith.constant dense<0.000000e+00> : vector<16xf32>
    %340 = vector.multi_reduction <add>, %339, %cst_105 [1] : vector<16x32xf32> to vector<16xf32>
    %341 = vector.shape_cast %340 : vector<16xf32> to vector<16x1xf32>
    %cst_106 = arith.constant 3.200000e+01 : f32
    %342 = vector.broadcast %cst_106 : f32 to vector<16x1xf32>
    %343 = arith.divf %341, %342 : vector<16x1xf32>
    %cst_107 = arith.constant 9.99999996E-13 : f32
    %344 = vector.broadcast %cst_107 : f32 to vector<16x1xf32>
    %345 = arith.addf %343, %344 : vector<16x1xf32>
    %346 = math.rsqrt %345 : vector<16x1xf32>
    %347 = vector.broadcast %346 : vector<16x1xf32> to vector<16x32xf32>
    %348 = arith.mulf %338, %347 : vector<16x32xf32>
    %349 = vector.broadcast %331 : vector<1x32xf32> to vector<16x32xf32>
    %350 = arith.mulf %348, %349 : vector<16x32xf32>
    %351 = vector.broadcast %332 : vector<1x32xf32> to vector<16x32xf32>
    %352 = arith.addf %350, %351 : vector<16x32xf32>
    %353 = vector.extract_strided_slice %352 {offsets = [0, 0], sizes = [1, 32], strides = [1, 1]} : vector<16x32xf32> to vector<1x32xf32>
    %354 = vector.extract_strided_slice %352 {offsets = [8, 0], sizes = [1, 32], strides = [1, 1]} : vector<16x32xf32> to vector<1x32xf32>
    %355 = tpu.concatenate %353, %354 in 0 : vector<1x32xf32>, vector<1x32xf32> -> vector<2x32xf32>
    %c0_108 = arith.constant 0 : index
    %c0_109 = arith.constant 0 : index
    %356 = vector.load %arg7[%c0_108, %c0_109] : memref<32x32xf32, #tpu.memory_space<vmem>>, vector<32x32xf32>
    %cst_110 = arith.constant dense<0.000000e+00> : vector<2x32xf32>
    %357 = tpu.matmul %355, %356, %cst_110 {dimension_numbers = #tpu.dot_dimension_numbers<[1], [0], [0], [1], [0, 0, 1, 1], [], []>} : vector<2x32xf32>, vector<32x32xf32>, vector<2x32xf32> -> vector<2x32xf32>
    %358 = vector.extract_strided_slice %0 {offsets = [2, 0], sizes = [1, 32], strides = [1, 1]} : vector<20x128xf32> to vector<1x32xf32>
    %359 = vector.broadcast %358 : vector<1x32xf32> to vector<2x32xf32>
    %360 = arith.addf %357, %359 : vector<2x32xf32>
    %361 = math.tanh %360 : vector<2x32xf32>
    %c0_111 = arith.constant 0 : index
    %c0_112 = arith.constant 0 : index
    %362 = vector.load %arg8[%c0_111, %c0_112] : memref<32x128xf32, #tpu.memory_space<vmem>>, vector<32x128xf32>
    %cst_113 = arith.constant dense<0.000000e+00> : vector<2x128xf32>
    %363 = tpu.matmul %361, %362, %cst_113 {dimension_numbers = #tpu.dot_dimension_numbers<[1], [0], [0], [1], [0, 0, 1, 1], [], []>} : vector<2x32xf32>, vector<32x128xf32>, vector<2x128xf32> -> vector<2x128xf32>
    %364 = vector.extract_strided_slice %0 {offsets = [3, 0], sizes = [1, 128], strides = [1, 1]} : vector<20x128xf32> to vector<1x128xf32>
    %365 = vector.broadcast %364 : vector<1x128xf32> to vector<2x128xf32>
    %366 = arith.addf %363, %365 : vector<2x128xf32>
    %c0_114 = arith.constant 0 : index
    %c0_115 = arith.constant 0 : index
    %367 = vector.load %arg9[%c0_114, %c0_115] : memref<2x128xf32, #tpu.memory_space<vmem>>, vector<2x128xf32>
    tpu.vector_store %arg9[%c0_114, %c0_115], %366 {strides = array<i32>} : memref<2x128xf32, #tpu.memory_space<vmem>>, vector<2x128xf32>,
    return
  }
}

</mosaic_0001>

<llo_original>
// kernel: snippet_bert_forward.1
$region0: #{snippet_bert_forward.1}
  #allocation0 [shape = 'u32[]', space=smem, size = 0x4, offset = 0x4, fixed_abs, tag = 'smem constant byte address 0x4 - core index']
  #allocation1 [shape = 'u32[144,128]{1,0:T(1,128)}', space=vmem, size = 0x12000, scoped, tag = 'internal scratch']
  %s0 = inlined_call_operand.vmem [shape: f32[16,32], index: 0, kind: input, shape index: {}]
  %s1 = inlined_call_operand.vmem [shape: f32[2,8], index: 1, kind: input, shape index: {}]
  %s2 = inlined_call_operand.vmem [shape: f32[20,128], index: 2, kind: input, shape index: {}]
  %s3 = inlined_call_operand.vmem [shape: f32[2,32,96], index: 3, kind: input, shape index: {}]
  %s4 = inlined_call_operand.vmem [shape: f32[2,32,32], index: 4, kind: input, shape index: {}]
  %s5 = inlined_call_operand.vmem [shape: f32[2,32,64], index: 5, kind: input, shape index: {}]
  %s6 = inlined_call_operand.vmem [shape: f32[2,64,32], index: 6, kind: input, shape index: {}]
  %s7 = inlined_call_operand.vmem [shape: f32[32,32], index: 7, kind: input, shape index: {}]
  %s8 = inlined_call_operand.vmem [shape: f32[32,128], index: 8, kind: input, shape index: {}]
  %s9 = inlined_call_operand.hbm [shape: f32[2,128], index: 9, kind: output, shape index: {}]
  %s10 = sld [smem:[#allocation0]]
  $region46: #{snippet_bert_forward.1} parent=0
    _
  %s12 = ssub.s32 1, %s10
  %s13 = scalar_select 0, %s12, %s10
  $region1: #{snippet_bert_forward.1} parent=0
    #allocation2 [shape = 'u8[1024]{0}', space=vmem, size = 0x400, scoped, tag = 'output window, operand 0, single buffered']
    #allocation3 [shape = 's32[1]{0}', space=sflag, size = 0x4, scoped, tag = 'scoped memory for snippet_bert_forward.1']
    %14 = vsyncpa [#allocation3], 0
    // Predicated region
    $region2: #{snippet_bert_forward.1} parent=1 // pred_check
      _
    $region3: #{snippet_bert_forward.1} parent=1 // pred_check_branch
      %16 = sbr.rel (0) target = $region5
    $region4: #{snippet_bert_forward.1} parent=1 // pred_region
      _
    $region5: #{snippet_bert_forward.1} parent=1 // pred_fallthru
      _
    // Predicated region
    $region6: #{snippet_bert_forward.1} parent=1 // pred_check
      _
    $region7: #{snippet_bert_forward.1} parent=1 // pred_check_branch
      %18 = sbr.rel (0) target = $region9
    $region8: #{snippet_bert_forward.1} parent=1 // pred_region
      _
    $region9: #{snippet_bert_forward.1} parent=1 // pred_fallthru
      _
    // Predicated region
    $region10: #{snippet_bert_forward.1} parent=1 // pred_check
      _
    $region11: #{snippet_bert_forward.1} parent=1 // pred_check_branch
      %20 = sbr.rel (0) target = $region13
    $region12: #{snippet_bert_forward.1} parent=1 // pred_region
      _
    $region13: #{snippet_bert_forward.1} parent=1 // pred_fallthru
      _
    // Predicated region
    $region14: #{snippet_bert_forward.1} parent=1 // pred_check
      _
    $region15: #{snippet_bert_forward.1} parent=1 // pred_check_branch
      %22 = sbr.rel (0) target = $region17
    $region16: #{snippet_bert_forward.1} parent=1 // pred_region
      _
    $region17: #{snippet_bert_forward.1} parent=1 // pred_fallthru
      _
    // Predicated region
    $region18: #{snippet_bert_forward.1} parent=1 // pred_check
      _
    $region19: #{snippet_bert_forward.1} parent=1 // pred_check_branch
      %24 = sbr.rel (0) target = $region21
    $region20: #{snippet_bert_forward.1} parent=1 // pred_region
      _
    $region21: #{snippet_bert_forward.1} parent=1 // pred_fallthru
      _
    // Predicated region
    $region22: #{snippet_bert_forward.1} parent=1 // pred_check
      _
    $region23: #{snippet_bert_forward.1} parent=1 // pred_check_branch
      %26 = sbr.rel (0) target = $region25
    $region24: #{snippet_bert_forward.1} parent=1 // pred_region
      _
    $region25: #{snippet_bert_forward.1} parent=1 // pred_fallthru
      _
    // Predicated region
    $region26: #{snippet_bert_forward.1} parent=1 // pred_check
      _
    $region27: #{snippet_bert_forward.1} parent=1 // pred_check_branch
      %28 = sbr.rel (0) target = $region29
    $region28: #{snippet_bert_forward.1} parent=1 // pred_region
      _
    $region29: #{snippet_bert_forward.1} parent=1 // pred_fallthru
      _
    // Predicated region
    $region30: #{snippet_bert_forward.1} parent=1 // pred_check
      _
    $region31: #{snippet_bert_forward.1} parent=1 // pred_check_branch
      %30 = sbr.rel (0) target = $region33
    $region32: #{snippet_bert_forward.1} parent=1 // pred_region
      _
    $region33: #{snippet_bert_forward.1} parent=1 // pred_fallthru
      _
    // Predicated region
    $region34: #{snippet_bert_forward.1} parent=1 // pred_check
      _
    $region35: #{snippet_bert_forward.1} parent=1 // pred_check_branch
      %32 = sbr.rel (0) target = $region37
    $region36: #{snippet_bert_forward.1} parent=1 // pred_region
      _
    $region37: #{snippet_bert_forward.1} parent=1 // pred_fallthru
      _
    %v33 = vld [vmem:[%s2] sm:$0xff]
    %v34 = vld [vmem:[%s2 + $0x8] sm:$0xff]
    %v35 = vld [vmem:[%s2 + $0x10] sm:$0xf]
    %v36 = vld [vmem:[%s0] sm:$0xff]
    %v37 = vld [vmem:[%s0 + $0x8] sm:$0xff]
    %vm38 = vcmask 261120
    %v39 = vsel %vm38, %v36, 0.0
    %40 = vadd.xlane.f32.xlu0 %v39
    %v41 = vpop.xlane.xlu0 %40
    %v42 = vsel %vm38, %v37, 0.0
    %43 = vadd.xlane.f32.xlu0 %v42
    %v44 = vpop.xlane.xlu0 %43
    %v45 = vrcp.pop 32.0
    %v46 = vmul.f32 %v41, %v45
    %v47 = vmul.f32 %v44, %v45
    %v48 = vsub.f32 %v36, %v46
    %v49 = vsub.f32 %v37, %v47
    %v50 = vmul.f32 %v48, %v48
    %v51 = vmul.f32 %v49, %v49
    %v52 = vsel %vm38, %v50, 0.0
    %53 = vadd.xlane.f32.xlu0 %v52
    %v54 = vpop.xlane.xlu0 %53
    %v55 = vsel %vm38, %v51, 0.0
    %56 = vadd.xlane.f32.xlu0 %v55
    %v57 = vpop.xlane.xlu0 %56
    %v58 = vmul.f32 %v54, %v45
    %v59 = vmul.f32 %v57, %v45
    %v60 = vadd.f32 %v58, 1e-12
    %v61 = vadd.f32 %v59, 1e-12
    %v62 = vrsqrt.pop %v60
    %v63 = vrsqrt.pop %v61
    %v64 = vmul.f32 %v48, %v62
    %v65 = vmul.f32 %v49, %v63
    %v66 = vlaneseq
    %v67 = vshrl.u32 %v66, 7
    %v68 = vsub.s32 0, %v67
    %v69 = vrot.slane %v33, %v68
    %v70 = vmul.f32 %v64, %v69
    %v71 = vmul.f32 %v65, %v69
    %v72 = vlaneseq
    %v73 = vshrl.u32 %v72, 7
    %v74 = vsub.s32 1, %v73
    %v75 = vrot.slane %v33, %v74
    %v76 = vadd.f32 %v70, %v75
    %v77 = vadd.f32 %v71, %v75
    %v78 = vld [vmem:[%s1] sm:$0x3]
    %v79 = vld [vmem:[%s3] sm:$0xff]
    %v80 = vld [vmem:[%s3 + $0x8] sm:$0xff]
    %v81 = vld [vmem:[%s3 + $0x10] sm:$0xff]
    %v82 = vld [vmem:[%s3 + $0x18] sm:$0xff]
    %v83 = vlaneseq
    %v84 = vshrl.u32 %v83, 7
    %v85 = vsub.s32 4, %v84
    %v86 = vrot.slane %v33, %v85
    %v88 = vsel %vm38, %v76, 0
    %v91 = vsel %vm38, %v77, 0
    %93 = vmatprep.subr.mxu0 0.0
    %94 = vmatpush1.msra.mxu0 0.0
    %95 = vmatprep.subr.mxu0 0.0
    %96 = vmatpush1.msra.mxu0 0.0
    %97 = vmatprep.subr.mxu0 0.0
    %98 = vmatpush1.msra.mxu0 0.0
    %99 = vmatprep.subr.mxu0 0.0
    %100 = vmatpush1.msra.mxu0 0.0
    %101 = vmatprep.subr.mxu0 0.0
    %102 = vmatpush1.msra.mxu0 0.0
    %103 = vmatprep.subr.mxu0 0.0
    %104 = vmatpush1.msra.mxu0 0.0
    %105 = vmatprep.subr.mxu0 0.0
    %106 = vmatpush1.msra.mxu0 0.0
    %107 = vmatprep.subr.mxu0 0.0
    %108 = vmatpush1.msra.mxu0 0.0
    %109 = vmatprep.subr.mxu0 0.0
    %110 = vmatpush1.msra.mxu0 0.0
    %111 = vmatprep.subr.mxu0 0.0
    %112 = vmatpush1.msra.mxu0 0.0
    %113 = vmatprep.subr.mxu0 0.0
    %114 = vmatpush1.msra.mxu0 0.0
    %115 = vmatprep.subr.mxu0 0.0
    %116 = vmatpush1.msra.mxu0 0.0
    %117 = vmatprep.subr.mxu0 0.0
    %118 = vmatpush1.msra.mxu0 %v82
    %119 = vmatprep.subr.mxu0 0.0
    %120 = vmatpush1.msra.mxu0 %v81
    %121 = vmatprep.subr.mxu0 0.0
    %122 = vmatpush1.msra.mxu0 %v80
    %123 = vmatprep.subr.mxu0 0.0
    %124 = vmatpush1.msra.mxu0 %v79
    %125 = vmatprep.subr.mxu0 0.0
    %126 = vmatpush2.msra.mxu0 0.0
    %127 = vmatprep.subr.mxu0 0.0
    %128 = vmatpush2.msra.mxu0 0.0
    %129 = vmatprep.subr.mxu0 0.0
    %130 = vmatpush2.msra.mxu0 0.0
    %131 = vmatprep.subr.mxu0 0.0
    %132 = vmatpush2.msra.mxu0 0.0
    %133 = vmatprep.subr.mxu0 0.0
    %134 = vmatpush2.msra.mxu0 0.0
    %135 = vmatprep.subr.mxu0 0.0
    %136 = vmatpush2.msra.mxu0 0.0
    %137 = vmatprep.subr.mxu0 0.0
    %138 = vmatpush2.msra.mxu0 0.0
    %139 = vmatprep.subr.mxu0 0.0
    %140 = vmatpush2.msra.mxu0 0.0
    %141 = vmatprep.subr.mxu0 0.0
    %142 = vmatpush2.msra.mxu0 0.0
    %143 = vmatprep.subr.mxu0 0.0
    %144 = vmatpush2.msra.mxu0 0.0
    %145 = vmatprep.subr.mxu0 0.0
    %146 = vmatpush2.msra.mxu0 0.0
    %147 = vmatprep.subr.mxu0 0.0
    %148 = vmatpush2.msra.mxu0 0.0
    %149 = vmatprep.subr.mxu0 0.0
    %150 = vmatpush2.msra.mxu0 0.0
    %151 = vmatprep.subr.mxu0 0.0
    %152 = vmatpush2.msra.mxu0 0.0
    %153 = vmatprep.subr.mxu0 0.0
    %154 = vmatpush2.msra.mxu0 0.0
    %155 = vmatprep.subr.mxu0 0.0
    %156 = vmatpush2.msra.mxu0 0.0
    %157 = vmatprep.mubr.f32.mxu0 0.0
    %158 = vmatmul.mubr.f32.gmra.mxu0 %v88
    %v159 = vpop.f32.mrf.mxu0
    %v160 = vadd.f32 %v86, %v159
    %v161 = vpop.f32.mrf.mxu0
    %162 = vmatprep.mubr.f32.mxu0 0.0
    %163 = vmatmul.mubr.f32.gmra.mxu0 %v91
    %v164 = vpop.f32.mrf.mxu0
    %v165 = vadd.f32 %v86, %v164
    %v166 = vpop.f32.mrf.mxu0
    %167 = vdwg.mxu0
    %169 = vrot.lane.b32.xlu0 %v160, 96
    %v170 = vpop.permute.xlu0 %169
    %vm171 = vcmask 130048
    %v172 = vsel %vm171, %v160, 0
    %v174 = vsel %vm171, %v170, 0
    %176 = vmatprep.subr.mxu0 0.0
    %177 = vmatpush1.xpose.msra.mxu0 0.0
    %178 = vmatprep.subr.mxu0 0.0
    %179 = vmatpush1.xpose.msra.mxu0 0.0
    %180 = vmatprep.subr.mxu0 0.0
    %181 = vmatpush1.xpose.msra.mxu0 0.0
    %182 = vmatprep.subr.mxu0 0.0
    %183 = vmatpush1.xpose.msra.mxu0 0.0
    %184 = vmatprep.subr.mxu0 0.0
    %185 = vmatpush1.xpose.msra.mxu0 0.0
    %186 = vmatprep.subr.mxu0 0.0
    %187 = vmatpush1.xpose.msra.mxu0 0.0
    %188 = vmatprep.subr.mxu0 0.0
    %189 = vmatpush1.xpose.msra.mxu0 0.0
    %190 = vmatprep.subr.mxu0 0.0
    %191 = vmatpush1.xpose.msra.mxu0 0.0
    %192 = vmatprep.subr.mxu0 0.0
    %193 = vmatpush1.xpose.msra.mxu0 0.0
    %194 = vmatprep.subr.mxu0 0.0
    %195 = vmatpush1.xpose.msra.mxu0 0.0
    %196 = vmatprep.subr.mxu0 0.0
    %197 = vmatpush1.xpose.msra.mxu0 0.0
    %198 = vmatprep.subr.mxu0 0.0
    %199 = vmatpush1.xpose.msra.mxu0 0.0
    %200 = vmatprep.subr.mxu0 0.0
    %201 = vmatpush1.xpose.msra.mxu0 0.0
    %202 = vmatprep.subr.mxu0 0.0
    %203 = vmatpush1.xpose.msra.mxu0 0.0
    %204 = vmatprep.subr.mxu0 0.0
    %205 = vmatpush1.xpose.msra.mxu0 0.0
    %206 = vmatprep.subr.mxu0 0.0
    %207 = vmatpush1.xpose.msra.mxu0 %v174
    %208 = vmatprep.subr.mxu0 0.0
    %209 = vmatpush2.xpose.msra.mxu0 0.0
    %210 = vmatprep.subr.mxu0 0.0
    %211 = vmatpush2.xpose.msra.mxu0 0.0
    %212 = vmatprep.subr.mxu0 0.0
    %213 = vmatpush2.xpose.msra.mxu0 0.0
    %214 = vmatprep.subr.mxu0 0.0
    %215 = vmatpush2.xpose.msra.mxu0 0.0
    %216 = vmatprep.subr.mxu0 0.0
    %217 = vmatpush2.xpose.msra.mxu0 0.0
    %218 = vmatprep.subr.mxu0 0.0
    %219 = vmatpush2.xpose.msra.mxu0 0.0
    %220 = vmatprep.subr.mxu0 0.0
    %221 = vmatpush2.xpose.msra.mxu0 0.0
    %222 = vmatprep.subr.mxu0 0.0
    %223 = vmatpush2.xpose.msra.mxu0 0.0
    %224 = vmatprep.subr.mxu0 0.0
    %225 = vmatpush2.xpose.msra.mxu0 0.0
    %226 = vmatprep.subr.mxu0 0.0
    %227 = vmatpush2.xpose.msra.mxu0 0.0
    %228 = vmatprep.subr.mxu0 0.0
    %229 = vmatpush2.xpose.msra.mxu0 0.0
    %230 = vmatprep.subr.mxu0 0.0
    %231 = vmatpush2.xpose.msra.mxu0 0.0
    %232 = vmatprep.subr.mxu0 0.0
    %233 = vmatpush2.xpose.msra.mxu0 0.0
    %234 = vmatprep.subr.mxu0 0.0
    %235 = vmatpush2.xpose.msra.mxu0 0.0
    %236 = vmatprep.subr.mxu0 0.0
    %237 = vmatpush2.xpose.msra.mxu0 0.0
    %238 = vmatprep.subr.mxu0 0.0
    %239 = vmatpush2.xpose.msra.mxu0 0.0
    %240 = vmatprep.mubr.f32.mxu0 0.0
    %241 = vmatmul.mubr.f32.gmra.mxu0 %v172
    %v242 = vpop.f32.mrf.mxu0
    %v243 = vadd.f32 0.0, %v242
    %v244 = vpop.f32.mrf.mxu0
    %245 = vdwg.mxu0
    %v246 = vmul.f32 %v243, 0.25
    %v247 = vlaneseq
    %v248 = vshrl.u32 %v247, 7
    %v249 = vsub.s32 0, %v248
    %v250 = vrot.slane %v78, %v249
    %v251 = vadd.f32 %v246, %v250
    %vm252 = vcmask 64512
    %v253 = vsel %vm252, %v251, -inf
    %254 = vmax.xlane.f32.xlu0 %v253
    %v255 = vpop.xlane.xlu0 %254
    %v256 = vsub.f32 %v251, %v255
    %v257 = vmul.f32 %v256, 1.442695
    %v258 = vpow.pop %v257
    %v259 = vsel %vm252, %v258, 0.0
    %260 = vadd.xlane.f32.xlu0 %v259
    %v261 = vpop.xlane.xlu0 %260
    %262 = vrot.lane.b32.xlu0 %v160, 64
    %v263 = vpop.permute.xlu0 %262
    %v266 = vsel %vm252, %v258, 0
    %268 = vmatprep.subr.mxu0 0.0
    %269 = vmatpush1.msra.mxu0 0.0
    %270 = vmatprep.subr.mxu0 0.0
    %271 = vmatpush1.msra.mxu0 0.0
    %272 = vmatprep.subr.mxu0 0.0
    %273 = vmatpush1.msra.mxu0 0.0
    %274 = vmatprep.subr.mxu0 0.0
    %275 = vmatpush1.msra.mxu0 0.0
    %276 = vmatprep.subr.mxu0 0.0
    %277 = vmatpush1.msra.mxu0 0.0
    %278 = vmatprep.subr.mxu0 0.0
    %279 = vmatpush1.msra.mxu0 0.0
    %280 = vmatprep.subr.mxu0 0.0
    %281 = vmatpush1.msra.mxu0 0.0
    %282 = vmatprep.subr.mxu0 0.0
    %283 = vmatpush1.msra.mxu0 0.0
    %284 = vmatprep.subr.mxu0 0.0
    %285 = vmatpush1.msra.mxu0 0.0
    %286 = vmatprep.subr.mxu0 0.0
    %287 = vmatpush1.msra.mxu0 0.0
    %288 = vmatprep.subr.mxu0 0.0
    %289 = vmatpush1.msra.mxu0 0.0
    %290 = vmatprep.subr.mxu0 0.0
    %291 = vmatpush1.msra.mxu0 0.0
    %292 = vmatprep.subr.mxu0 0.0
    %293 = vmatpush1.msra.mxu0 0.0
    %294 = vmatprep.subr.mxu0 0.0
    %295 = vmatpush1.msra.mxu0 0.0
    %296 = vmatprep.subr.mxu0 0.0
    %297 = vmatpush1.msra.mxu0 0.0
    %298 = vmatprep.subr.mxu0 0.0
    %299 = vmatpush1.msra.mxu0 %v263
    %300 = vmatprep.subr.mxu0 0.0
    %301 = vmatpush2.msra.mxu0 0.0
    %302 = vmatprep.subr.mxu0 0.0
    %303 = vmatpush2.msra.mxu0 0.0
    %304 = vmatprep.subr.mxu0 0.0
    %305 = vmatpush2.msra.mxu0 0.0
    %306 = vmatprep.subr.mxu0 0.0
    %307 = vmatpush2.msra.mxu0 0.0
    %308 = vmatprep.subr.mxu0 0.0
    %309 = vmatpush2.msra.mxu0 0.0
    %310 = vmatprep.subr.mxu0 0.0
    %311 = vmatpush2.msra.mxu0 0.0
    %312 = vmatprep.subr.mxu0 0.0
    %313 = vmatpush2.msra.mxu0 0.0
    %314 = vmatprep.subr.mxu0 0.0
    %315 = vmatpush2.msra.mxu0 0.0
    %316 = vmatprep.subr.mxu0 0.0
    %317 = vmatpush2.msra.mxu0 0.0
    %318 = vmatprep.subr.mxu0 0.0
    %319 = vmatpush2.msra.mxu0 0.0
    %320 = vmatprep.subr.mxu0 0.0
    %321 = vmatpush2.msra.mxu0 0.0
    %322 = vmatprep.subr.mxu0 0.0
    %323 = vmatpush2.msra.mxu0 0.0
    %324 = vmatprep.subr.mxu0 0.0
    %325 = vmatpush2.msra.mxu0 0.0
    %326 = vmatprep.subr.mxu0 0.0
    %327 = vmatpush2.msra.mxu0 0.0
    %328 = vmatprep.subr.mxu0 0.0
    %329 = vmatpush2.msra.mxu0 0.0
    %330 = vmatprep.subr.mxu0 0.0
    %331 = vmatpush2.msra.mxu0 0.0
    %332 = vmatprep.mubr.f32.mxu0 0.0
    %333 = vmatmul.mubr.f32.gmra.mxu0 %v266
    %v334 = vpop.f32.mrf.mxu0
    %v335 = vadd.f32 0.0, %v334
    %v336 = vpop.f32.mrf.mxu0
    %337 = vdwg.mxu0
    %v338 = vrcp.pop %v261
    %v339 = vmul.f32 %v335, %v338
    %340 = vrot.lane.b32.xlu0 %v160, 112
    %v341 = vpop.permute.xlu0 %340
    %342 = vrot.lane.b32.xlu0 %v160, 80
    %v343 = vpop.permute.xlu0 %342
    %v344 = vsel %vm171, %v341, 0
    %v346 = vsel %vm171, %v343, 0
    %348 = vmatprep.subr.mxu0 0.0
    %349 = vmatpush1.xpose.msra.mxu0 0.0
    %350 = vmatprep.subr.mxu0 0.0
    %351 = vmatpush1.xpose.msra.mxu0 0.0
    %352 = vmatprep.subr.mxu0 0.0
    %353 = vmatpush1.xpose.msra.mxu0 0.0
    %354 = vmatprep.subr.mxu0 0.0
    %355 = vmatpush1.xpose.msra.mxu0 0.0
    %356 = vmatprep.subr.mxu0 0.0
    %357 = vmatpush1.xpose.msra.mxu0 0.0
    %358 = vmatprep.subr.mxu0 0.0
    %359 = vmatpush1.xpose.msra.mxu0 0.0
    %360 = vmatprep.subr.mxu0 0.0
    %361 = vmatpush1.xpose.msra.mxu0 0.0
    %362 = vmatprep.subr.mxu0 0.0
    %363 = vmatpush1.xpose.msra.mxu0 0.0
    %364 = vmatprep.subr.mxu0 0.0
    %365 = vmatpush1.xpose.msra.mxu0 0.0
    %366 = vmatprep.subr.mxu0 0.0
    %367 = vmatpush1.xpose.msra.mxu0 0.0
    %368 = vmatprep.subr.mxu0 0.0
    %369 = vmatpush1.xpose.msra.mxu0 0.0
    %370 = vmatprep.subr.mxu0 0.0
    %371 = vmatpush1.xpose.msra.mxu0 0.0
    %372 = vmatprep.subr.mxu0 0.0
    %373 = vmatpush1.xpose.msra.mxu0 0.0
    %374 = vmatprep.subr.mxu0 0.0
    %375 = vmatpush1.xpose.msra.mxu0 0.0
    %376 = vmatprep.subr.mxu0 0.0
    %377 = vmatpush1.xpose.msra.mxu0 0.0
    %378 = vmatprep.subr.mxu0 0.0
    %379 = vmatpush1.xpose.msra.mxu0 %v346
    %380 = vmatprep.subr.mxu0 0.0
    %381 = vmatpush2.xpose.msra.mxu0 0.0
    %382 = vmatprep.subr.mxu0 0.0
    %383 = vmatpush2.xpose.msra.mxu0 0.0
    %384 = vmatprep.subr.mxu0 0.0
    %385 = vmatpush2.xpose.msra.mxu0 0.0
    %386 = vmatprep.subr.mxu0 0.0
    %387 = vmatpush2.xpose.msra.mxu0 0.0
    %388 = vmatprep.subr.mxu0 0.0
    %389 = vmatpush2.xpose.msra.mxu0 0.0
    %390 = vmatprep.subr.mxu0 0.0
    %391 = vmatpush2.xpose.msra.mxu0 0.0
    %392 = vmatprep.subr.mxu0 0.0
    %393 = vmatpush2.xpose.msra.mxu0 0.0
    %394 = vmatprep.subr.mxu0 0.0
    %395 = vmatpush2.xpose.msra.mxu0 0.0
    %396 = vmatprep.subr.mxu0 0.0
    %397 = vmatpush2.xpose.msra.mxu0 0.0
    %398 = vmatprep.subr.mxu0 0.0
    %399 = vmatpush2.xpose.msra.mxu0 0.0
    %400 = vmatprep.subr.mxu0 0.0
    %401 = vmatpush2.xpose.msra.mxu0 0.0
    %402 = vmatprep.subr.mxu0 0.0
    %403 = vmatpush2.xpose.msra.mxu0 0.0
    %404 = vmatprep.subr.mxu0 0.0
    %405 = vmatpush2.xpose.msra.mxu0 0.0
    %406 = vmatprep.subr.mxu0 0.0
    %407 = vmatpush2.xpose.msra.mxu0 0.0
    %408 = vmatprep.subr.mxu0 0.0
    %409 = vmatpush2.xpose.msra.mxu0 0.0
    %410 = vmatprep.subr.mxu0 0.0
    %411 = vmatpush2.xpose.msra.mxu0 0.0
    %412 = vmatprep.mubr.f32.mxu0 0.0
    %413 = vmatmul.mubr.f32.gmra.mxu0 %v344
    %v414 = vpop.f32.mrf.mxu0
    %v415 = vadd.f32 0.0, %v414
    %v416 = vpop.f32.mrf.mxu0
    %417 = vdwg.mxu0
    %v418 = vmul.f32 %v415, 0.25
    %v419 = vadd.f32 %v418, %v250
    %v420 = vsel %vm252, %v419, -inf
    %421 = vmax.xlane.f32.xlu0 %v420
    %v422 = vpop.xlane.xlu0 %421
    %v423 = vsub.f32 %v419, %v422
    %v424 = vmul.f32 %v423, 1.442695
    %v425 = vpow.pop %v424
    %v426 = vsel %vm252, %v425, 0.0
    %427 = vadd.xlane.f32.xlu0 %v426
    %v428 = vpop.xlane.xlu0 %427
    %429 = vrot.lane.b32.xlu0 %v160, 48
    %v430 = vpop.permute.xlu0 %429
    %v433 = vsel %vm252, %v425, 0
    %435 = vmatprep.subr.mxu0 0.0
    %436 = vmatpush1.msra.mxu0 0.0
    %437 = vmatprep.subr.mxu0 0.0
    %438 = vmatpush1.msra.mxu0 0.0
    %439 = vmatprep.subr.mxu0 0.0
    %440 = vmatpush1.msra.mxu0 0.0
    %441 = vmatprep.subr.mxu0 0.0
    %442 = vmatpush1.msra.mxu0 0.0
    %443 = vmatprep.subr.mxu0 0.0
    %444 = vmatpush1.msra.mxu0 0.0
    %445 = vmatprep.subr.mxu0 0.0
    %446 = vmatpush1.msra.mxu0 0.0
    %447 = vmatprep.subr.mxu0 0.0
    %448 = vmatpush1.msra.mxu0 0.0
    %449 = vmatprep.subr.mxu0 0.0
    %450 = vmatpush1.msra.mxu0 0.0
    %451 = vmatprep.subr.mxu0 0.0
    %452 = vmatpush1.msra.mxu0 0.0
    %453 = vmatprep.subr.mxu0 0.0
    %454 = vmatpush1.msra.mxu0 0.0
    %455 = vmatprep.subr.mxu0 0.0
    %456 = vmatpush1.msra.mxu0 0.0
    %457 = vmatprep.subr.mxu0 0.0
    %458 = vmatpush1.msra.mxu0 0.0
    %459 = vmatprep.subr.mxu0 0.0
    %460 = vmatpush1.msra.mxu0 0.0
    %461 = vmatprep.subr.mxu0 0.0
    %462 = vmatpush1.msra.mxu0 0.0
    %463 = vmatprep.subr.mxu0 0.0
    %464 = vmatpush1.msra.mxu0 0.0
    %465 = vmatprep.subr.mxu0 0.0
    %466 = vmatpush1.msra.mxu0 %v430
    %467 = vmatprep.subr.mxu0 0.0
    %468 = vmatpush2.msra.mxu0 0.0
    %469 = vmatprep.subr.mxu0 0.0
    %470 = vmatpush2.msra.mxu0 0.0
    %471 = vmatprep.subr.mxu0 0.0
    %472 = vmatpush2.msra.mxu0 0.0
    %473 = vmatprep.subr.mxu0 0.0
    %474 = vmatpush2.msra.mxu0 0.0
    %475 = vmatprep.subr.mxu0 0.0
    %476 = vmatpush2.msra.mxu0 0.0
    %477 = vmatprep.subr.mxu0 0.0
    %478 = vmatpush2.msra.mxu0 0.0
    %479 = vmatprep.subr.mxu0 0.0
    %480 = vmatpush2.msra.mxu0 0.0
    %481 = vmatprep.subr.mxu0 0.0
    %482 = vmatpush2.msra.mxu0 0.0
    %483 = vmatprep.subr.mxu0 0.0
    %484 = vmatpush2.msra.mxu0 0.0
    %485 = vmatprep.subr.mxu0 0.0
    %486 = vmatpush2.msra.mxu0 0.0
    %487 = vmatprep.subr.mxu0 0.0
    %488 = vmatpush2.msra.mxu0 0.0
    %489 = vmatprep.subr.mxu0 0.0
    %490 = vmatpush2.msra.mxu0 0.0
    %491 = vmatprep.subr.mxu0 0.0
    %492 = vmatpush2.msra.mxu0 0.0
    %493 = vmatprep.subr.mxu0 0.0
    %494 = vmatpush2.msra.mxu0 0.0
    %495 = vmatprep.subr.mxu0 0.0
    %496 = vmatpush2.msra.mxu0 0.0
    %497 = vmatprep.subr.mxu0 0.0
    %498 = vmatpush2.msra.mxu0 0.0
    %499 = vmatprep.mubr.f32.mxu0 0.0
    %500 = vmatmul.mubr.f32.gmra.mxu0 %v433
    %v501 = vpop.f32.mrf.mxu0
    %v502 = vadd.f32 0.0, %v501
    %v503 = vpop.f32.mrf.mxu0
    %504 = vdwg.mxu0
    %v505 = vrcp.pop %v428
    %v506 = vmul.f32 %v502, %v505
    %508 = vrot.lane.b32.xlu0 %v506, 16
    %v509 = vpop.permute.xlu0 %508
    %v511 = vsel %vm171, %v339, %v509
    %513 = vrot.lane.b32.xlu0 %v165, 96
    %v514 = vpop.permute.xlu0 %513
    %v515 = vsel %vm171, %v165, 0
    %v517 = vsel %vm171, %v514, 0
    %519 = vmatprep.subr.mxu0 0.0
    %520 = vmatpush1.xpose.msra.mxu0 0.0
    %521 = vmatprep.subr.mxu0 0.0
    %522 = vmatpush1.xpose.msra.mxu0 0.0
    %523 = vmatprep.subr.mxu0 0.0
    %524 = vmatpush1.xpose.msra.mxu0 0.0
    %525 = vmatprep.subr.mxu0 0.0
    %526 = vmatpush1.xpose.msra.mxu0 0.0
    %527 = vmatprep.subr.mxu0 0.0
    %528 = vmatpush1.xpose.msra.mxu0 0.0
    %529 = vmatprep.subr.mxu0 0.0
    %530 = vmatpush1.xpose.msra.mxu0 0.0
    %531 = vmatprep.subr.mxu0 0.0
    %532 = vmatpush1.xpose.msra.mxu0 0.0
    %533 = vmatprep.subr.mxu0 0.0
    %534 = vmatpush1.xpose.msra.mxu0 0.0
    %535 = vmatprep.subr.mxu0 0.0
    %536 = vmatpush1.xpose.msra.mxu0 0.0
    %537 = vmatprep.subr.mxu0 0.0
    %538 = vmatpush1.xpose.msra.mxu0 0.0
    %539 = vmatprep.subr.mxu0 0.0
    %540 = vmatpush1.xpose.msra.mxu0 0.0
    %541 = vmatprep.subr.mxu0 0.0
    %542 = vmatpush1.xpose.msra.mxu0 0.0
    %543 = vmatprep.subr.mxu0 0.0
    %544 = vmatpush1.xpose.msra.mxu0 0.0
    %545 = vmatprep.subr.mxu0 0.0
    %546 = vmatpush1.xpose.msra.mxu0 0.0
    %547 = vmatprep.subr.mxu0 0.0
    %548 = vmatpush1.xpose.msra.mxu0 0.0
    %549 = vmatprep.subr.mxu0 0.0
    %550 = vmatpush1.xpose.msra.mxu0 %v517
    %551 = vmatprep.subr.mxu0 0.0
    %552 = vmatpush2.xpose.msra.mxu0 0.0
    %553 = vmatprep.subr.mxu0 0.0
    %554 = vmatpush2.xpose.msra.mxu0 0.0
    %555 = vmatprep.subr.mxu0 0.0
    %556 = vmatpush2.xpose.msra.mxu0 0.0
    %557 = vmatprep.subr.mxu0 0.0
    %558 = vmatpush2.xpose.msra.mxu0 0.0
    %559 = vmatprep.subr.mxu0 0.0
    %560 = vmatpush2.xpose.msra.mxu0 0.0
    %561 = vmatprep.subr.mxu0 0.0
    %562 = vmatpush2.xpose.msra.mxu0 0.0
    %563 = vmatprep.subr.mxu0 0.0
    %564 = vmatpush2.xpose.msra.mxu0 0.0
    %565 = vmatprep.subr.mxu0 0.0
    %566 = vmatpush2.xpose.msra.mxu0 0.0
    %567 = vmatprep.subr.mxu0 0.0
    %568 = vmatpush2.xpose.msra.mxu0 0.0
    %569 = vmatprep.subr.mxu0 0.0
    %570 = vmatpush2.xpose.msra.mxu0 0.0
    %571 = vmatprep.subr.mxu0 0.0
    %572 = vmatpush2.xpose.msra.mxu0 0.0
    %573 = vmatprep.subr.mxu0 0.0
    %574 = vmatpush2.xpose.msra.mxu0 0.0
    %575 = vmatprep.subr.mxu0 0.0
    %576 = vmatpush2.xpose.msra.mxu0 0.0
    %577 = vmatprep.subr.mxu0 0.0
    %578 = vmatpush2.xpose.msra.mxu0 0.0
    %579 = vmatprep.subr.mxu0 0.0
    %580 = vmatpush2.xpose.msra.mxu0 0.0
    %581 = vmatprep.subr.mxu0 0.0
    %582 = vmatpush2.xpose.msra.mxu0 0.0
    %583 = vmatprep.mubr.f32.mxu0 0.0
    %584 = vmatmul.mubr.f32.gmra.mxu0 %v515
    %v585 = vpop.f32.mrf.mxu0
    %v586 = vadd.f32 0.0, %v585
    %v587 = vpop.f32.mrf.mxu0
    %588 = vdwg.mxu0
    %v589 = vmul.f32 %v586, 0.25
    %v590 = vlaneseq
    %v591 = vshrl.u32 %v590, 7
    %v592 = vsub.s32 1, %v591
    %v593 = vrot.slane %v78, %v592
    %v594 = vadd.f32 %v589, %v593
    %v595 = vsel %vm252, %v594, -inf
    %596 = vmax.xlane.f32.xlu0 %v595
    %v597 = vpop.xlane.xlu0 %596
    %v598 = vsub.f32 %v594, %v597
    %v599 = vmul.f32 %v598, 1.442695
    %v600 = vpow.pop %v599
    %v601 = vsel %vm252, %v600, 0.0
    %602 = vadd.xlane.f32.xlu0 %v601
    %v603 = vpop.xlane.xlu0 %602
    %604 = vrot.lane.b32.xlu0 %v165, 64
    %v605 = vpop.permute.xlu0 %604
    %v608 = vsel %vm252, %v600, 0
    %610 = vmatprep.subr.mxu0 0.0
    %611 = vmatpush1.msra.mxu0 0.0
    %612 = vmatprep.subr.mxu0 0.0
    %613 = vmatpush1.msra.mxu0 0.0
    %614 = vmatprep.subr.mxu0 0.0
    %615 = vmatpush1.msra.mxu0 0.0
    %616 = vmatprep.subr.mxu0 0.0
    %617 = vmatpush1.msra.mxu0 0.0
    %618 = vmatprep.subr.mxu0 0.0
    %619 = vmatpush1.msra.mxu0 0.0
    %620 = vmatprep.subr.mxu0 0.0
    %621 = vmatpush1.msra.mxu0 0.0
    %622 = vmatprep.subr.mxu0 0.0
    %623 = vmatpush1.msra.mxu0 0.0
    %624 = vmatprep.subr.mxu0 0.0
    %625 = vmatpush1.msra.mxu0 0.0
    %626 = vmatprep.subr.mxu0 0.0
    %627 = vmatpush1.msra.mxu0 0.0
    %628 = vmatprep.subr.mxu0 0.0
    %629 = vmatpush1.msra.mxu0 0.0
    %630 = vmatprep.subr.mxu0 0.0
    %631 = vmatpush1.msra.mxu0 0.0
    %632 = vmatprep.subr.mxu0 0.0
    %633 = vmatpush1.msra.mxu0 0.0
    %634 = vmatprep.subr.mxu0 0.0
    %635 = vmatpush1.msra.mxu0 0.0
    %636 = vmatprep.subr.mxu0 0.0
    %637 = vmatpush1.msra.mxu0 0.0
    %638 = vmatprep.subr.mxu0 0.0
    %639 = vmatpush1.msra.mxu0 0.0
    %640 = vmatprep.subr.mxu0 0.0
    %641 = vmatpush1.msra.mxu0 %v605
    %642 = vmatprep.subr.mxu0 0.0
    %643 = vmatpush2.msra.mxu0 0.0
    %644 = vmatprep.subr.mxu0 0.0
    %645 = vmatpush2.msra.mxu0 0.0
    %646 = vmatprep.subr.mxu0 0.0
    %647 = vmatpush2.msra.mxu0 0.0
    %648 = vmatprep.subr.mxu0 0.0
    %649 = vmatpush2.msra.mxu0 0.0
    %650 = vmatprep.subr.mxu0 0.0
    %651 = vmatpush2.msra.mxu0 0.0
    %652 = vmatprep.subr.mxu0 0.0
    %653 = vmatpush2.msra.mxu0 0.0
    %654 = vmatprep.subr.mxu0 0.0
    %655 = vmatpush2.msra.mxu0 0.0
    %656 = vmatprep.subr.mxu0 0.0
    %657 = vmatpush2.msra.mxu0 0.0
    %658 = vmatprep.subr.mxu0 0.0
    %659 = vmatpush2.msra.mxu0 0.0
    %660 = vmatprep.subr.mxu0 0.0
    %661 = vmatpush2.msra.mxu0 0.0
    %662 = vmatprep.subr.mxu0 0.0
    %663 = vmatpush2.msra.mxu0 0.0
    %664 = vmatprep.subr.mxu0 0.0
    %665 = vmatpush2.msra.mxu0 0.0
    %666 = vmatprep.subr.mxu0 0.0
    %667 = vmatpush2.msra.mxu0 0.0
    %668 = vmatprep.subr.mxu0 0.0
    %669 = vmatpush2.msra.mxu0 0.0
    %670 = vmatprep.subr.mxu0 0.0
    %671 = vmatpush2.msra.mxu0 0.0
    %672 = vmatprep.subr.mxu0 0.0
    %673 = vmatpush2.msra.mxu0 0.0
    %674 = vmatprep.mubr.f32.mxu0 0.0
    %675 = vmatmul.mubr.f32.gmra.mxu0 %v608
    %v676 = vpop.f32.mrf.mxu0
    %v677 = vadd.f32 0.0, %v676
    %v678 = vpop.f32.mrf.mxu0
    %679 = vdwg.mxu0
    %v680 = vrcp.pop %v603
    %v681 = vmul.f32 %v677, %v680
    %682 = vrot.lane.b32.xlu0 %v165, 112
    %v683 = vpop.permute.xlu0 %682
    %684 = vrot.lane.b32.xlu0 %v165, 80
    %v685 = vpop.permute.xlu0 %684
    %v686 = vsel %vm171, %v683, 0
    %v688 = vsel %vm171, %v685, 0
    %690 = vmatprep.subr.mxu0 0.0
    %691 = vmatpush1.xpose.msra.mxu0 0.0
    %692 = vmatprep.subr.mxu0 0.0
    %693 = vmatpush1.xpose.msra.mxu0 0.0
    %694 = vmatprep.subr.mxu0 0.0
    %695 = vmatpush1.xpose.msra.mxu0 0.0
    %696 = vmatprep.subr.mxu0 0.0
    %697 = vmatpush1.xpose.msra.mxu0 0.0
    %698 = vmatprep.subr.mxu0 0.0
    %699 = vmatpush1.xpose.msra.mxu0 0.0
    %700 = vmatprep.subr.mxu0 0.0
    %701 = vmatpush1.xpose.msra.mxu0 0.0
    %702 = vmatprep.subr.mxu0 0.0
    %703 = vmatpush1.xpose.msra.mxu0 0.0
    %704 = vmatprep.subr.mxu0 0.0
    %705 = vmatpush1.xpose.msra.mxu0 0.0
    %706 = vmatprep.subr.mxu0 0.0
    %707 = vmatpush1.xpose.msra.mxu0 0.0
    %708 = vmatprep.subr.mxu0 0.0
    %709 = vmatpush1.xpose.msra.mxu0 0.0
    %710 = vmatprep.subr.mxu0 0.0
    %711 = vmatpush1.xpose.msra.mxu0 0.0
    %712 = vmatprep.subr.mxu0 0.0
    %713 = vmatpush1.xpose.msra.mxu0 0.0
    %714 = vmatprep.subr.mxu0 0.0
    %715 = vmatpush1.xpose.msra.mxu0 0.0
    %716 = vmatprep.subr.mxu0 0.0
    %717 = vmatpush1.xpose.msra.mxu0 0.0
    %718 = vmatprep.subr.mxu0 0.0
    %719 = vmatpush1.xpose.msra.mxu0 0.0
    %720 = vmatprep.subr.mxu0 0.0
    %721 = vmatpush1.xpose.msra.mxu0 %v688
    %722 = vmatprep.subr.mxu0 0.0
    %723 = vmatpush2.xpose.msra.mxu0 0.0
    %724 = vmatprep.subr.mxu0 0.0
    %725 = vmatpush2.xpose.msra.mxu0 0.0
    %726 = vmatprep.subr.mxu0 0.0
    %727 = vmatpush2.xpose.msra.mxu0 0.0
    %728 = vmatprep.subr.mxu0 0.0
    %729 = vmatpush2.xpose.msra.mxu0 0.0
    %730 = vmatprep.subr.mxu0 0.0
    %731 = vmatpush2.xpose.msra.mxu0 0.0
    %732 = vmatprep.subr.mxu0 0.0
    %733 = vmatpush2.xpose.msra.mxu0 0.0
    %734 = vmatprep.subr.mxu0 0.0
    %735 = vmatpush2.xpose.msra.mxu0 0.0
    %736 = vmatprep.subr.mxu0 0.0
    %737 = vmatpush2.xpose.msra.mxu0 0.0
    %738 = vmatprep.subr.mxu0 0.0
    %739 = vmatpush2.xpose.msra.mxu0 0.0
    %740 = vmatprep.subr.mxu0 0.0
    %741 = vmatpush2.xpose.msra.mxu0 0.0
    %742 = vmatprep.subr.mxu0 0.0
    %743 = vmatpush2.xpose.msra.mxu0 0.0
    %744 = vmatprep.subr.mxu0 0.0
    %745 = vmatpush2.xpose.msra.mxu0 0.0
    %746 = vmatprep.subr.mxu0 0.0
    %747 = vmatpush2.xpose.msra.mxu0 0.0
    %748 = vmatprep.subr.mxu0 0.0
    %749 = vmatpush2.xpose.msra.mxu0 0.0
    %750 = vmatprep.subr.mxu0 0.0
    %751 = vmatpush2.xpose.msra.mxu0 0.0
    %752 = vmatprep.subr.mxu0 0.0
    %753 = vmatpush2.xpose.msra.mxu0 0.0
    %754 = vmatprep.mubr.f32.mxu0 0.0
    %755 = vmatmul.mubr.f32.gmra.mxu0 %v686
    %v756 = vpop.f32.mrf.mxu0
    %v757 = vadd.f32 0.0, %v756
    %v758 = vpop.f32.mrf.mxu0
    %759 = vdwg.mxu0
    %v760 = vmul.f32 %v757, 0.25
    %v761 = vadd.f32 %v760, %v593
    %v762 = vsel %vm252, %v761, -inf
    %763 = vmax.xlane.f32.xlu0 %v762
    %v764 = vpop.xlane.xlu0 %763
    %v765 = vsub.f32 %v761, %v764
    %v766 = vmul.f32 %v765, 1.442695
    %v767 = vpow.pop %v766
    %v768 = vsel %vm252, %v767, 0.0
    %769 = vadd.xlane.f32.xlu0 %v768
    %v770 = vpop.xlane.xlu0 %769
    %771 = vrot.lane.b32.xlu0 %v165, 48
    %v772 = vpop.permute.xlu0 %771
    %v775 = vsel %vm252, %v767, 0
    %777 = vmatprep.subr.mxu0 0.0
    %778 = vmatpush1.msra.mxu0 0.0
    %779 = vmatprep.subr.mxu0 0.0
    %780 = vmatpush1.msra.mxu0 0.0
    %781 = vmatprep.subr.mxu0 0.0
    %782 = vmatpush1.msra.mxu0 0.0
    %783 = vmatprep.subr.mxu0 0.0
    %784 = vmatpush1.msra.mxu0 0.0
    %785 = vmatprep.subr.mxu0 0.0
    %786 = vmatpush1.msra.mxu0 0.0
    %787 = vmatprep.subr.mxu0 0.0
    %788 = vmatpush1.msra.mxu0 0.0
    %789 = vmatprep.subr.mxu0 0.0
    %790 = vmatpush1.msra.mxu0 0.0
    %791 = vmatprep.subr.mxu0 0.0
    %792 = vmatpush1.msra.mxu0 0.0
    %793 = vmatprep.subr.mxu0 0.0
    %794 = vmatpush1.msra.mxu0 0.0
    %795 = vmatprep.subr.mxu0 0.0
    %796 = vmatpush1.msra.mxu0 0.0
    %797 = vmatprep.subr.mxu0 0.0
    %798 = vmatpush1.msra.mxu0 0.0
    %799 = vmatprep.subr.mxu0 0.0
    %800 = vmatpush1.msra.mxu0 0.0
    %801 = vmatprep.subr.mxu0 0.0
    %802 = vmatpush1.msra.mxu0 0.0
    %803 = vmatprep.subr.mxu0 0.0
    %804 = vmatpush1.msra.mxu0 0.0
    %805 = vmatprep.subr.mxu0 0.0
    %806 = vmatpush1.msra.mxu0 0.0
    %807 = vmatprep.subr.mxu0 0.0
    %808 = vmatpush1.msra.mxu0 %v772
    %809 = vmatprep.subr.mxu0 0.0
    %810 = vmatpush2.msra.mxu0 0.0
    %811 = vmatprep.subr.mxu0 0.0
    %812 = vmatpush2.msra.mxu0 0.0
    %813 = vmatprep.subr.mxu0 0.0
    %814 = vmatpush2.msra.mxu0 0.0
    %815 = vmatprep.subr.mxu0 0.0
    %816 = vmatpush2.msra.mxu0 0.0
    %817 = vmatprep.subr.mxu0 0.0
    %818 = vmatpush2.msra.mxu0 0.0
    %819 = vmatprep.subr.mxu0 0.0
    %820 = vmatpush2.msra.mxu0 0.0
    %821 = vmatprep.subr.mxu0 0.0
    %822 = vmatpush2.msra.mxu0 0.0
    %823 = vmatprep.subr.mxu0 0.0
    %824 = vmatpush2.msra.mxu0 0.0
    %825 = vmatprep.subr.mxu0 0.0
    %826 = vmatpush2.msra.mxu0 0.0
    %827 = vmatprep.subr.mxu0 0.0
    %828 = vmatpush2.msra.mxu0 0.0
    %829 = vmatprep.subr.mxu0 0.0
    %830 = vmatpush2.msra.mxu0 0.0
    %831 = vmatprep.subr.mxu0 0.0
    %832 = vmatpush2.msra.mxu0 0.0
    %833 = vmatprep.subr.mxu0 0.0
    %834 = vmatpush2.msra.mxu0 0.0
    %835 = vmatprep.subr.mxu0 0.0
    %836 = vmatpush2.msra.mxu0 0.0
    %837 = vmatprep.subr.mxu0 0.0
    %838 = vmatpush2.msra.mxu0 0.0
    %839 = vmatprep.subr.mxu0 0.0
    %840 = vmatpush2.msra.mxu0 0.0
    %841 = vmatprep.mubr.f32.mxu0 0.0
    %842 = vmatmul.mubr.f32.gmra.mxu0 %v775
    %v843 = vpop.f32.mrf.mxu0
    %v844 = vadd.f32 0.0, %v843
    %v845 = vpop.f32.mrf.mxu0
    %846 = vdwg.mxu0
    %v847 = vrcp.pop %v770
    %v848 = vmul.f32 %v844, %v847
    %850 = vrot.lane.b32.xlu0 %v848, 16
    %v851 = vpop.permute.xlu0 %850
    %v853 = vsel %vm171, %v681, %v851
    %v854 = vld [vmem:[%s4] sm:$0xff]
    %v855 = vld [vmem:[%s4 + $0x8] sm:$0xff]
    %v856 = vld [vmem:[%s4 + $0x10] sm:$0xff]
    %v857 = vld [vmem:[%s4 + $0x18] sm:$0xff]
    %v858 = vlaneseq
    %v859 = vshrl.u32 %v858, 7
    %v860 = vsub.s32 5, %v859
    %v861 = vrot.slane %v33, %v860
    %v863 = vsel %vm38, %v511, 0
    %v866 = vsel %vm38, %v853, 0
    %868 = vmatprep.subr.mxu0 0.0
    %869 = vmatpush1.msra.mxu0 0.0
    %870 = vmatprep.subr.mxu0 0.0
    %871 = vmatpush1.msra.mxu0 0.0
    %872 = vmatprep.subr.mxu0 0.0
    %873 = vmatpush1.msra.mxu0 0.0
    %874 = vmatprep.subr.mxu0 0.0
    %875 = vmatpush1.msra.mxu0 0.0
    %876 = vmatprep.subr.mxu0 0.0
    %877 = vmatpush1.msra.mxu0 0.0
    %878 = vmatprep.subr.mxu0 0.0
    %879 = vmatpush1.msra.mxu0 0.0
    %880 = vmatprep.subr.mxu0 0.0
    %881 = vmatpush1.msra.mxu0 0.0
    %882 = vmatprep.subr.mxu0 0.0
    %883 = vmatpush1.msra.mxu0 0.0
    %884 = vmatprep.subr.mxu0 0.0
    %885 = vmatpush1.msra.mxu0 0.0
    %886 = vmatprep.subr.mxu0 0.0
    %887 = vmatpush1.msra.mxu0 0.0
    %888 = vmatprep.subr.mxu0 0.0
    %889 = vmatpush1.msra.mxu0 0.0
    %890 = vmatprep.subr.mxu0 0.0
    %891 = vmatpush1.msra.mxu0 0.0
    %892 = vmatprep.subr.mxu0 0.0
    %893 = vmatpush1.msra.mxu0 %v857
    %894 = vmatprep.subr.mxu0 0.0
    %895 = vmatpush1.msra.mxu0 %v856
    %896 = vmatprep.subr.mxu0 0.0
    %897 = vmatpush1.msra.mxu0 %v855
    %898 = vmatprep.subr.mxu0 0.0
    %899 = vmatpush1.msra.mxu0 %v854
    %900 = vmatprep.subr.mxu0 0.0
    %901 = vmatpush2.msra.mxu0 0.0
    %902 = vmatprep.subr.mxu0 0.0
    %903 = vmatpush2.msra.mxu0 0.0
    %904 = vmatprep.subr.mxu0 0.0
    %905 = vmatpush2.msra.mxu0 0.0
    %906 = vmatprep.subr.mxu0 0.0
    %907 = vmatpush2.msra.mxu0 0.0
    %908 = vmatprep.subr.mxu0 0.0
    %909 = vmatpush2.msra.mxu0 0.0
    %910 = vmatprep.subr.mxu0 0.0
    %911 = vmatpush2.msra.mxu0 0.0
    %912 = vmatprep.subr.mxu0 0.0
    %913 = vmatpush2.msra.mxu0 0.0
    %914 = vmatprep.subr.mxu0 0.0
    %915 = vmatpush2.msra.mxu0 0.0
    %916 = vmatprep.subr.mxu0 0.0
    %917 = vmatpush2.msra.mxu0 0.0
    %918 = vmatprep.subr.mxu0 0.0
    %919 = vmatpush2.msra.mxu0 0.0
    %920 = vmatprep.subr.mxu0 0.0
    %921 = vmatpush2.msra.mxu0 0.0
    %922 = vmatprep.subr.mxu0 0.0
    %923 = vmatpush2.msra.mxu0 0.0
    %924 = vmatprep.subr.mxu0 0.0
    %925 = vmatpush2.msra.mxu0 0.0
    %926 = vmatprep.subr.mxu0 0.0
    %927 = vmatpush2.msra.mxu0 0.0
    %928 = vmatprep.subr.mxu0 0.0
    %929 = vmatpush2.msra.mxu0 0.0
    %930 = vmatprep.subr.mxu0 0.0
    %931 = vmatpush2.msra.mxu0 0.0
    %932 = vmatprep.mubr.f32.mxu0 0.0
    %933 = vmatmul.mubr.f32.gmra.mxu0 %v863
    %v934 = vpop.f32.mrf.mxu0
    %v935 = vadd.f32 %v861, %v934
    %v936 = vpop.f32.mrf.mxu0
    %937 = vmatprep.mubr.f32.mxu0 0.0
    %938 = vmatmul.mubr.f32.gmra.mxu0 %v866
    %v939 = vpop.f32.mrf.mxu0
    %v940 = vadd.f32 %v861, %v939
    %v941 = vpop.f32.mrf.mxu0
    %942 = vdwg.mxu0
    %v943 = vadd.f32 %v76, %v935
    %v944 = vadd.f32 %v77, %v940
    %v945 = vsel %vm38, %v943, 0.0
    %946 = vadd.xlane.f32.xlu0 %v945
    %v947 = vpop.xlane.xlu0 %946
    %v948 = vsel %vm38, %v944, 0.0
    %949 = vadd.xlane.f32.xlu0 %v948
    %v950 = vpop.xlane.xlu0 %949
    %v951 = vmul.f32 %v947, %v45
    %v952 = vmul.f32 %v950, %v45
    %v953 = vsub.f32 %v943, %v951
    %v954 = vsub.f32 %v944, %v952
    %v955 = vmul.f32 %v953, %v953
    %v956 = vmul.f32 %v954, %v954
    %v957 = vsel %vm38, %v955, 0.0
    %958 = vadd.xlane.f32.xlu0 %v957
    %v959 = vpop.xlane.xlu0 %958
    %v960 = vsel %vm38, %v956, 0.0
    %961 = vadd.xlane.f32.xlu0 %v960
    %v962 = vpop.xlane.xlu0 %961
    %v963 = vmul.f32 %v959, %v45
    %v964 = vmul.f32 %v962, %v45
    %v965 = vadd.f32 %v963, 1e-12
    %v966 = vadd.f32 %v964, 1e-12
    %v967 = vrsqrt.pop %v965
    %v968 = vrsqrt.pop %v966
    %v969 = vmul.f32 %v953, %v967
    %v970 = vmul.f32 %v954, %v968
    %v971 = vlaneseq
    %v972 = vshrl.u32 %v971, 7
    %v973 = vsub.s32 6, %v972
    %v974 = vrot.slane %v33, %v973
    %v975 = vmul.f32 %v969, %v974
    %v976 = vmul.f32 %v970, %v974
    %v977 = vlaneseq
    %v978 = vshrl.u32 %v977, 7
    %v979 = vsub.s32 7, %v978
    %v980 = vrot.slane %v33, %v979
    %v981 = vadd.f32 %v975, %v980
    %v982 = vadd.f32 %v976, %v980
    %v983 = vld [vmem:[%s5] sm:$0xff]
    %v984 = vld [vmem:[%s5 + $0x8] sm:$0xff]
    %v985 = vld [vmem:[%s5 + $0x10] sm:$0xff]
    %v986 = vld [vmem:[%s5 + $0x18] sm:$0xff]
    %v987 = vlaneseq
    %v988 = vshrl.u32 %v987, 7
    %v989 = vsub.s32 0, %v988
    %v990 = vrot.slane %v34, %v989
    %v992 = vsel %vm38, %v981, 0
    %v995 = vsel %vm38, %v982, 0
    %997 = vmatprep.subr.mxu0 0.0
    %998 = vmatpush1.msra.mxu0 0.0
    %999 = vmatprep.subr.mxu0 0.0
    %1000 = vmatpush1.msra.mxu0 0.0
    %1001 = vmatprep.subr.mxu0 0.0
    %1002 = vmatpush1.msra.mxu0 0.0
    %1003 = vmatprep.subr.mxu0 0.0
    %1004 = vmatpush1.msra.mxu0 0.0
    %1005 = vmatprep.subr.mxu0 0.0
    %1006 = vmatpush1.msra.mxu0 0.0
    %1007 = vmatprep.subr.mxu0 0.0
    %1008 = vmatpush1.msra.mxu0 0.0
    %1009 = vmatprep.subr.mxu0 0.0
    %1010 = vmatpush1.msra.mxu0 0.0
    %1011 = vmatprep.subr.mxu0 0.0
    %1012 = vmatpush1.msra.mxu0 0.0
    %1013 = vmatprep.subr.mxu0 0.0
    %1014 = vmatpush1.msra.mxu0 0.0
    %1015 = vmatprep.subr.mxu0 0.0
    %1016 = vmatpush1.msra.mxu0 0.0
    %1017 = vmatprep.subr.mxu0 0.0
    %1018 = vmatpush1.msra.mxu0 0.0
    %1019 = vmatprep.subr.mxu0 0.0
    %1020 = vmatpush1.msra.mxu0 0.0
    %1021 = vmatprep.subr.mxu0 0.0
    %1022 = vmatpush1.msra.mxu0 %v986
    %1023 = vmatprep.subr.mxu0 0.0
    %1024 = vmatpush1.msra.mxu0 %v985
    %1025 = vmatprep.subr.mxu0 0.0
    %1026 = vmatpush1.msra.mxu0 %v984
    %1027 = vmatprep.subr.mxu0 0.0
    %1028 = vmatpush1.msra.mxu0 %v983
    %1029 = vmatprep.subr.mxu0 0.0
    %1030 = vmatpush2.msra.mxu0 0.0
    %1031 = vmatprep.subr.mxu0 0.0
    %1032 = vmatpush2.msra.mxu0 0.0
    %1033 = vmatprep.subr.mxu0 0.0
    %1034 = vmatpush2.msra.mxu0 0.0
    %1035 = vmatprep.subr.mxu0 0.0
    %1036 = vmatpush2.msra.mxu0 0.0
    %1037 = vmatprep.subr.mxu0 0.0
    %1038 = vmatpush2.msra.mxu0 0.0
    %1039 = vmatprep.subr.mxu0 0.0
    %1040 = vmatpush2.msra.mxu0 0.0
    %1041 = vmatprep.subr.mxu0 0.0
    %1042 = vmatpush2.msra.mxu0 0.0
    %1043 = vmatprep.subr.mxu0 0.0
    %1044 = vmatpush2.msra.mxu0 0.0
    %1045 = vmatprep.subr.mxu0 0.0
    %1046 = vmatpush2.msra.mxu0 0.0
    %1047 = vmatprep.subr.mxu0 0.0
    %1048 = vmatpush2.msra.mxu0 0.0
    %1049 = vmatprep.subr.mxu0 0.0
    %1050 = vmatpush2.msra.mxu0 0.0
    %1051 = vmatprep.subr.mxu0 0.0
    %1052 = vmatpush2.msra.mxu0 0.0
    %1053 = vmatprep.subr.mxu0 0.0
    %1054 = vmatpush2.msra.mxu0 0.0
    %1055 = vmatprep.subr.mxu0 0.0
    %1056 = vmatpush2.msra.mxu0 0.0
    %1057 = vmatprep.subr.mxu0 0.0
    %1058 = vmatpush2.msra.mxu0 0.0
    %1059 = vmatprep.subr.mxu0 0.0
    %1060 = vmatpush2.msra.mxu0 0.0
    %1061 = vmatprep.mubr.f32.mxu0 0.0
    %1062 = vmatmul.mubr.f32.gmra.mxu0 %v992
    %v1063 = vpop.f32.mrf.mxu0
    %v1064 = vadd.f32 %v990, %v1063
    %v1065 = vpop.f32.mrf.mxu0
    %1066 = vmatprep.mubr.f32.mxu0 0.0
    %1067 = vmatmul.mubr.f32.gmra.mxu0 %v995
    %v1068 = vpop.f32.mrf.mxu0
    %v1069 = vadd.f32 %v990, %v1068
    %v1070 = vpop.f32.mrf.mxu0
    %1071 = vdwg.mxu0
    %v1072 = vmul.f32 %v1064, 0.5
    %v1073 = vmul.f32 %v1069, 0.5
    %v1074 = vmul.f32 %v1064, 0.044715
    %v1075 = vmul.f32 %v1069, 0.044715
    %v1076 = vmul.f32 %v1074, %v1064
    %v1077 = vmul.f32 %v1075, %v1069
    %v1078 = vmul.f32 %v1076, %v1064
    %v1079 = vmul.f32 %v1077, %v1069
    %v1080 = vadd.f32 %v1064, %v1078
    %v1081 = vadd.f32 %v1069, %v1079
    %v1082 = vmul.f32 %v1080, 0.7978846
    %v1083 = vmul.f32 %v1081, 0.7978846
    %v1084 = vtanh.pop %v1082
    %v1085 = vtanh.pop %v1083
    %v1086 = vadd.f32 %v1084, 1.0
    %v1087 = vadd.f32 %v1085, 1.0
    %v1088 = vmul.f32 %v1072, %v1086
    %v1089 = vmul.f32 %v1073, %v1087
    %v1090 = vld [vmem:[%s6] sm:$0xff]
    %v1091 = vld [vmem:[%s6 + $0x8] sm:$0xff]
    %v1092 = vld [vmem:[%s6 + $0x10] sm:$0xff]
    %v1093 = vld [vmem:[%s6 + $0x18] sm:$0xff]
    %v1094 = vld [vmem:[%s6 + $0x20] sm:$0xff]
    %v1095 = vld [vmem:[%s6 + $0x28] sm:$0xff]
    %v1096 = vld [vmem:[%s6 + $0x30] sm:$0xff]
    %v1097 = vld [vmem:[%s6 + $0x38] sm:$0xff]
    %v1098 = vlaneseq
    %v1099 = vshrl.u32 %v1098, 7
    %v1100 = vsub.s32 1, %v1099
    %v1101 = vrot.slane %v34, %v1100
    %vm1102 = vcmask 523264
    %v1104 = vsel %vm1102, %v1088, 0
    %v1107 = vsel %vm1102, %v1089, 0
    %1109 = vmatprep.subr.mxu0 0.0
    %1110 = vmatpush1.msra.mxu0 0.0
    %1111 = vmatprep.subr.mxu0 0.0
    %1112 = vmatpush1.msra.mxu0 0.0
    %1113 = vmatprep.subr.mxu0 0.0
    %1114 = vmatpush1.msra.mxu0 0.0
    %1115 = vmatprep.subr.mxu0 0.0
    %1116 = vmatpush1.msra.mxu0 0.0
    %1117 = vmatprep.subr.mxu0 0.0
    %1118 = vmatpush1.msra.mxu0 0.0
    %1119 = vmatprep.subr.mxu0 0.0
    %1120 = vmatpush1.msra.mxu0 0.0
    %1121 = vmatprep.subr.mxu0 0.0
    %1122 = vmatpush1.msra.mxu0 0.0
    %1123 = vmatprep.subr.mxu0 0.0
    %1124 = vmatpush1.msra.mxu0 0.0
    %1125 = vmatprep.subr.mxu0 0.0
    %1126 = vmatpush1.msra.mxu0 %v1097
    %1127 = vmatprep.subr.mxu0 0.0
    %1128 = vmatpush1.msra.mxu0 %v1096
    %1129 = vmatprep.subr.mxu0 0.0
    %1130 = vmatpush1.msra.mxu0 %v1095
    %1131 = vmatprep.subr.mxu0 0.0
    %1132 = vmatpush1.msra.mxu0 %v1094
    %1133 = vmatprep.subr.mxu0 0.0
    %1134 = vmatpush1.msra.mxu0 %v1093
    %1135 = vmatprep.subr.mxu0 0.0
    %1136 = vmatpush1.msra.mxu0 %v1092
    %1137 = vmatprep.subr.mxu0 0.0
    %1138 = vmatpush1.msra.mxu0 %v1091
    %1139 = vmatprep.subr.mxu0 0.0
    %1140 = vmatpush1.msra.mxu0 %v1090
    %1141 = vmatprep.subr.mxu0 0.0
    %1142 = vmatpush2.msra.mxu0 0.0
    %1143 = vmatprep.subr.mxu0 0.0
    %1144 = vmatpush2.msra.mxu0 0.0
    %1145 = vmatprep.subr.mxu0 0.0
    %1146 = vmatpush2.msra.mxu0 0.0
    %1147 = vmatprep.subr.mxu0 0.0
    %1148 = vmatpush2.msra.mxu0 0.0
    %1149 = vmatprep.subr.mxu0 0.0
    %1150 = vmatpush2.msra.mxu0 0.0
    %1151 = vmatprep.subr.mxu0 0.0
    %1152 = vmatpush2.msra.mxu0 0.0
    %1153 = vmatprep.subr.mxu0 0.0
    %1154 = vmatpush2.msra.mxu0 0.0
    %1155 = vmatprep.subr.mxu0 0.0
    %1156 = vmatpush2.msra.mxu0 0.0
    %1157 = vmatprep.subr.mxu0 0.0
    %1158 = vmatpush2.msra.mxu0 0.0
    %1159 = vmatprep.subr.mxu0 0.0
    %1160 = vmatpush2.msra.mxu0 0.0
    %1161 = vmatprep.subr.mxu0 0.0
    %1162 = vmatpush2.msra.mxu0 0.0
    %1163 = vmatprep.subr.mxu0 0.0
    %1164 = vmatpush2.msra.mxu0 0.0
    %1165 = vmatprep.subr.mxu0 0.0
    %1166 = vmatpush2.msra.mxu0 0.0
    %1167 = vmatprep.subr.mxu0 0.0
    %1168 = vmatpush2.msra.mxu0 0.0
    %1169 = vmatprep.subr.mxu0 0.0
    %1170 = vmatpush2.msra.mxu0 0.0
    %1171 = vmatprep.subr.mxu0 0.0
    %1172 = vmatpush2.msra.mxu0 0.0
    %1173 = vmatprep.mubr.f32.mxu0 0.0
    %1174 = vmatmul.mubr.f32.gmra.mxu0 %v1104
    %v1175 = vpop.f32.mrf.mxu0
    %v1176 = vadd.f32 %v1101, %v1175
    %v1177 = vpop.f32.mrf.mxu0
    %1178 = vmatprep.mubr.f32.mxu0 0.0
    %1179 = vmatmul.mubr.f32.gmra.mxu0 %v1107
    %v1180 = vpop.f32.mrf.mxu0
    %v1181 = vadd.f32 %v1101, %v1180
    %v1182 = vpop.f32.mrf.mxu0
    %1183 = vdwg.mxu0
    %v1184 = vadd.f32 %v981, %v1176
    %v1185 = vadd.f32 %v982, %v1181
    %v1186 = vsel %vm38, %v1184, 0.0
    %1187 = vadd.xlane.f32.xlu0 %v1186
    %v1188 = vpop.xlane.xlu0 %1187
    %v1189 = vsel %vm38, %v1185, 0.0
    %1190 = vadd.xlane.f32.xlu0 %v1189
    %v1191 = vpop.xlane.xlu0 %1190
    %v1192 = vmul.f32 %v1188, %v45
    %v1193 = vmul.f32 %v1191, %v45
    %v1194 = vsub.f32 %v1184, %v1192
    %v1195 = vsub.f32 %v1185, %v1193
    %v1196 = vmul.f32 %v1194, %v1194
    %v1197 = vmul.f32 %v1195, %v1195
    %v1198 = vsel %vm38, %v1196, 0.0
    %1199 = vadd.xlane.f32.xlu0 %v1198
    %v1200 = vpop.xlane.xlu0 %1199
    %v1201 = vsel %vm38, %v1197, 0.0
    %1202 = vadd.xlane.f32.xlu0 %v1201
    %v1203 = vpop.xlane.xlu0 %1202
    %v1204 = vmul.f32 %v1200, %v45
    %v1205 = vmul.f32 %v1203, %v45
    %v1206 = vadd.f32 %v1204, 1e-12
    %v1207 = vadd.f32 %v1205, 1e-12
    %v1208 = vrsqrt.pop %v1206
    %v1209 = vrsqrt.pop %v1207
    %v1210 = vmul.f32 %v1194, %v1208
    %v1211 = vmul.f32 %v1195, %v1209
    %v1212 = vlaneseq
    %v1213 = vshrl.u32 %v1212, 7
    %v1214 = vsub.s32 2, %v1213
    %v1215 = vrot.slane %v34, %v1214
    %v1216 = vmul.f32 %v1210, %v1215
    %v1217 = vmul.f32 %v1211, %v1215
    %v1218 = vlaneseq
    %v1219 = vshrl.u32 %v1218, 7
    %v1220 = vsub.s32 3, %v1219
    %v1221 = vrot.slane %v34, %v1220
    %v1222 = vadd.f32 %v1216, %v1221
    %v1223 = vadd.f32 %v1217, %v1221
    %s1224 = scalar_lea.vmem %s3, 32
    %v1225 = vld [vmem:[%s1224] sm:$0xff]
    %v1226 = vld [vmem:[%s1224 + $0x8] sm:$0xff]
    %v1227 = vld [vmem:[%s1224 + $0x10] sm:$0xff]
    %v1228 = vld [vmem:[%s1224 + $0x18] sm:$0xff]
    %v1229 = vlaneseq
    %v1230 = vshrl.u32 %v1229, 7
    %v1231 = vsub.s32 4, %v1230
    %v1232 = vrot.slane %v34, %v1231
    %v1234 = vsel %vm38, %v1222, 0
    %v1237 = vsel %vm38, %v1223, 0
    %1239 = vmatprep.subr.mxu0 0.0
    %1240 = vmatpush1.msra.mxu0 0.0
    %1241 = vmatprep.subr.mxu0 0.0
    %1242 = vmatpush1.msra.mxu0 0.0
    %1243 = vmatprep.subr.mxu0 0.0
    %1244 = vmatpush1.msra.mxu0 0.0
    %1245 = vmatprep.subr.mxu0 0.0
    %1246 = vmatpush1.msra.mxu0 0.0
    %1247 = vmatprep.subr.mxu0 0.0
    %1248 = vmatpush1.msra.mxu0 0.0
    %1249 = vmatprep.subr.mxu0 0.0
    %1250 = vmatpush1.msra.mxu0 0.0
    %1251 = vmatprep.subr.mxu0 0.0
    %1252 = vmatpush1.msra.mxu0 0.0
    %1253 = vmatprep.subr.mxu0 0.0
    %1254 = vmatpush1.msra.mxu0 0.0
    %1255 = vmatprep.subr.mxu0 0.0
    %1256 = vmatpush1.msra.mxu0 0.0
    %1257 = vmatprep.subr.mxu0 0.0
    %1258 = vmatpush1.msra.mxu0 0.0
    %1259 = vmatprep.subr.mxu0 0.0
    %1260 = vmatpush1.msra.mxu0 0.0
    %1261 = vmatprep.subr.mxu0 0.0
    %1262 = vmatpush1.msra.mxu0 0.0
    %1263 = vmatprep.subr.mxu0 0.0
    %1264 = vmatpush1.msra.mxu0 %v1228
    %1265 = vmatprep.subr.mxu0 0.0
    %1266 = vmatpush1.msra.mxu0 %v1227
    %1267 = vmatprep.subr.mxu0 0.0
    %1268 = vmatpush1.msra.mxu0 %v1226
    %1269 = vmatprep.subr.mxu0 0.0
    %1270 = vmatpush1.msra.mxu0 %v1225
    %1271 = vmatprep.subr.mxu0 0.0
    %1272 = vmatpush2.msra.mxu0 0.0
    %1273 = vmatprep.subr.mxu0 0.0
    %1274 = vmatpush2.msra.mxu0 0.0
    %1275 = vmatprep.subr.mxu0 0.0
    %1276 = vmatpush2.msra.mxu0 0.0
    %1277 = vmatprep.subr.mxu0 0.0
    %1278 = vmatpush2.msra.mxu0 0.0
    %1279 = vmatprep.subr.mxu0 0.0
    %1280 = vmatpush2.msra.mxu0 0.0
    %1281 = vmatprep.subr.mxu0 0.0
    %1282 = vmatpush2.msra.mxu0 0.0
    %1283 = vmatprep.subr.mxu0 0.0
    %1284 = vmatpush2.msra.mxu0 0.0
    %1285 = vmatprep.subr.mxu0 0.0
    %1286 = vmatpush2.msra.mxu0 0.0
    %1287 = vmatprep.subr.mxu0 0.0
    %1288 = vmatpush2.msra.mxu0 0.0
    %1289 = vmatprep.subr.mxu0 0.0
    %1290 = vmatpush2.msra.mxu0 0.0
    %1291 = vmatprep.subr.mxu0 0.0
    %1292 = vmatpush2.msra.mxu0 0.0
    %1293 = vmatprep.subr.mxu0 0.0
    %1294 = vmatpush2.msra.mxu0 0.0
    %1295 = vmatprep.subr.mxu0 0.0
    %1296 = vmatpush2.msra.mxu0 0.0
    %1297 = vmatprep.subr.mxu0 0.0
    %1298 = vmatpush2.msra.mxu0 0.0
    %1299 = vmatprep.subr.mxu0 0.0
    %1300 = vmatpush2.msra.mxu0 0.0
    %1301 = vmatprep.subr.mxu0 0.0
    %1302 = vmatpush2.msra.mxu0 0.0
    %1303 = vmatprep.mubr.f32.mxu0 0.0
    %1304 = vmatmul.mubr.f32.gmra.mxu0 %v1234
    %v1305 = vpop.f32.mrf.mxu0
    %v1306 = vadd.f32 %v1232, %v1305
    %v1307 = vpop.f32.mrf.mxu0
    %1308 = vmatprep.mubr.f32.mxu0 0.0
    %1309 = vmatmul.mubr.f32.gmra.mxu0 %v1237
    %v1310 = vpop.f32.mrf.mxu0
    %v1311 = vadd.f32 %v1232, %v1310
    %v1312 = vpop.f32.mrf.mxu0
    %1313 = vdwg.mxu0
    %1315 = vrot.lane.b32.xlu0 %v1306, 96
    %v1316 = vpop.permute.xlu0 %1315
    %v1317 = vsel %vm171, %v1306, 0
    %v1319 = vsel %vm171, %v1316, 0
    %1321 = vmatprep.subr.mxu0 0.0
    %1322 = vmatpush1.xpose.msra.mxu0 0.0
    %1323 = vmatprep.subr.mxu0 0.0
    %1324 = vmatpush1.xpose.msra.mxu0 0.0
    %1325 = vmatprep.subr.mxu0 0.0
    %1326 = vmatpush1.xpose.msra.mxu0 0.0
    %1327 = vmatprep.subr.mxu0 0.0
    %1328 = vmatpush1.xpose.msra.mxu0 0.0
    %1329 = vmatprep.subr.mxu0 0.0
    %1330 = vmatpush1.xpose.msra.mxu0 0.0
    %1331 = vmatprep.subr.mxu0 0.0
    %1332 = vmatpush1.xpose.msra.mxu0 0.0
    %1333 = vmatprep.subr.mxu0 0.0
    %1334 = vmatpush1.xpose.msra.mxu0 0.0
    %1335 = vmatprep.subr.mxu0 0.0
    %1336 = vmatpush1.xpose.msra.mxu0 0.0
    %1337 = vmatprep.subr.mxu0 0.0
    %1338 = vmatpush1.xpose.msra.mxu0 0.0
    %1339 = vmatprep.subr.mxu0 0.0
    %1340 = vmatpush1.xpose.msra.mxu0 0.0
    %1341 = vmatprep.subr.mxu0 0.0
    %1342 = vmatpush1.xpose.msra.mxu0 0.0
    %1343 = vmatprep.subr.mxu0 0.0
    %1344 = vmatpush1.xpose.msra.mxu0 0.0
    %1345 = vmatprep.subr.mxu0 0.0
    %1346 = vmatpush1.xpose.msra.mxu0 0.0
    %1347 = vmatprep.subr.mxu0 0.0
    %1348 = vmatpush1.xpose.msra.mxu0 0.0
    %1349 = vmatprep.subr.mxu0 0.0
    %1350 = vmatpush1.xpose.msra.mxu0 0.0
    %1351 = vmatprep.subr.mxu0 0.0
    %1352 = vmatpush1.xpose.msra.mxu0 %v1319
    %1353 = vmatprep.subr.mxu0 0.0
    %1354 = vmatpush2.xpose.msra.mxu0 0.0
    %1355 = vmatprep.subr.mxu0 0.0
    %1356 = vmatpush2.xpose.msra.mxu0 0.0
    %1357 = vmatprep.subr.mxu0 0.0
    %1358 = vmatpush2.xpose.msra.mxu0 0.0
    %1359 = vmatprep.subr.mxu0 0.0
    %1360 = vmatpush2.xpose.msra.mxu0 0.0
    %1361 = vmatprep.subr.mxu0 0.0
    %1362 = vmatpush2.xpose.msra.mxu0 0.0
    %1363 = vmatprep.subr.mxu0 0.0
    %1364 = vmatpush2.xpose.msra.mxu0 0.0
    %1365 = vmatprep.subr.mxu0 0.0
    %1366 = vmatpush2.xpose.msra.mxu0 0.0
    %1367 = vmatprep.subr.mxu0 0.0
    %1368 = vmatpush2.xpose.msra.mxu0 0.0
    %1369 = vmatprep.subr.mxu0 0.0
    %1370 = vmatpush2.xpose.msra.mxu0 0.0
    %1371 = vmatprep.subr.mxu0 0.0
    %1372 = vmatpush2.xpose.msra.mxu0 0.0
    %1373 = vmatprep.subr.mxu0 0.0
    %1374 = vmatpush2.xpose.msra.mxu0 0.0
    %1375 = vmatprep.subr.mxu0 0.0
    %1376 = vmatpush2.xpose.msra.mxu0 0.0
    %1377 = vmatprep.subr.mxu0 0.0
    %1378 = vmatpush2.xpose.msra.mxu0 0.0
    %1379 = vmatprep.subr.mxu0 0.0
    %1380 = vmatpush2.xpose.msra.mxu0 0.0
    %1381 = vmatprep.subr.mxu0 0.0
    %1382 = vmatpush2.xpose.msra.mxu0 0.0
    %1383 = vmatprep.subr.mxu0 0.0
    %1384 = vmatpush2.xpose.msra.mxu0 0.0
    %1385 = vmatprep.mubr.f32.mxu0 0.0
    %1386 = vmatmul.mubr.f32.gmra.mxu0 %v1317
    %v1387 = vpop.f32.mrf.mxu0
    %v1388 = vadd.f32 0.0, %v1387
    %v1389 = vpop.f32.mrf.mxu0
    %1390 = vdwg.mxu0
    %v1391 = vmul.f32 %v1388, 0.25
    %v1392 = vadd.f32 %v1391, %v250
    %v1393 = vsel %vm252, %v1392, -inf
    %1394 = vmax.xlane.f32.xlu0 %v1393
    %v1395 = vpop.xlane.xlu0 %1394
    %v1396 = vsub.f32 %v1392, %v1395
    %v1397 = vmul.f32 %v1396, 1.442695
    %v1398 = vpow.pop %v1397
    %v1399 = vsel %vm252, %v1398, 0.0
    %1400 = vadd.xlane.f32.xlu0 %v1399
    %v1401 = vpop.xlane.xlu0 %1400
    %1402 = vrot.lane.b32.xlu0 %v1306, 64
    %v1403 = vpop.permute.xlu0 %1402
    %v1406 = vsel %vm252, %v1398, 0
    %1408 = vmatprep.subr.mxu0 0.0
    %1409 = vmatpush1.msra.mxu0 0.0
    %1410 = vmatprep.subr.mxu0 0.0
    %1411 = vmatpush1.msra.mxu0 0.0
    %1412 = vmatprep.subr.mxu0 0.0
    %1413 = vmatpush1.msra.mxu0 0.0
    %1414 = vmatprep.subr.mxu0 0.0
    %1415 = vmatpush1.msra.mxu0 0.0
    %1416 = vmatprep.subr.mxu0 0.0
    %1417 = vmatpush1.msra.mxu0 0.0
    %1418 = vmatprep.subr.mxu0 0.0
    %1419 = vmatpush1.msra.mxu0 0.0
    %1420 = vmatprep.subr.mxu0 0.0
    %1421 = vmatpush1.msra.mxu0 0.0
    %1422 = vmatprep.subr.mxu0 0.0
    %1423 = vmatpush1.msra.mxu0 0.0
    %1424 = vmatprep.subr.mxu0 0.0
    %1425 = vmatpush1.msra.mxu0 0.0
    %1426 = vmatprep.subr.mxu0 0.0
    %1427 = vmatpush1.msra.mxu0 0.0
    %1428 = vmatprep.subr.mxu0 0.0
    %1429 = vmatpush1.msra.mxu0 0.0
    %1430 = vmatprep.subr.mxu0 0.0
    %1431 = vmatpush1.msra.mxu0 0.0
    %1432 = vmatprep.subr.mxu0 0.0
    %1433 = vmatpush1.msra.mxu0 0.0
    %1434 = vmatprep.subr.mxu0 0.0
    %1435 = vmatpush1.msra.mxu0 0.0
    %1436 = vmatprep.subr.mxu0 0.0
    %1437 = vmatpush1.msra.mxu0 0.0
    %1438 = vmatprep.subr.mxu0 0.0
    %1439 = vmatpush1.msra.mxu0 %v1403
    %1440 = vmatprep.subr.mxu0 0.0
    %1441 = vmatpush2.msra.mxu0 0.0
    %1442 = vmatprep.subr.mxu0 0.0
    %1443 = vmatpush2.msra.mxu0 0.0
    %1444 = vmatprep.subr.mxu0 0.0
    %1445 = vmatpush2.msra.mxu0 0.0
    %1446 = vmatprep.subr.mxu0 0.0
    %1447 = vmatpush2.msra.mxu0 0.0
    %1448 = vmatprep.subr.mxu0 0.0
    %1449 = vmatpush2.msra.mxu0 0.0
    %1450 = vmatprep.subr.mxu0 0.0
    %1451 = vmatpush2.msra.mxu0 0.0
    %1452 = vmatprep.subr.mxu0 0.0
    %1453 = vmatpush2.msra.mxu0 0.0
    %1454 = vmatprep.subr.mxu0 0.0
    %1455 = vmatpush2.msra.mxu0 0.0
    %1456 = vmatprep.subr.mxu0 0.0
    %1457 = vmatpush2.msra.mxu0 0.0
    %1458 = vmatprep.subr.mxu0 0.0
    %1459 = vmatpush2.msra.mxu0 0.0
    %1460 = vmatprep.subr.mxu0 0.0
    %1461 = vmatpush2.msra.mxu0 0.0
    %1462 = vmatprep.subr.mxu0 0.0
    %1463 = vmatpush2.msra.mxu0 0.0
    %1464 = vmatprep.subr.mxu0 0.0
    %1465 = vmatpush2.msra.mxu0 0.0
    %1466 = vmatprep.subr.mxu0 0.0
    %1467 = vmatpush2.msra.mxu0 0.0
    %1468 = vmatprep.subr.mxu0 0.0
    %1469 = vmatpush2.msra.mxu0 0.0
    %1470 = vmatprep.subr.mxu0 0.0
    %1471 = vmatpush2.msra.mxu0 0.0
    %1472 = vmatprep.mubr.f32.mxu0 0.0
    %1473 = vmatmul.mubr.f32.gmra.mxu0 %v1406
    %v1474 = vpop.f32.mrf.mxu0
    %v1475 = vadd.f32 0.0, %v1474
    %v1476 = vpop.f32.mrf.mxu0
    %1477 = vdwg.mxu0
    %v1478 = vrcp.pop %v1401
    %v1479 = vmul.f32 %v1475, %v1478
    %1480 = vrot.lane.b32.xlu0 %v1306, 112
    %v1481 = vpop.permute.xlu0 %1480
    %1482 = vrot.lane.b32.xlu0 %v1306, 80
    %v1483 = vpop.permute.xlu0 %1482
    %v1484 = vsel %vm171, %v1481, 0
    %v1486 = vsel %vm171, %v1483, 0
    %1488 = vmatprep.subr.mxu0 0.0
    %1489 = vmatpush1.xpose.msra.mxu0 0.0
    %1490 = vmatprep.subr.mxu0 0.0
    %1491 = vmatpush1.xpose.msra.mxu0 0.0
    %1492 = vmatprep.subr.mxu0 0.0
    %1493 = vmatpush1.xpose.msra.mxu0 0.0
    %1494 = vmatprep.subr.mxu0 0.0
    %1495 = vmatpush1.xpose.msra.mxu0 0.0
    %1496 = vmatprep.subr.mxu0 0.0
    %1497 = vmatpush1.xpose.msra.mxu0 0.0
    %1498 = vmatprep.subr.mxu0 0.0
    %1499 = vmatpush1.xpose.msra.mxu0 0.0
    %1500 = vmatprep.subr.mxu0 0.0
    %1501 = vmatpush1.xpose.msra.mxu0 0.0
    %1502 = vmatprep.subr.mxu0 0.0
    %1503 = vmatpush1.xpose.msra.mxu0 0.0
    %1504 = vmatprep.subr.mxu0 0.0
    %1505 = vmatpush1.xpose.msra.mxu0 0.0
    %1506 = vmatprep.subr.mxu0 0.0
    %1507 = vmatpush1.xpose.msra.mxu0 0.0
    %1508 = vmatprep.subr.mxu0 0.0
    %1509 = vmatpush1.xpose.msra.mxu0 0.0
    %1510 = vmatprep.subr.mxu0 0.0
    %1511 = vmatpush1.xpose.msra.mxu0 0.0
    %1512 = vmatprep.subr.mxu0 0.0
    %1513 = vmatpush1.xpose.msra.mxu0 0.0
    %1514 = vmatprep.subr.mxu0 0.0
    %1515 = vmatpush1.xpose.msra.mxu0 0.0
    %1516 = vmatprep.subr.mxu0 0.0
    %1517 = vmatpush1.xpose.msra.mxu0 0.0
    %1518 = vmatprep.subr.mxu0 0.0
    %1519 = vmatpush1.xpose.msra.mxu0 %v1486
    %1520 = vmatprep.subr.mxu0 0.0
    %1521 = vmatpush2.xpose.msra.mxu0 0.0
    %1522 = vmatprep.subr.mxu0 0.0
    %1523 = vmatpush2.xpose.msra.mxu0 0.0
    %1524 = vmatprep.subr.mxu0 0.0
    %1525 = vmatpush2.xpose.msra.mxu0 0.0
    %1526 = vmatprep.subr.mxu0 0.0
    %1527 = vmatpush2.xpose.msra.mxu0 0.0
    %1528 = vmatprep.subr.mxu0 0.0
    %1529 = vmatpush2.xpose.msra.mxu0 0.0
    %1530 = vmatprep.subr.mxu0 0.0
    %1531 = vmatpush2.xpose.msra.mxu0 0.0
    %1532 = vmatprep.subr.mxu0 0.0
    %1533 = vmatpush2.xpose.msra.mxu0 0.0
    %1534 = vmatprep.subr.mxu0 0.0
    %1535 = vmatpush2.xpose.msra.mxu0 0.0
    %1536 = vmatprep.subr.mxu0 0.0
    %1537 = vmatpush2.xpose.msra.mxu0 0.0
    %1538 = vmatprep.subr.mxu0 0.0
    %1539 = vmatpush2.xpose.msra.mxu0 0.0
    %1540 = vmatprep.subr.mxu0 0.0
    %1541 = vmatpush2.xpose.msra.mxu0 0.0
    %1542 = vmatprep.subr.mxu0 0.0
    %1543 = vmatpush2.xpose.msra.mxu0 0.0
    %1544 = vmatprep.subr.mxu0 0.0
    %1545 = vmatpush2.xpose.msra.mxu0 0.0
    %1546 = vmatprep.subr.mxu0 0.0
    %1547 = vmatpush2.xpose.msra.mxu0 0.0
    %1548 = vmatprep.subr.mxu0 0.0
    %1549 = vmatpush2.xpose.msra.mxu0 0.0
    %1550 = vmatprep.subr.mxu0 0.0
    %1551 = vmatpush2.xpose.msra.mxu0 0.0
    %1552 = vmatprep.mubr.f32.mxu0 0.0
    %1553 = vmatmul.mubr.f32.gmra.mxu0 %v1484
    %v1554 = vpop.f32.mrf.mxu0
    %v1555 = vadd.f32 0.0, %v1554
    %v1556 = vpop.f32.mrf.mxu0
    %1557 = vdwg.mxu0
    %v1558 = vmul.f32 %v1555, 0.25
    %v1559 = vadd.f32 %v1558, %v250
    %v1560 = vsel %vm252, %v1559, -inf
    %1561 = vmax.xlane.f32.xlu0 %v1560
    %v1562 = vpop.xlane.xlu0 %1561
    %v1563 = vsub.f32 %v1559, %v1562
    %v1564 = vmul.f32 %v1563, 1.442695
    %v1565 = vpow.pop %v1564
    %v1566 = vsel %vm252, %v1565, 0.0
    %1567 = vadd.xlane.f32.xlu0 %v1566
    %v1568 = vpop.xlane.xlu0 %1567
    %1569 = vrot.lane.b32.xlu0 %v1306, 48
    %v1570 = vpop.permute.xlu0 %1569
    %v1573 = vsel %vm252, %v1565, 0
    %1575 = vmatprep.subr.mxu0 0.0
    %1576 = vmatpush1.msra.mxu0 0.0
    %1577 = vmatprep.subr.mxu0 0.0
    %1578 = vmatpush1.msra.mxu0 0.0
    %1579 = vmatprep.subr.mxu0 0.0
    %1580 = vmatpush1.msra.mxu0 0.0
    %1581 = vmatprep.subr.mxu0 0.0
    %1582 = vmatpush1.msra.mxu0 0.0
    %1583 = vmatprep.subr.mxu0 0.0
    %1584 = vmatpush1.msra.mxu0 0.0
    %1585 = vmatprep.subr.mxu0 0.0
    %1586 = vmatpush1.msra.mxu0 0.0
    %1587 = vmatprep.subr.mxu0 0.0
    %1588 = vmatpush1.msra.mxu0 0.0
    %1589 = vmatprep.subr.mxu0 0.0
    %1590 = vmatpush1.msra.mxu0 0.0
    %1591 = vmatprep.subr.mxu0 0.0
    %1592 = vmatpush1.msra.mxu0 0.0
    %1593 = vmatprep.subr.mxu0 0.0
    %1594 = vmatpush1.msra.mxu0 0.0
    %1595 = vmatprep.subr.mxu0 0.0
    %1596 = vmatpush1.msra.mxu0 0.0
    %1597 = vmatprep.subr.mxu0 0.0
    %1598 = vmatpush1.msra.mxu0 0.0
    %1599 = vmatprep.subr.mxu0 0.0
    %1600 = vmatpush1.msra.mxu0 0.0
    %1601 = vmatprep.subr.mxu0 0.0
    %1602 = vmatpush1.msra.mxu0 0.0
    %1603 = vmatprep.subr.mxu0 0.0
    %1604 = vmatpush1.msra.mxu0 0.0
    %1605 = vmatprep.subr.mxu0 0.0
    %1606 = vmatpush1.msra.mxu0 %v1570
    %1607 = vmatprep.subr.mxu0 0.0
    %1608 = vmatpush2.msra.mxu0 0.0
    %1609 = vmatprep.subr.mxu0 0.0
    %1610 = vmatpush2.msra.mxu0 0.0
    %1611 = vmatprep.subr.mxu0 0.0
    %1612 = vmatpush2.msra.mxu0 0.0
    %1613 = vmatprep.subr.mxu0 0.0
    %1614 = vmatpush2.msra.mxu0 0.0
    %1615 = vmatprep.subr.mxu0 0.0
    %1616 = vmatpush2.msra.mxu0 0.0
    %1617 = vmatprep.subr.mxu0 0.0
    %1618 = vmatpush2.msra.mxu0 0.0
    %1619 = vmatprep.subr.mxu0 0.0
    %1620 = vmatpush2.msra.mxu0 0.0
    %1621 = vmatprep.subr.mxu0 0.0
    %1622 = vmatpush2.msra.mxu0 0.0
    %1623 = vmatprep.subr.mxu0 0.0
    %1624 = vmatpush2.msra.mxu0 0.0
    %1625 = vmatprep.subr.mxu0 0.0
    %1626 = vmatpush2.msra.mxu0 0.0
    %1627 = vmatprep.subr.mxu0 0.0
    %1628 = vmatpush2.msra.mxu0 0.0
    %1629 = vmatprep.subr.mxu0 0.0
    %1630 = vmatpush2.msra.mxu0 0.0
    %1631 = vmatprep.subr.mxu0 0.0
    %1632 = vmatpush2.msra.mxu0 0.0
    %1633 = vmatprep.subr.mxu0 0.0
    %1634 = vmatpush2.msra.mxu0 0.0
    %1635 = vmatprep.subr.mxu0 0.0
    %1636 = vmatpush2.msra.mxu0 0.0
    %1637 = vmatprep.subr.mxu0 0.0
    %1638 = vmatpush2.msra.mxu0 0.0
    %1639 = vmatprep.mubr.f32.mxu0 0.0
    %1640 = vmatmul.mubr.f32.gmra.mxu0 %v1573
    %v1641 = vpop.f32.mrf.mxu0
    %v1642 = vadd.f32 0.0, %v1641
    %v1643 = vpop.f32.mrf.mxu0
    %1644 = vdwg.mxu0
    %v1645 = vrcp.pop %v1568
    %v1646 = vmul.f32 %v1642, %v1645
    %1648 = vrot.lane.b32.xlu0 %v1646, 16
    %v1649 = vpop.permute.xlu0 %1648
    %v1651 = vsel %vm171, %v1479, %v1649
    %1653 = vrot.lane.b32.xlu0 %v1311, 96
    %v1654 = vpop.permute.xlu0 %1653
    %v1655 = vsel %vm171, %v1311, 0
    %v1657 = vsel %vm171, %v1654, 0
    %1659 = vmatprep.subr.mxu0 0.0
    %1660 = vmatpush1.xpose.msra.mxu0 0.0
    %1661 = vmatprep.subr.mxu0 0.0
    %1662 = vmatpush1.xpose.msra.mxu0 0.0
    %1663 = vmatprep.subr.mxu0 0.0
    %1664 = vmatpush1.xpose.msra.mxu0 0.0
    %1665 = vmatprep.subr.mxu0 0.0
    %1666 = vmatpush1.xpose.msra.mxu0 0.0
    %1667 = vmatprep.subr.mxu0 0.0
    %1668 = vmatpush1.xpose.msra.mxu0 0.0
    %1669 = vmatprep.subr.mxu0 0.0
    %1670 = vmatpush1.xpose.msra.mxu0 0.0
    %1671 = vmatprep.subr.mxu0 0.0
    %1672 = vmatpush1.xpose.msra.mxu0 0.0
    %1673 = vmatprep.subr.mxu0 0.0
    %1674 = vmatpush1.xpose.msra.mxu0 0.0
    %1675 = vmatprep.subr.mxu0 0.0
    %1676 = vmatpush1.xpose.msra.mxu0 0.0
    %1677 = vmatprep.subr.mxu0 0.0
    %1678 = vmatpush1.xpose.msra.mxu0 0.0
    %1679 = vmatprep.subr.mxu0 0.0
    %1680 = vmatpush1.xpose.msra.mxu0 0.0
    %1681 = vmatprep.subr.mxu0 0.0
    %1682 = vmatpush1.xpose.msra.mxu0 0.0
    %1683 = vmatprep.subr.mxu0 0.0
    %1684 = vmatpush1.xpose.msra.mxu0 0.0
    %1685 = vmatprep.subr.mxu0 0.0
    %1686 = vmatpush1.xpose.msra.mxu0 0.0
    %1687 = vmatprep.subr.mxu0 0.0
    %1688 = vmatpush1.xpose.msra.mxu0 0.0
    %1689 = vmatprep.subr.mxu0 0.0
    %1690 = vmatpush1.xpose.msra.mxu0 %v1657
    %1691 = vmatprep.subr.mxu0 0.0
    %1692 = vmatpush2.xpose.msra.mxu0 0.0
    %1693 = vmatprep.subr.mxu0 0.0
    %1694 = vmatpush2.xpose.msra.mxu0 0.0
    %1695 = vmatprep.subr.mxu0 0.0
    %1696 = vmatpush2.xpose.msra.mxu0 0.0
    %1697 = vmatprep.subr.mxu0 0.0
    %1698 = vmatpush2.xpose.msra.mxu0 0.0
    %1699 = vmatprep.subr.mxu0 0.0
    %1700 = vmatpush2.xpose.msra.mxu0 0.0
    %1701 = vmatprep.subr.mxu0 0.0
    %1702 = vmatpush2.xpose.msra.mxu0 0.0
    %1703 = vmatprep.subr.mxu0 0.0
    %1704 = vmatpush2.xpose.msra.mxu0 0.0
    %1705 = vmatprep.subr.mxu0 0.0
    %1706 = vmatpush2.xpose.msra.mxu0 0.0
    %1707 = vmatprep.subr.mxu0 0.0
    %1708 = vmatpush2.xpose.msra.mxu0 0.0
    %1709 = vmatprep.subr.mxu0 0.0
    %1710 = vmatpush2.xpose.msra.mxu0 0.0
    %1711 = vmatprep.subr.mxu0 0.0
    %1712 = vmatpush2.xpose.msra.mxu0 0.0
    %1713 = vmatprep.subr.mxu0 0.0
    %1714 = vmatpush2.xpose.msra.mxu0 0.0
    %1715 = vmatprep.subr.mxu0 0.0
    %1716 = vmatpush2.xpose.msra.mxu0 0.0
    %1717 = vmatprep.subr.mxu0 0.0
    %1718 = vmatpush2.xpose.msra.mxu0 0.0
    %1719 = vmatprep.subr.mxu0 0.0
    %1720 = vmatpush2.xpose.msra.mxu0 0.0
    %1721 = vmatprep.subr.mxu0 0.0
    %1722 = vmatpush2.xpose.msra.mxu0 0.0
    %1723 = vmatprep.mubr.f32.mxu0 0.0
    %1724 = vmatmul.mubr.f32.gmra.mxu0 %v1655
    %v1725 = vpop.f32.mrf.mxu0
    %v1726 = vadd.f32 0.0, %v1725
    %v1727 = vpop.f32.mrf.mxu0
    %1728 = vdwg.mxu0
    %v1729 = vmul.f32 %v1726, 0.25
    %v1730 = vadd.f32 %v1729, %v593
    %v1731 = vsel %vm252, %v1730, -inf
    %1732 = vmax.xlane.f32.xlu0 %v1731
    %v1733 = vpop.xlane.xlu0 %1732
    %v1734 = vsub.f32 %v1730, %v1733
    %v1735 = vmul.f32 %v1734, 1.442695
    %v1736 = vpow.pop %v1735
    %v1737 = vsel %vm252, %v1736, 0.0
    %1738 = vadd.xlane.f32.xlu0 %v1737
    %v1739 = vpop.xlane.xlu0 %1738
    %1740 = vrot.lane.b32.xlu0 %v1311, 64
    %v1741 = vpop.permute.xlu0 %1740
    %v1744 = vsel %vm252, %v1736, 0
    %1746 = vmatprep.subr.mxu0 0.0
    %1747 = vmatpush1.msra.mxu0 0.0
    %1748 = vmatprep.subr.mxu0 0.0
    %1749 = vmatpush1.msra.mxu0 0.0
    %1750 = vmatprep.subr.mxu0 0.0
    %1751 = vmatpush1.msra.mxu0 0.0
    %1752 = vmatprep.subr.mxu0 0.0
    %1753 = vmatpush1.msra.mxu0 0.0
    %1754 = vmatprep.subr.mxu0 0.0
    %1755 = vmatpush1.msra.mxu0 0.0
    %1756 = vmatprep.subr.mxu0 0.0
    %1757 = vmatpush1.msra.mxu0 0.0
    %1758 = vmatprep.subr.mxu0 0.0
    %1759 = vmatpush1.msra.mxu0 0.0
    %1760 = vmatprep.subr.mxu0 0.0
    %1761 = vmatpush1.msra.mxu0 0.0
    %1762 = vmatprep.subr.mxu0 0.0
    %1763 = vmatpush1.msra.mxu0 0.0
    %1764 = vmatprep.subr.mxu0 0.0
    %1765 = vmatpush1.msra.mxu0 0.0
    %1766 = vmatprep.subr.mxu0 0.0
    %1767 = vmatpush1.msra.mxu0 0.0
    %1768 = vmatprep.subr.mxu0 0.0
    %1769 = vmatpush1.msra.mxu0 0.0
    %1770 = vmatprep.subr.mxu0 0.0
    %1771 = vmatpush1.msra.mxu0 0.0
    %1772 = vmatprep.subr.mxu0 0.0
    %1773 = vmatpush1.msra.mxu0 0.0
    %1774 = vmatprep.subr.mxu0 0.0
    %1775 = vmatpush1.msra.mxu0 0.0
    %1776 = vmatprep.subr.mxu0 0.0
    %1777 = vmatpush1.msra.mxu0 %v1741
    %1778 = vmatprep.subr.mxu0 0.0
    %1779 = vmatpush2.msra.mxu0 0.0
    %1780 = vmatprep.subr.mxu0 0.0
    %1781 = vmatpush2.msra.mxu0 0.0
    %1782 = vmatprep.subr.mxu0 0.0
    %1783 = vmatpush2.msra.mxu0 0.0
    %1784 = vmatprep.subr.mxu0 0.0
    %1785 = vmatpush2.msra.mxu0 0.0
    %1786 = vmatprep.subr.mxu0 0.0
    %1787 = vmatpush2.msra.mxu0 0.0
    %1788 = vmatprep.subr.mxu0 0.0
    %1789 = vmatpush2.msra.mxu0 0.0
    %1790 = vmatprep.subr.mxu0 0.0
    %1791 = vmatpush2.msra.mxu0 0.0
    %1792 = vmatprep.subr.mxu0 0.0
    %1793 = vmatpush2.msra.mxu0 0.0
    %1794 = vmatprep.subr.mxu0 0.0
    %1795 = vmatpush2.msra.mxu0 0.0
    %1796 = vmatprep.subr.mxu0 0.0
    %1797 = vmatpush2.msra.mxu0 0.0
    %1798 = vmatprep.subr.mxu0 0.0
    %1799 = vmatpush2.msra.mxu0 0.0
    %1800 = vmatprep.subr.mxu0 0.0
    %1801 = vmatpush2.msra.mxu0 0.0
    %1802 = vmatprep.subr.mxu0 0.0
    %1803 = vmatpush2.msra.mxu0 0.0
    %1804 = vmatprep.subr.mxu0 0.0
    %1805 = vmatpush2.msra.mxu0 0.0
    %1806 = vmatprep.subr.mxu0 0.0
    %1807 = vmatpush2.msra.mxu0 0.0
    %1808 = vmatprep.subr.mxu0 0.0
    %1809 = vmatpush2.msra.mxu0 0.0
    %1810 = vmatprep.mubr.f32.mxu0 0.0
    %1811 = vmatmul.mubr.f32.gmra.mxu0 %v1744
    %v1812 = vpop.f32.mrf.mxu0
    %v1813 = vadd.f32 0.0, %v1812
    %v1814 = vpop.f32.mrf.mxu0
    %1815 = vdwg.mxu0
    %v1816 = vrcp.pop %v1739
    %v1817 = vmul.f32 %v1813, %v1816
    %1818 = vrot.lane.b32.xlu0 %v1311, 112
    %v1819 = vpop.permute.xlu0 %1818
    %1820 = vrot.lane.b32.xlu0 %v1311, 80
    %v1821 = vpop.permute.xlu0 %1820
    %v1822 = vsel %vm171, %v1819, 0
    %v1824 = vsel %vm171, %v1821, 0
    %1826 = vmatprep.subr.mxu0 0.0
    %1827 = vmatpush1.xpose.msra.mxu0 0.0
    %1828 = vmatprep.subr.mxu0 0.0
    %1829 = vmatpush1.xpose.msra.mxu0 0.0
    %1830 = vmatprep.subr.mxu0 0.0
    %1831 = vmatpush1.xpose.msra.mxu0 0.0
    %1832 = vmatprep.subr.mxu0 0.0
    %1833 = vmatpush1.xpose.msra.mxu0 0.0
    %1834 = vmatprep.subr.mxu0 0.0
    %1835 = vmatpush1.xpose.msra.mxu0 0.0
    %1836 = vmatprep.subr.mxu0 0.0
    %1837 = vmatpush1.xpose.msra.mxu0 0.0
    %1838 = vmatprep.subr.mxu0 0.0
    %1839 = vmatpush1.xpose.msra.mxu0 0.0
    %1840 = vmatprep.subr.mxu0 0.0
    %1841 = vmatpush1.xpose.msra.mxu0 0.0
    %1842 = vmatprep.subr.mxu0 0.0
    %1843 = vmatpush1.xpose.msra.mxu0 0.0
    %1844 = vmatprep.subr.mxu0 0.0
    %1845 = vmatpush1.xpose.msra.mxu0 0.0
    %1846 = vmatprep.subr.mxu0 0.0
    %1847 = vmatpush1.xpose.msra.mxu0 0.0
    %1848 = vmatprep.subr.mxu0 0.0
    %1849 = vmatpush1.xpose.msra.mxu0 0.0
    %1850 = vmatprep.subr.mxu0 0.0
    %1851 = vmatpush1.xpose.msra.mxu0 0.0
    %1852 = vmatprep.subr.mxu0 0.0
    %1853 = vmatpush1.xpose.msra.mxu0 0.0
    %1854 = vmatprep.subr.mxu0 0.0
    %1855 = vmatpush1.xpose.msra.mxu0 0.0
    %1856 = vmatprep.subr.mxu0 0.0
    %1857 = vmatpush1.xpose.msra.mxu0 %v1824
    %1858 = vmatprep.subr.mxu0 0.0
    %1859 = vmatpush2.xpose.msra.mxu0 0.0
    %1860 = vmatprep.subr.mxu0 0.0
    %1861 = vmatpush2.xpose.msra.mxu0 0.0
    %1862 = vmatprep.subr.mxu0 0.0
    %1863 = vmatpush2.xpose.msra.mxu0 0.0
    %1864 = vmatprep.subr.mxu0 0.0
    %1865 = vmatpush2.xpose.msra.mxu0 0.0
    %1866 = vmatprep.subr.mxu0 0.0
    %1867 = vmatpush2.xpose.msra.mxu0 0.0
    %1868 = vmatprep.subr.mxu0 0.0
    %1869 = vmatpush2.xpose.msra.mxu0 0.0
    %1870 = vmatprep.subr.mxu0 0.0
    %1871 = vmatpush2.xpose.msra.mxu0 0.0
    %1872 = vmatprep.subr.mxu0 0.0
    %1873 = vmatpush2.xpose.msra.mxu0 0.0
    %1874 = vmatprep.subr.mxu0 0.0
    %1875 = vmatpush2.xpose.msra.mxu0 0.0
    %1876 = vmatprep.subr.mxu0 0.0
    %1877 = vmatpush2.xpose.msra.mxu0 0.0
    %1878 = vmatprep.subr.mxu0 0.0
    %1879 = vmatpush2.xpose.msra.mxu0 0.0
    %1880 = vmatprep.subr.mxu0 0.0
    %1881 = vmatpush2.xpose.msra.mxu0 0.0
    %1882 = vmatprep.subr.mxu0 0.0
    %1883 = vmatpush2.xpose.msra.mxu0 0.0
    %1884 = vmatprep.subr.mxu0 0.0
    %1885 = vmatpush2.xpose.msra.mxu0 0.0
    %1886 = vmatprep.subr.mxu0 0.0
    %1887 = vmatpush2.xpose.msra.mxu0 0.0
    %1888 = vmatprep.subr.mxu0 0.0
    %1889 = vmatpush2.xpose.msra.mxu0 0.0
    %1890 = vmatprep.mubr.f32.mxu0 0.0
    %1891 = vmatmul.mubr.f32.gmra.mxu0 %v1822
    %v1892 = vpop.f32.mrf.mxu0
    %v1893 = vadd.f32 0.0, %v1892
    %v1894 = vpop.f32.mrf.mxu0
    %1895 = vdwg.mxu0
    %v1896 = vmul.f32 %v1893, 0.25
    %v1897 = vadd.f32 %v1896, %v593
    %v1898 = vsel %vm252, %v1897, -inf
    %1899 = vmax.xlane.f32.xlu0 %v1898
    %v1900 = vpop.xlane.xlu0 %1899
    %v1901 = vsub.f32 %v1897, %v1900
    %v1902 = vmul.f32 %v1901, 1.442695
    %v1903 = vpow.pop %v1902
    %v1904 = vsel %vm252, %v1903, 0.0
    %1905 = vadd.xlane.f32.xlu0 %v1904
    %v1906 = vpop.xlane.xlu0 %1905
    %1907 = vrot.lane.b32.xlu0 %v1311, 48
    %v1908 = vpop.permute.xlu0 %1907
    %v1911 = vsel %vm252, %v1903, 0
    %1913 = vmatprep.subr.mxu0 0.0
    %1914 = vmatpush1.msra.mxu0 0.0
    %1915 = vmatprep.subr.mxu0 0.0
    %1916 = vmatpush1.msra.mxu0 0.0
    %1917 = vmatprep.subr.mxu0 0.0
    %1918 = vmatpush1.msra.mxu0 0.0
    %1919 = vmatprep.subr.mxu0 0.0
    %1920 = vmatpush1.msra.mxu0 0.0
    %1921 = vmatprep.subr.mxu0 0.0
    %1922 = vmatpush1.msra.mxu0 0.0
    %1923 = vmatprep.subr.mxu0 0.0
    %1924 = vmatpush1.msra.mxu0 0.0
    %1925 = vmatprep.subr.mxu0 0.0
    %1926 = vmatpush1.msra.mxu0 0.0
    %1927 = vmatprep.subr.mxu0 0.0
    %1928 = vmatpush1.msra.mxu0 0.0
    %1929 = vmatprep.subr.mxu0 0.0
    %1930 = vmatpush1.msra.mxu0 0.0
    %1931 = vmatprep.subr.mxu0 0.0
    %1932 = vmatpush1.msra.mxu0 0.0
    %1933 = vmatprep.subr.mxu0 0.0
    %1934 = vmatpush1.msra.mxu0 0.0
    %1935 = vmatprep.subr.mxu0 0.0
    %1936 = vmatpush1.msra.mxu0 0.0
    %1937 = vmatprep.subr.mxu0 0.0
    %1938 = vmatpush1.msra.mxu0 0.0
    %1939 = vmatprep.subr.mxu0 0.0
    %1940 = vmatpush1.msra.mxu0 0.0
    %1941 = vmatprep.subr.mxu0 0.0
    %1942 = vmatpush1.msra.mxu0 0.0
    %1943 = vmatprep.subr.mxu0 0.0
    %1944 = vmatpush1.msra.mxu0 %v1908
    %1945 = vmatprep.subr.mxu0 0.0
    %1946 = vmatpush2.msra.mxu0 0.0
    %1947 = vmatprep.subr.mxu0 0.0
    %1948 = vmatpush2.msra.mxu0 0.0
    %1949 = vmatprep.subr.mxu0 0.0
    %1950 = vmatpush2.msra.mxu0 0.0
    %1951 = vmatprep.subr.mxu0 0.0
    %1952 = vmatpush2.msra.mxu0 0.0
    %1953 = vmatprep.subr.mxu0 0.0
    %1954 = vmatpush2.msra.mxu0 0.0
    %1955 = vmatprep.subr.mxu0 0.0
    %1956 = vmatpush2.msra.mxu0 0.0
    %1957 = vmatprep.subr.mxu0 0.0
    %1958 = vmatpush2.msra.mxu0 0.0
    %1959 = vmatprep.subr.mxu0 0.0
    %1960 = vmatpush2.msra.mxu0 0.0
    %1961 = vmatprep.subr.mxu0 0.0
    %1962 = vmatpush2.msra.mxu0 0.0
    %1963 = vmatprep.subr.mxu0 0.0
    %1964 = vmatpush2.msra.mxu0 0.0
    %1965 = vmatprep.subr.mxu0 0.0
    %1966 = vmatpush2.msra.mxu0 0.0
    %1967 = vmatprep.subr.mxu0 0.0
    %1968 = vmatpush2.msra.mxu0 0.0
    %1969 = vmatprep.subr.mxu0 0.0
    %1970 = vmatpush2.msra.mxu0 0.0
    %1971 = vmatprep.subr.mxu0 0.0
    %1972 = vmatpush2.msra.mxu0 0.0
    %1973 = vmatprep.subr.mxu0 0.0
    %1974 = vmatpush2.msra.mxu0 0.0
    %1975 = vmatprep.subr.mxu0 0.0
    %1976 = vmatpush2.msra.mxu0 0.0
    %1977 = vmatprep.mubr.f32.mxu0 0.0
    %1978 = vmatmul.mubr.f32.gmra.mxu0 %v1911
    %v1979 = vpop.f32.mrf.mxu0
    %v1980 = vadd.f32 0.0, %v1979
    %v1981 = vpop.f32.mrf.mxu0
    %1982 = vdwg.mxu0
    %v1983 = vrcp.pop %v1906
    %v1984 = vmul.f32 %v1980, %v1983
    %1986 = vrot.lane.b32.xlu0 %v1984, 16
    %v1987 = vpop.permute.xlu0 %1986
    %v1989 = vsel %vm171, %v1817, %v1987
    %s1990 = scalar_lea.vmem %s4, 32
    %v1991 = vld [vmem:[%s1990] sm:$0xff]
    %v1992 = vld [vmem:[%s1990 + $0x8] sm:$0xff]
    %v1993 = vld [vmem:[%s1990 + $0x10] sm:$0xff]
    %v1994 = vld [vmem:[%s1990 + $0x18] sm:$0xff]
    %v1995 = vlaneseq
    %v1996 = vshrl.u32 %v1995, 7
    %v1997 = vsub.s32 5, %v1996
    %v1998 = vrot.slane %v34, %v1997
    %v2000 = vsel %vm38, %v1651, 0
    %v2003 = vsel %vm38, %v1989, 0
    %2005 = vmatprep.subr.mxu0 0.0
    %2006 = vmatpush1.msra.mxu0 0.0
    %2007 = vmatprep.subr.mxu0 0.0
    %2008 = vmatpush1.msra.mxu0 0.0
    %2009 = vmatprep.subr.mxu0 0.0
    %2010 = vmatpush1.msra.mxu0 0.0
    %2011 = vmatprep.subr.mxu0 0.0
    %2012 = vmatpush1.msra.mxu0 0.0
    %2013 = vmatprep.subr.mxu0 0.0
    %2014 = vmatpush1.msra.mxu0 0.0
    %2015 = vmatprep.subr.mxu0 0.0
    %2016 = vmatpush1.msra.mxu0 0.0
    %2017 = vmatprep.subr.mxu0 0.0
    %2018 = vmatpush1.msra.mxu0 0.0
    %2019 = vmatprep.subr.mxu0 0.0
    %2020 = vmatpush1.msra.mxu0 0.0
    %2021 = vmatprep.subr.mxu0 0.0
    %2022 = vmatpush1.msra.mxu0 0.0
    %2023 = vmatprep.subr.mxu0 0.0
    %2024 = vmatpush1.msra.mxu0 0.0
    %2025 = vmatprep.subr.mxu0 0.0
    %2026 = vmatpush1.msra.mxu0 0.0
    %2027 = vmatprep.subr.mxu0 0.0
    %2028 = vmatpush1.msra.mxu0 0.0
    %2029 = vmatprep.subr.mxu0 0.0
    %2030 = vmatpush1.msra.mxu0 %v1994
    %2031 = vmatprep.subr.mxu0 0.0
    %2032 = vmatpush1.msra.mxu0 %v1993
    %2033 = vmatprep.subr.mxu0 0.0
    %2034 = vmatpush1.msra.mxu0 %v1992
    %2035 = vmatprep.subr.mxu0 0.0
    %2036 = vmatpush1.msra.mxu0 %v1991
    %2037 = vmatprep.subr.mxu0 0.0
    %2038 = vmatpush2.msra.mxu0 0.0
    %2039 = vmatprep.subr.mxu0 0.0
    %2040 = vmatpush2.msra.mxu0 0.0
    %2041 = vmatprep.subr.mxu0 0.0
    %2042 = vmatpush2.msra.mxu0 0.0
    %2043 = vmatprep.subr.mxu0 0.0
    %2044 = vmatpush2.msra.mxu0 0.0
    %2045 = vmatprep.subr.mxu0 0.0
    %2046 = vmatpush2.msra.mxu0 0.0
    %2047 = vmatprep.subr.mxu0 0.0
    %2048 = vmatpush2.msra.mxu0 0.0
    %2049 = vmatprep.subr.mxu0 0.0
    %2050 = vmatpush2.msra.mxu0 0.0
    %2051 = vmatprep.subr.mxu0 0.0
    %2052 = vmatpush2.msra.mxu0 0.0
    %2053 = vmatprep.subr.mxu0 0.0
    %2054 = vmatpush2.msra.mxu0 0.0
    %2055 = vmatprep.subr.mxu0 0.0
    %2056 = vmatpush2.msra.mxu0 0.0
    %2057 = vmatprep.subr.mxu0 0.0
    %2058 = vmatpush2.msra.mxu0 0.0
    %2059 = vmatprep.subr.mxu0 0.0
    %2060 = vmatpush2.msra.mxu0 0.0
    %2061 = vmatprep.subr.mxu0 0.0
    %2062 = vmatpush2.msra.mxu0 0.0
    %2063 = vmatprep.subr.mxu0 0.0
    %2064 = vmatpush2.msra.mxu0 0.0
    %2065 = vmatprep.subr.mxu0 0.0
    %2066 = vmatpush2.msra.mxu0 0.0
    %2067 = vmatprep.subr.mxu0 0.0
    %2068 = vmatpush2.msra.mxu0 0.0
    %2069 = vmatprep.mubr.f32.mxu0 0.0
    %2070 = vmatmul.mubr.f32.gmra.mxu0 %v2000
    %v2071 = vpop.f32.mrf.mxu0
    %v2072 = vadd.f32 %v1998, %v2071
    %v2073 = vpop.f32.mrf.mxu0
    %2074 = vmatprep.mubr.f32.mxu0 0.0
    %2075 = vmatmul.mubr.f32.gmra.mxu0 %v2003
    %v2076 = vpop.f32.mrf.mxu0
    %v2077 = vadd.f32 %v1998, %v2076
    %v2078 = vpop.f32.mrf.mxu0
    %2079 = vdwg.mxu0
    %v2080 = vadd.f32 %v1222, %v2072
    %v2081 = vadd.f32 %v1223, %v2077
    %v2082 = vsel %vm38, %v2080, 0.0
    %2083 = vadd.xlane.f32.xlu0 %v2082
    %v2084 = vpop.xlane.xlu0 %2083
    %v2085 = vsel %vm38, %v2081, 0.0
    %2086 = vadd.xlane.f32.xlu0 %v2085
    %v2087 = vpop.xlane.xlu0 %2086
    %v2088 = vmul.f32 %v2084, %v45
    %v2089 = vmul.f32 %v2087, %v45
    %v2090 = vsub.f32 %v2080, %v2088
    %v2091 = vsub.f32 %v2081, %v2089
    %v2092 = vmul.f32 %v2090, %v2090
    %v2093 = vmul.f32 %v2091, %v2091
    %v2094 = vsel %vm38, %v2092, 0.0
    %2095 = vadd.xlane.f32.xlu0 %v2094
    %v2096 = vpop.xlane.xlu0 %2095
    %v2097 = vsel %vm38, %v2093, 0.0
    %2098 = vadd.xlane.f32.xlu0 %v2097
    %v2099 = vpop.xlane.xlu0 %2098
    %v2100 = vmul.f32 %v2096, %v45
    %v2101 = vmul.f32 %v2099, %v45
    %v2102 = vadd.f32 %v2100, 1e-12
    %v2103 = vadd.f32 %v2101, 1e-12
    %v2104 = vrsqrt.pop %v2102
    %v2105 = vrsqrt.pop %v2103
    %v2106 = vmul.f32 %v2090, %v2104
    %v2107 = vmul.f32 %v2091, %v2105
    %v2108 = vlaneseq
    %v2109 = vshrl.u32 %v2108, 7
    %v2110 = vsub.s32 6, %v2109
    %v2111 = vrot.slane %v34, %v2110
    %v2112 = vmul.f32 %v2106, %v2111
    %v2113 = vmul.f32 %v2107, %v2111
    %v2114 = vlaneseq
    %v2115 = vshrl.u32 %v2114, 7
    %v2116 = vsub.s32 7, %v2115
    %v2117 = vrot.slane %v34, %v2116
    %v2118 = vadd.f32 %v2112, %v2117
    %v2119 = vadd.f32 %v2113, %v2117
    %s2120 = scalar_lea.vmem %s5, 32
    %v2121 = vld [vmem:[%s2120] sm:$0xff]
    %v2122 = vld [vmem:[%s2120 + $0x8] sm:$0xff]
    %v2123 = vld [vmem:[%s2120 + $0x10] sm:$0xff]
    %v2124 = vld [vmem:[%s2120 + $0x18] sm:$0xff]
    %v2125 = vlaneseq
    %v2126 = vshrl.u32 %v2125, 7
    %v2127 = vsub.s32 0, %v2126
    %v2128 = vrot.slane %v35, %v2127
    %v2130 = vsel %vm38, %v2118, 0
    %v2133 = vsel %vm38, %v2119, 0
    %2135 = vmatprep.subr.mxu0 0.0
    %2136 = vmatpush1.msra.mxu0 0.0
    %2137 = vmatprep.subr.mxu0 0.0
    %2138 = vmatpush1.msra.mxu0 0.0
    %2139 = vmatprep.subr.mxu0 0.0
    %2140 = vmatpush1.msra.mxu0 0.0
    %2141 = vmatprep.subr.mxu0 0.0
    %2142 = vmatpush1.msra.mxu0 0.0
    %2143 = vmatprep.subr.mxu0 0.0
    %2144 = vmatpush1.msra.mxu0 0.0
    %2145 = vmatprep.subr.mxu0 0.0
    %2146 = vmatpush1.msra.mxu0 0.0
    %2147 = vmatprep.subr.mxu0 0.0
    %2148 = vmatpush1.msra.mxu0 0.0
    %2149 = vmatprep.subr.mxu0 0.0
    %2150 = vmatpush1.msra.mxu0 0.0
    %2151 = vmatprep.subr.mxu0 0.0
    %2152 = vmatpush1.msra.mxu0 0.0
    %2153 = vmatprep.subr.mxu0 0.0
    %2154 = vmatpush1.msra.mxu0 0.0
    %2155 = vmatprep.subr.mxu0 0.0
    %2156 = vmatpush1.msra.mxu0 0.0
    %2157 = vmatprep.subr.mxu0 0.0
    %2158 = vmatpush1.msra.mxu0 0.0
    %2159 = vmatprep.subr.mxu0 0.0
    %2160 = vmatpush1.msra.mxu0 %v2124
    %2161 = vmatprep.subr.mxu0 0.0
    %2162 = vmatpush1.msra.mxu0 %v2123
    %2163 = vmatprep.subr.mxu0 0.0
    %2164 = vmatpush1.msra.mxu0 %v2122
    %2165 = vmatprep.subr.mxu0 0.0
    %2166 = vmatpush1.msra.mxu0 %v2121
    %2167 = vmatprep.subr.mxu0 0.0
    %2168 = vmatpush2.msra.mxu0 0.0
    %2169 = vmatprep.subr.mxu0 0.0
    %2170 = vmatpush2.msra.mxu0 0.0
    %2171 = vmatprep.subr.mxu0 0.0
    %2172 = vmatpush2.msra.mxu0 0.0
    %2173 = vmatprep.subr.mxu0 0.0
    %2174 = vmatpush2.msra.mxu0 0.0
    %2175 = vmatprep.subr.mxu0 0.0
    %2176 = vmatpush2.msra.mxu0 0.0
    %2177 = vmatprep.subr.mxu0 0.0
    %2178 = vmatpush2.msra.mxu0 0.0
    %2179 = vmatprep.subr.mxu0 0.0
    %2180 = vmatpush2.msra.mxu0 0.0
    %2181 = vmatprep.subr.mxu0 0.0
    %2182 = vmatpush2.msra.mxu0 0.0
    %2183 = vmatprep.subr.mxu0 0.0
    %2184 = vmatpush2.msra.mxu0 0.0
    %2185 = vmatprep.subr.mxu0 0.0
    %2186 = vmatpush2.msra.mxu0 0.0
    %2187 = vmatprep.subr.mxu0 0.0
    %2188 = vmatpush2.msra.mxu0 0.0
    %2189 = vmatprep.subr.mxu0 0.0
    %2190 = vmatpush2.msra.mxu0 0.0
    %2191 = vmatprep.subr.mxu0 0.0
    %2192 = vmatpush2.msra.mxu0 0.0
    %2193 = vmatprep.subr.mxu0 0.0
    %2194 = vmatpush2.msra.mxu0 0.0
    %2195 = vmatprep.subr.mxu0 0.0
    %2196 = vmatpush2.msra.mxu0 0.0
    %2197 = vmatprep.subr.mxu0 0.0
    %2198 = vmatpush2.msra.mxu0 0.0
    %2199 = vmatprep.mubr.f32.mxu0 0.0
    %2200 = vmatmul.mubr.f32.gmra.mxu0 %v2130
    %v2201 = vpop.f32.mrf.mxu0
    %v2202 = vadd.f32 %v2128, %v2201
    %v2203 = vpop.f32.mrf.mxu0
    %2204 = vmatprep.mubr.f32.mxu0 0.0
    %2205 = vmatmul.mubr.f32.gmra.mxu0 %v2133
    %v2206 = vpop.f32.mrf.mxu0
    %v2207 = vadd.f32 %v2128, %v2206
    %v2208 = vpop.f32.mrf.mxu0
    %2209 = vdwg.mxu0
    %v2210 = vmul.f32 %v2202, 0.5
    %v2211 = vmul.f32 %v2207, 0.5
    %v2212 = vmul.f32 %v2202, 0.044715
    %v2213 = vmul.f32 %v2207, 0.044715
    %v2214 = vmul.f32 %v2212, %v2202
    %v2215 = vmul.f32 %v2213, %v2207
    %v2216 = vmul.f32 %v2214, %v2202
    %v2217 = vmul.f32 %v2215, %v2207
    %v2218 = vadd.f32 %v2202, %v2216
    %v2219 = vadd.f32 %v2207, %v2217
    %v2220 = vmul.f32 %v2218, 0.7978846
    %v2221 = vmul.f32 %v2219, 0.7978846
    %v2222 = vtanh.pop %v2220
    %v2223 = vtanh.pop %v2221
    %v2224 = vadd.f32 %v2222, 1.0
    %v2225 = vadd.f32 %v2223, 1.0
    %v2226 = vmul.f32 %v2210, %v2224
    %v2227 = vmul.f32 %v2211, %v2225
    %s2228 = scalar_lea.vmem %s6, 64
    %v2229 = vld [vmem:[%s2228] sm:$0xff]
    %v2230 = vld [vmem:[%s2228 + $0x8] sm:$0xff]
    %v2231 = vld [vmem:[%s2228 + $0x10] sm:$0xff]
    %v2232 = vld [vmem:[%s2228 + $0x18] sm:$0xff]
    %v2233 = vld [vmem:[%s2228 + $0x20] sm:$0xff]
    %v2234 = vld [vmem:[%s2228 + $0x28] sm:$0xff]
    %v2235 = vld [vmem:[%s2228 + $0x30] sm:$0xff]
    %v2236 = vld [vmem:[%s2228 + $0x38] sm:$0xff]
    %v2237 = vlaneseq
    %v2238 = vshrl.u32 %v2237, 7
    %v2239 = vsub.s32 1, %v2238
    %v2240 = vrot.slane %v35, %v2239
    %v2242 = vsel %vm1102, %v2226, 0
    %v2245 = vsel %vm1102, %v2227, 0
    %2247 = vmatprep.subr.mxu0 0.0
    %2248 = vmatpush1.msra.mxu0 0.0
    %2249 = vmatprep.subr.mxu0 0.0
    %2250 = vmatpush1.msra.mxu0 0.0
    %2251 = vmatprep.subr.mxu0 0.0
    %2252 = vmatpush1.msra.mxu0 0.0
    %2253 = vmatprep.subr.mxu0 0.0
    %2254 = vmatpush1.msra.mxu0 0.0
    %2255 = vmatprep.subr.mxu0 0.0
    %2256 = vmatpush1.msra.mxu0 0.0
    %2257 = vmatprep.subr.mxu0 0.0
    %2258 = vmatpush1.msra.mxu0 0.0
    %2259 = vmatprep.subr.mxu0 0.0
    %2260 = vmatpush1.msra.mxu0 0.0
    %2261 = vmatprep.subr.mxu0 0.0
    %2262 = vmatpush1.msra.mxu0 0.0
    %2263 = vmatprep.subr.mxu0 0.0
    %2264 = vmatpush1.msra.mxu0 %v2236
    %2265 = vmatprep.subr.mxu0 0.0
    %2266 = vmatpush1.msra.mxu0 %v2235
    %2267 = vmatprep.subr.mxu0 0.0
    %2268 = vmatpush1.msra.mxu0 %v2234
    %2269 = vmatprep.subr.mxu0 0.0
    %2270 = vmatpush1.msra.mxu0 %v2233
    %2271 = vmatprep.subr.mxu0 0.0
    %2272 = vmatpush1.msra.mxu0 %v2232
    %2273 = vmatprep.subr.mxu0 0.0
    %2274 = vmatpush1.msra.mxu0 %v2231
    %2275 = vmatprep.subr.mxu0 0.0
    %2276 = vmatpush1.msra.mxu0 %v2230
    %2277 = vmatprep.subr.mxu0 0.0
    %2278 = vmatpush1.msra.mxu0 %v2229
    %2279 = vmatprep.subr.mxu0 0.0
    %2280 = vmatpush2.msra.mxu0 0.0
    %2281 = vmatprep.subr.mxu0 0.0
    %2282 = vmatpush2.msra.mxu0 0.0
    %2283 = vmatprep.subr.mxu0 0.0
    %2284 = vmatpush2.msra.mxu0 0.0
    %2285 = vmatprep.subr.mxu0 0.0
    %2286 = vmatpush2.msra.mxu0 0.0
    %2287 = vmatprep.subr.mxu0 0.0
    %2288 = vmatpush2.msra.mxu0 0.0
    %2289 = vmatprep.subr.mxu0 0.0
    %2290 = vmatpush2.msra.mxu0 0.0
    %2291 = vmatprep.subr.mxu0 0.0
    %2292 = vmatpush2.msra.mxu0 0.0
    %2293 = vmatprep.subr.mxu0 0.0
    %2294 = vmatpush2.msra.mxu0 0.0
    %2295 = vmatprep.subr.mxu0 0.0
    %2296 = vmatpush2.msra.mxu0 0.0
    %2297 = vmatprep.subr.mxu0 0.0
    %2298 = vmatpush2.msra.mxu0 0.0
    %2299 = vmatprep.subr.mxu0 0.0
    %2300 = vmatpush2.msra.mxu0 0.0
    %2301 = vmatprep.subr.mxu0 0.0
    %2302 = vmatpush2.msra.mxu0 0.0
    %2303 = vmatprep.subr.mxu0 0.0
    %2304 = vmatpush2.msra.mxu0 0.0
    %2305 = vmatprep.subr.mxu0 0.0
    %2306 = vmatpush2.msra.mxu0 0.0
    %2307 = vmatprep.subr.mxu0 0.0
    %2308 = vmatpush2.msra.mxu0 0.0
    %2309 = vmatprep.subr.mxu0 0.0
    %2310 = vmatpush2.msra.mxu0 0.0
    %2311 = vmatprep.mubr.f32.mxu0 0.0
    %2312 = vmatmul.mubr.f32.gmra.mxu0 %v2242
    %v2313 = vpop.f32.mrf.mxu0
    %v2314 = vadd.f32 %v2240, %v2313
    %v2315 = vpop.f32.mrf.mxu0
    %2316 = vmatprep.mubr.f32.mxu0 0.0
    %2317 = vmatmul.mubr.f32.gmra.mxu0 %v2245
    %v2318 = vpop.f32.mrf.mxu0
    %v2319 = vadd.f32 %v2240, %v2318
    %v2320 = vpop.f32.mrf.mxu0
    %2321 = vdwg.mxu0
    %v2322 = vadd.f32 %v2118, %v2314
    %v2323 = vadd.f32 %v2119, %v2319
    %v2324 = vsel %vm38, %v2322, 0.0
    %2325 = vadd.xlane.f32.xlu0 %v2324
    %v2326 = vpop.xlane.xlu0 %2325
    %v2327 = vsel %vm38, %v2323, 0.0
    %2328 = vadd.xlane.f32.xlu0 %v2327
    %v2329 = vpop.xlane.xlu0 %2328
    %v2330 = vmul.f32 %v2326, %v45
    %v2331 = vmul.f32 %v2329, %v45
    %v2332 = vsub.f32 %v2322, %v2330
    %v2333 = vsub.f32 %v2323, %v2331
    %v2334 = vmul.f32 %v2332, %v2332
    %v2335 = vmul.f32 %v2333, %v2333
    %v2336 = vsel %vm38, %v2334, 0.0
    %2337 = vadd.xlane.f32.xlu0 %v2336
    %v2338 = vpop.xlane.xlu0 %2337
    %v2339 = vsel %vm38, %v2335, 0.0
    %2340 = vadd.xlane.f32.xlu0 %v2339
    %v2341 = vpop.xlane.xlu0 %2340
    %v2342 = vmul.f32 %v2338, %v45
    %v2343 = vmul.f32 %v2341, %v45
    %v2344 = vadd.f32 %v2342, 1e-12
    %v2345 = vadd.f32 %v2343, 1e-12
    %v2346 = vrsqrt.pop %v2344
    %v2347 = vrsqrt.pop %v2345
    %v2348 = vmul.f32 %v2332, %v2346
    %v2349 = vmul.f32 %v2333, %v2347
    %v2350 = vlaneseq
    %v2351 = vshrl.u32 %v2350, 7
    %v2352 = vsub.s32 2, %v2351
    %v2353 = vrot.slane %v35, %v2352
    %v2354 = vmul.f32 %v2348, %v2353
    %v2355 = vmul.f32 %v2349, %v2353
    %v2356 = vlaneseq
    %v2357 = vshrl.u32 %v2356, 7
    %v2358 = vsub.s32 3, %v2357
    %v2359 = vrot.slane %v35, %v2358
    %v2360 = vadd.f32 %v2354, %v2359
    %v2361 = vadd.f32 %v2355, %v2359
    %v2363 = vrot.slane %v2361, 7
    %vm2365 = vcmask 1040384
    %v2366 = vsel %vm2365, %v2360, %v2363
    %v2367 = vld [vmem:[%s7] sm:$0xff]
    %v2368 = vld [vmem:[%s7 + $0x8] sm:$0xff]
    %v2369 = vld [vmem:[%s7 + $0x10] sm:$0xff]
    %v2370 = vld [vmem:[%s7 + $0x18] sm:$0xff]
    %v2371 = vlaneseq
    %v2372 = vshrl.u32 %v2371, 7
    %v2373 = vsub.s32 2, %v2372
    %v2374 = vrot.slane %v33, %v2373
    %v2376 = vsel %vm38, %v2366, 0
    %2378 = vmatprep.subr.mxu0 0.0
    %2379 = vmatpush1.msra.mxu0 0.0
    %2380 = vmatprep.subr.mxu0 0.0
    %2381 = vmatpush1.msra.mxu0 0.0
    %2382 = vmatprep.subr.mxu0 0.0
    %2383 = vmatpush1.msra.mxu0 0.0
    %2384 = vmatprep.subr.mxu0 0.0
    %2385 = vmatpush1.msra.mxu0 0.0
    %2386 = vmatprep.subr.mxu0 0.0
    %2387 = vmatpush1.msra.mxu0 0.0
    %2388 = vmatprep.subr.mxu0 0.0
    %2389 = vmatpush1.msra.mxu0 0.0
    %2390 = vmatprep.subr.mxu0 0.0
    %2391 = vmatpush1.msra.mxu0 0.0
    %2392 = vmatprep.subr.mxu0 0.0
    %2393 = vmatpush1.msra.mxu0 0.0
    %2394 = vmatprep.subr.mxu0 0.0
    %2395 = vmatpush1.msra.mxu0 0.0
    %2396 = vmatprep.subr.mxu0 0.0
    %2397 = vmatpush1.msra.mxu0 0.0
    %2398 = vmatprep.subr.mxu0 0.0
    %2399 = vmatpush1.msra.mxu0 0.0
    %2400 = vmatprep.subr.mxu0 0.0
    %2401 = vmatpush1.msra.mxu0 0.0
    %2402 = vmatprep.subr.mxu0 0.0
    %2403 = vmatpush1.msra.mxu0 %v2370
    %2404 = vmatprep.subr.mxu0 0.0
    %2405 = vmatpush1.msra.mxu0 %v2369
    %2406 = vmatprep.subr.mxu0 0.0
    %2407 = vmatpush1.msra.mxu0 %v2368
    %2408 = vmatprep.subr.mxu0 0.0
    %2409 = vmatpush1.msra.mxu0 %v2367
    %2410 = vmatprep.subr.mxu0 0.0
    %2411 = vmatpush2.msra.mxu0 0.0
    %2412 = vmatprep.subr.mxu0 0.0
    %2413 = vmatpush2.msra.mxu0 0.0
    %2414 = vmatprep.subr.mxu0 0.0
    %2415 = vmatpush2.msra.mxu0 0.0
    %2416 = vmatprep.subr.mxu0 0.0
    %2417 = vmatpush2.msra.mxu0 0.0
    %2418 = vmatprep.subr.mxu0 0.0
    %2419 = vmatpush2.msra.mxu0 0.0
    %2420 = vmatprep.subr.mxu0 0.0
    %2421 = vmatpush2.msra.mxu0 0.0
    %2422 = vmatprep.subr.mxu0 0.0
    %2423 = vmatpush2.msra.mxu0 0.0
    %2424 = vmatprep.subr.mxu0 0.0
    %2425 = vmatpush2.msra.mxu0 0.0
    %2426 = vmatprep.subr.mxu0 0.0
    %2427 = vmatpush2.msra.mxu0 0.0
    %2428 = vmatprep.subr.mxu0 0.0
    %2429 = vmatpush2.msra.mxu0 0.0
    %2430 = vmatprep.subr.mxu0 0.0
    %2431 = vmatpush2.msra.mxu0 0.0
    %2432 = vmatprep.subr.mxu0 0.0
    %2433 = vmatpush2.msra.mxu0 0.0
    %2434 = vmatprep.subr.mxu0 0.0
    %2435 = vmatpush2.msra.mxu0 0.0
    %2436 = vmatprep.subr.mxu0 0.0
    %2437 = vmatpush2.msra.mxu0 0.0
    %2438 = vmatprep.subr.mxu0 0.0
    %2439 = vmatpush2.msra.mxu0 0.0
    %2440 = vmatprep.subr.mxu0 0.0
    %2441 = vmatpush2.msra.mxu0 0.0
    %2442 = vmatprep.mubr.f32.mxu0 0.0
    %2443 = vmatmul.mubr.f32.gmra.mxu0 %v2376
    %v2444 = vpop.f32.mrf.mxu0
    %v2445 = vadd.f32 %v2374, %v2444
    %v2446 = vpop.f32.mrf.mxu0
    %2447 = vdwg.mxu0
    %v2448 = vtanh.pop %v2445
    %v2449 = vld [vmem:[%s8] sm:$0xff]
    %v2450 = vld [vmem:[%s8 + $0x8] sm:$0xff]
    %v2451 = vld [vmem:[%s8 + $0x10] sm:$0xff]
    %v2452 = vld [vmem:[%s8 + $0x18] sm:$0xff]
    %v2453 = vlaneseq
    %v2454 = vshrl.u32 %v2453, 7
    %v2455 = vsub.s32 3, %v2454
    %v2456 = vrot.slane %v33, %v2455
    %v2458 = vsel %vm38, %v2448, 0
    %2460 = vmatprep.subr.mxu0 0.0
    %2461 = vmatpush1.msra.mxu0 0.0
    %2462 = vmatprep.subr.mxu0 0.0
    %2463 = vmatpush1.msra.mxu0 0.0
    %2464 = vmatprep.subr.mxu0 0.0
    %2465 = vmatpush1.msra.mxu0 0.0
    %2466 = vmatprep.subr.mxu0 0.0
    %2467 = vmatpush1.msra.mxu0 0.0
    %2468 = vmatprep.subr.mxu0 0.0
    %2469 = vmatpush1.msra.mxu0 0.0
    %2470 = vmatprep.subr.mxu0 0.0
    %2471 = vmatpush1.msra.mxu0 0.0
    %2472 = vmatprep.subr.mxu0 0.0
    %2473 = vmatpush1.msra.mxu0 0.0
    %2474 = vmatprep.subr.mxu0 0.0
    %2475 = vmatpush1.msra.mxu0 0.0
    %2476 = vmatprep.subr.mxu0 0.0
    %2477 = vmatpush1.msra.mxu0 0.0
    %2478 = vmatprep.subr.mxu0 0.0
    %2479 = vmatpush1.msra.mxu0 0.0
    %2480 = vmatprep.subr.mxu0 0.0
    %2481 = vmatpush1.msra.mxu0 0.0
    %2482 = vmatprep.subr.mxu0 0.0
    %2483 = vmatpush1.msra.mxu0 0.0
    %2484 = vmatprep.subr.mxu0 0.0
    %2485 = vmatpush1.msra.mxu0 %v2452
    %2486 = vmatprep.subr.mxu0 0.0
    %2487 = vmatpush1.msra.mxu0 %v2451
    %2488 = vmatprep.subr.mxu0 0.0
    %2489 = vmatpush1.msra.mxu0 %v2450
    %2490 = vmatprep.subr.mxu0 0.0
    %2491 = vmatpush1.msra.mxu0 %v2449
    %2492 = vmatprep.subr.mxu0 0.0
    %2493 = vmatpush2.msra.mxu0 0.0
    %2494 = vmatprep.subr.mxu0 0.0
    %2495 = vmatpush2.msra.mxu0 0.0
    %2496 = vmatprep.subr.mxu0 0.0
    %2497 = vmatpush2.msra.mxu0 0.0
    %2498 = vmatprep.subr.mxu0 0.0
    %2499 = vmatpush2.msra.mxu0 0.0
    %2500 = vmatprep.subr.mxu0 0.0
    %2501 = vmatpush2.msra.mxu0 0.0
    %2502 = vmatprep.subr.mxu0 0.0
    %2503 = vmatpush2.msra.mxu0 0.0
    %2504 = vmatprep.subr.mxu0 0.0
    %2505 = vmatpush2.msra.mxu0 0.0
    %2506 = vmatprep.subr.mxu0 0.0
    %2507 = vmatpush2.msra.mxu0 0.0
    %2508 = vmatprep.subr.mxu0 0.0
    %2509 = vmatpush2.msra.mxu0 0.0
    %2510 = vmatprep.subr.mxu0 0.0
    %2511 = vmatpush2.msra.mxu0 0.0
    %2512 = vmatprep.subr.mxu0 0.0
    %2513 = vmatpush2.msra.mxu0 0.0
    %2514 = vmatprep.subr.mxu0 0.0
    %2515 = vmatpush2.msra.mxu0 0.0
    %2516 = vmatprep.subr.mxu0 0.0
    %2517 = vmatpush2.msra.mxu0 0.0
    %2518 = vmatprep.subr.mxu0 0.0
    %2519 = vmatpush2.msra.mxu0 0.0
    %2520 = vmatprep.subr.mxu0 0.0
    %2521 = vmatpush2.msra.mxu0 0.0
    %2522 = vmatprep.subr.mxu0 0.0
    %2523 = vmatpush2.msra.mxu0 0.0
    %2524 = vmatprep.mubr.f32.mxu0 0.0
    %2525 = vmatmul.mubr.f32.gmra.mxu0 %v2458
    %v2526 = vpop.f32.mrf.mxu0
    %v2527 = vadd.f32 %v2456, %v2526
    %v2528 = vpop.f32.mrf.mxu0
    %2529 = vdwg.mxu0
    %2530 = vst [vmem:[#allocation2] sm:$0x3] %v2527
    // Predicated region
    $region38: #{snippet_bert_forward.1} parent=1 // pred_check
      _
    $region39: #{snippet_bert_forward.1} parent=1 // pred_check_branch
      %2532 = sbr.rel (0) target = $region41
    $region40: #{snippet_bert_forward.1} parent=1 // pred_region
      %s2534 = ssub.s32 32, 32
      %2535 = vsyncadd [#allocation3], %s2534
      %s2537 = sshll.u32 [#allocation2], 4
      %s2538 = int_to_ptr.vmem [resolvable:$true] %s2537
      %2540 = dma.vmem_to_hbm [thread:$0]  %s2538, 32, %s9, [#allocation3]
    $region41: #{snippet_bert_forward.1} parent=1 // pred_fallthru
      _
    // Predicated region
    $region42: #{snippet_bert_forward.1} parent=1 // pred_check
      _
    $region43: #{snippet_bert_forward.1} parent=1 // pred_check_branch
      %2542 = sbr.rel (0) target = $region45
    $region44: #{snippet_bert_forward.1} parent=1 // pred_region
      %2543 = dma.done [#allocation3], 32
    $region45: #{snippet_bert_forward.1} parent=1 // pred_fallthru
      _
    %2544 = vsyncpa [#allocation3], 1

</llo_original>
